<compile_context>
chip_gen: v7x
topology: tpu7x:2x2x1
jax: 0.10.0
libtpu: 0.0.40
codegen_flags: <defaults>
</compile_context>

<pallas_src>
import jax
import jax.numpy as jnp
import numpy as np
from jax.experimental import pallas as pl
from jax.experimental.pallas import tpu as pltpu

N_EMBD = 384
HIDDEN = 4 * N_EMBD          # 1536
TILE_ROWS = 256              # flattened (B*T) rows processed per grid step


def _round_up(n, m):
    return ((n + m - 1) // m) * m


def ffn_kernel(x_ref, w1_ref, b1_ref, w2_ref, b2_ref, o_ref):
    """y = ReLU(x @ W1 + b1) @ W2 + b2 for one (TILE, C) row block.

    bf16 MXU inputs, f32 accumulation; dropout(0.2) is identity at inference.
    """
    x = x_ref[...]                                                    # (TM, C)   bf16
    h = jnp.dot(x, w1_ref[...], preferred_element_type=jnp.float32)   # (TM, 4C)  f32
    h = jnp.maximum(h + b1_ref[...], 0.0)                             # bias + ReLU in f32
    h = h.astype(jnp.bfloat16)                                        # back to MXU dtype
    y = jnp.dot(h, w2_ref[...], preferred_element_type=jnp.float32)   # (TM, C)   f32
    o_ref[...] = (y + b2_ref[...]).astype(o_ref.dtype)


def feed_forward(x, params):
    """Apply the FeedForward block to x of shape (..., N_EMBD)."""
    orig_shape = x.shape
    assert orig_shape[-1] == N_EMBD
    rows = int(np.prod(orig_shape[:-1])) if len(orig_shape) > 1 else 1
    x2 = x.reshape(rows, N_EMBD)

    # Pick the row tile: 256 for large inputs, otherwise the (8-aligned) full extent.
    tile = TILE_ROWS if rows >= TILE_ROWS else _round_up(rows, 8)
    rows_p = _round_up(rows, tile)
    if rows_p != rows:
        x2 = jnp.pad(x2, ((0, rows_p - rows), (0, 0)))

    x_bf = x2.astype(jnp.bfloat16)
    w1 = params["w1"].astype(jnp.bfloat16)                 # (C, 4C)
    w2 = params["w2"].astype(jnp.bfloat16)                 # (4C, C)
    b1 = params["b1"].reshape(1, HIDDEN).astype(jnp.float32)
    b2 = params["b2"].reshape(1, N_EMBD).astype(jnp.float32)

    grid = (rows_p // tile,)

    out = pl.pallas_call(
        ffn_kernel,
        out_shape=jax.ShapeDtypeStruct((rows_p, N_EMBD), jnp.float32),
        grid_spec=pltpu.PrefetchScalarGridSpec(
            num_scalar_prefetch=0,
            grid=grid,
            in_specs=[
                pl.BlockSpec((tile, N_EMBD), lambda i: (i, 0)),      # x rows
                pl.BlockSpec((N_EMBD, HIDDEN), lambda i: (0, 0)),    # W1 (constant)
                pl.BlockSpec((1, HIDDEN), lambda i: (0, 0)),         # b1 (constant)
                pl.BlockSpec((HIDDEN, N_EMBD), lambda i: (0, 0)),    # W2 (constant)
                pl.BlockSpec((1, N_EMBD), lambda i: (0, 0)),         # b2 (constant)
            ],
            out_specs=pl.BlockSpec((tile, N_EMBD), lambda i: (i, 0)),
        ),
        compiler_params=pltpu.CompilerParams(
            dimension_semantics=("parallel",),
        ),
    )(x_bf, w1, b1, w2, b2)

    out = out[:rows].reshape(*orig_shape[:-1], N_EMBD)
    return out.astype(x.dtype)


def init_params(key):
    k1, k2, k3, k4 = jax.random.split(key, 4)
    s = 0.02
    f32 = jnp.float32
    return {
        # Store weights in bf16 (the dtype the kernel consumes); biases stay f32.
        "w1": (s * jax.random.normal(k1, (N_EMBD, HIDDEN), f32)).astype(jnp.bfloat16),
        "b1": 0.01 * jax.random.normal(k2, (1, HIDDEN), f32),
        "w2": (s * jax.random.normal(k3, (HIDDEN, N_EMBD), f32)).astype(jnp.bfloat16),
        "b2": 0.01 * jax.random.normal(k4, (1, N_EMBD), f32),
    }


def reference_ffn(x, params):
    """Pure-JAX f32 reference matching the torch module (dropout = identity)."""
    w1 = params["w1"].astype(jnp.float32)
    w2 = params["w2"].astype(jnp.float32)
    h = jnp.maximum(x @ w1 + params["b1"][0], 0.0)
    return h @ w2 + params["b2"][0]


if __name__ == "__main__":
    key = jax.random.PRNGKey(0)
    k_x, k_p = jax.random.split(key)

    B, T = 2, 16
    x = jax.random.normal(k_x, (B, T, N_EMBD), jnp.float32)
    params = init_params(k_p)

    out = jax.block_until_ready(feed_forward(x, params))
    ref = jax.block_until_ready(reference_ffn(x, params))

    # bf16 MXU inputs (f32 accumulation) -> compare against the f32 reference with a
    # tolerance that covers bf16 input rounding (~0.4% relative).
    np.testing.assert_allclose(np.asarray(out), np.asarray(ref), rtol=2e-2, atol=2e-2)

    print("KERNEL_OK")
</pallas_src>

<mosaic_0001>
module attributes {stable_mosaic.version = 11 : i64} {
  func.func @ffn_kernel(%arg0: i32, %arg1: memref<32x384xbf16, #tpu.memory_space<vmem>>, %arg2: memref<384x1536xbf16, #tpu.memory_space<vmem>>, %arg3: memref<1x1536xf32, #tpu.memory_space<vmem>>, %arg4: memref<1536x384xbf16, #tpu.memory_space<vmem>>, %arg5: memref<1x384xf32, #tpu.memory_space<vmem>>, %arg6: memref<32x384xf32, #tpu.memory_space<vmem>>) attributes {dimension_semantics = [#tpu.dimension_semantics<parallel>], iteration_bounds = array<i64: 1>, scalar_prefetch = 0 : i64, scratch_operands = 0 : i64, tpu.core_type = #tpu.core_type<tc>, window_params = [{transform_indices = @transform_0, window_bounds = array<i64: 32, 384>}, {pipeline_mode = #tpu.pipeline_mode<synchronous>, transform_indices = @transform_1, window_bounds = array<i64: 384, 1536>}, {pipeline_mode = #tpu.pipeline_mode<synchronous>, transform_indices = @transform_2, window_bounds = array<i64: 1, 1536>}, {pipeline_mode = #tpu.pipeline_mode<synchronous>, transform_indices = @transform_3, window_bounds = array<i64: 1536, 384>}, {pipeline_mode = #tpu.pipeline_mode<synchronous>, transform_indices = @transform_4, window_bounds = array<i64: 1, 384>}, {transform_indices = @transform_5, window_bounds = array<i64: 32, 384>}]} {
    %c0 = arith.constant 0 : index
    %c0_0 = arith.constant 0 : index
    %0 = vector.load %arg1[%c0, %c0_0] : memref<32x384xbf16, #tpu.memory_space<vmem>>, vector<32x384xbf16>
    %c0_1 = arith.constant 0 : index
    %c0_2 = arith.constant 0 : index
    %1 = vector.load %arg2[%c0_1, %c0_2] : memref<384x1536xbf16, #tpu.memory_space<vmem>>, vector<384x1536xbf16>
    %cst = arith.constant dense<0.000000e+00> : vector<32x1536xf32>
    %2 = tpu.matmul %0, %1, %cst {dimension_numbers = #tpu.dot_dimension_numbers<[1], [0], [0], [1], [0, 0, 1, 1], [], []>} : vector<32x384xbf16>, vector<384x1536xbf16>, vector<32x1536xf32> -> vector<32x1536xf32>
    %c0_3 = arith.constant 0 : index
    %c0_4 = arith.constant 0 : index
    %3 = vector.load %arg3[%c0_3, %c0_4] : memref<1x1536xf32, #tpu.memory_space<vmem>>, vector<1x1536xf32>
    %4 = vector.broadcast %3 : vector<1x1536xf32> to vector<32x1536xf32>
    %5 = arith.addf %2, %4 : vector<32x1536xf32>
    %cst_5 = arith.constant 0.000000e+00 : f32
    %6 = vector.broadcast %cst_5 : f32 to vector<32x1536xf32>
    %7 = arith.maximumf %5, %6 : vector<32x1536xf32>
    %8 = arith.truncf %7 : vector<32x1536xf32> to vector<32x1536xbf16>
    %c0_6 = arith.constant 0 : index
    %c0_7 = arith.constant 0 : index
    %9 = vector.load %arg4[%c0_6, %c0_7] : memref<1536x384xbf16, #tpu.memory_space<vmem>>, vector<1536x384xbf16>
    %cst_8 = arith.constant dense<0.000000e+00> : vector<32x384xf32>
    %10 = tpu.matmul %8, %9, %cst_8 {dimension_numbers = #tpu.dot_dimension_numbers<[1], [0], [0], [1], [0, 0, 1, 1], [], []>} : vector<32x1536xbf16>, vector<1536x384xbf16>, vector<32x384xf32> -> vector<32x384xf32>
    %c0_9 = arith.constant 0 : index
    %c0_10 = arith.constant 0 : index
    %11 = vector.load %arg5[%c0_9, %c0_10] : memref<1x384xf32, #tpu.memory_space<vmem>>, vector<1x384xf32>
    %12 = vector.broadcast %11 : vector<1x384xf32> to vector<32x384xf32>
    %13 = arith.addf %10, %12 : vector<32x384xf32>
    %c0_11 = arith.constant 0 : index
    %c0_12 = arith.constant 0 : index
    %14 = vector.load %arg6[%c0_11, %c0_12] : memref<32x384xf32, #tpu.memory_space<vmem>>, vector<32x384xf32>
    tpu.vector_store %arg6[%c0_11, %c0_12], %13 {strides = array<i32>} : memref<32x384xf32, #tpu.memory_space<vmem>>, vector<32x384xf32>,
    return
  }
  func.func @transform_0(%arg0: i32) -> (i32, i32) {
    %c0_i32 = arith.constant 0 : i32
    %c0_i32_0 = arith.constant 0 : i32
    return %arg0, %c0_i32 : i32, i32
  }
  func.func @transform_1(%arg0: i32) -> (i32, i32) {
    %c0_i32 = arith.constant 0 : i32
    %c0_i32_0 = arith.constant 0 : i32
    %c0_i32_1 = arith.constant 0 : i32
    return %c0_i32, %c0_i32_0 : i32, i32
  }
  func.func @transform_2(%arg0: i32) -> (i32, i32) {
    %c0_i32 = arith.constant 0 : i32
    %c0_i32_0 = arith.constant 0 : i32
    %c0_i32_1 = arith.constant 0 : i32
    return %c0_i32, %c0_i32_0 : i32, i32
  }
  func.func @transform_3(%arg0: i32) -> (i32, i32) {
    %c0_i32 = arith.constant 0 : i32
    %c0_i32_0 = arith.constant 0 : i32
    %c0_i32_1 = arith.constant 0 : i32
    return %c0_i32, %c0_i32_0 : i32, i32
  }
  func.func @transform_4(%arg0: i32) -> (i32, i32) {
    %c0_i32 = arith.constant 0 : i32
    %c0_i32_0 = arith.constant 0 : i32
    %c0_i32_1 = arith.constant 0 : i32
    return %c0_i32, %c0_i32_0 : i32, i32
  }
  func.func @transform_5(%arg0: i32) -> (i32, i32) {
    %c0_i32 = arith.constant 0 : i32
    %c0_i32_0 = arith.constant 0 : i32
    return %arg0, %c0_i32 : i32, i32
  }
}

</mosaic_0001>

<llo_original>
// kernel: tpu_custom_call.1
$region0: #{tpu_custom_call.1}
  #allocation0 [shape = 'u32[]', space=smem, size = 0x4, offset = 0x4, fixed_abs, tag = 'smem constant byte address 0x4 - core index']
  #allocation1 [shape = 'u32[144,128]{1,0:T(1,128)}', space=vmem, size = 0x12000, scoped, tag = 'internal scratch']
  %s0 = inlined_call_operand.hbm [shape: bf16[32,384], index: 0, kind: input, shape index: {}]
  %s1 = inlined_call_operand.hbm [shape: bf16[384,1536], index: 1, kind: input, shape index: {}]
  %s2 = inlined_call_operand.hbm [shape: f32[1,1536], index: 2, kind: input, shape index: {}]
  %s3 = inlined_call_operand.hbm [shape: bf16[1536,384], index: 3, kind: input, shape index: {}]
  %s4 = inlined_call_operand.hbm [shape: f32[1,384], index: 4, kind: input, shape index: {}]
  %s5 = inlined_call_operand.hbm [shape: f32[32,384], index: 5, kind: output, shape index: {}]
  %s6 = sld [smem:[#allocation0]]
  $region50: #{tpu_custom_call.1} parent=0
    _
  %s8 = ssub.s32 1, %s6
  %s9 = scalar_select 0, %s8, %s6
  $region1: #{tpu_custom_call.1} parent=0
    #allocation2 [shape = 'u8[24576]{0}', space=vmem, size = 0x6000, scoped, tag = 'input window, operand 0, single buffered']
    #allocation3 [shape = 's32[1]{0}', space=sflag, size = 0x4, scoped, tag = 'scoped memory for tpu_custom_call.1']
    #allocation4 [shape = 's32[1]{0}', space=sflag, size = 0x4, scoped, tag = 'scoped memory for tpu_custom_call.1']
    #allocation5 [shape = 'u8[1179648]{0}', space=vmem, size = 0x120000, scoped, tag = 'input window, operand 1, single buffered']
    #allocation6 [shape = 's32[1]{0}', space=sflag, size = 0x4, scoped, tag = 'scoped memory for tpu_custom_call.1']
    #allocation7 [shape = 'u8[6144]{0}', space=vmem, size = 0x1800, scoped, tag = 'input window, operand 2, single buffered']
    #allocation8 [shape = 'u8[1179648]{0}', space=vmem, size = 0x120000, scoped, tag = 'input window, operand 3, single buffered']
    #allocation9 [shape = 's32[1]{0}', space=sflag, size = 0x4, scoped, tag = 'scoped memory for tpu_custom_call.1']
    #allocation10 [shape = 'u8[1536]{0}', space=vmem, size = 0x800, scoped, tag = 'input window, operand 4, single buffered']
    #allocation11 [shape = 'u8[49152]{0}', space=vmem, size = 0xc000, scoped, tag = 'output window, operand 0, single buffered']
    %10 = vsyncpa [#allocation3], 0
    %11 = vsyncpa [#allocation6], 0
    %12 = vsyncpa [#allocation9], 0
    %13 = vsyncpa [#allocation4], 0
    // Predicated region
    $region2: #{tpu_custom_call.1} parent=1 // pred_check
      _
    $region3: #{tpu_custom_call.1} parent=1 // pred_check_branch
      %15 = sbr.rel (0) target = $region5
    $region4: #{tpu_custom_call.1} parent=1 // pred_region
      %s17 = ssub.s32 768, 768
      %18 = vsyncadd [#allocation3], %s17
      %s19 = sshll.u32 [#allocation2], 4
      %s20 = int_to_ptr.vmem [resolvable:$true] %s19
      %25 = dma.hbm_to_vmem [thread:$0]  %s0, 768, %s20, [#allocation3], 192, 192, 12
    $region5: #{tpu_custom_call.1} parent=1 // pred_fallthru
      _
    // Predicated region
    $region6: #{tpu_custom_call.1} parent=1 // pred_check
      _
    $region7: #{tpu_custom_call.1} parent=1 // pred_check_branch
      %27 = sbr.rel (0) target = $region9
    $region8: #{tpu_custom_call.1} parent=1 // pred_region
      %s29 = ssub.s32 36864, 36864
      %30 = vsyncadd [#allocation6], %s29
      %s31 = sshll.u32 [#allocation5], 4
      %s32 = int_to_ptr.vmem [resolvable:$true] %s31
      %37 = dma.hbm_to_vmem [thread:$0]  %s1, 36864, %s32, [#allocation6], 768, 768, 48
    $region9: #{tpu_custom_call.1} parent=1 // pred_fallthru
      _
    // Predicated region
    $region10: #{tpu_custom_call.1} parent=1 // pred_check
      _
    $region11: #{tpu_custom_call.1} parent=1 // pred_check_branch
      %39 = sbr.rel (0) target = $region13
    $region12: #{tpu_custom_call.1} parent=1 // pred_region
      %s41 = ssub.s32 192, 192
      %42 = vsyncadd [#allocation6], %s41
      %s44 = sshll.u32 [#allocation7], 4
      %s45 = int_to_ptr.vmem [resolvable:$true] %s44
      %47 = dma.hbm_to_vmem [thread:$0]  %s2, 192, %s45, [#allocation6]
    $region13: #{tpu_custom_call.1} parent=1 // pred_fallthru
      _
    // Predicated region
    $region14: #{tpu_custom_call.1} parent=1 // pred_check
      _
    $region15: #{tpu_custom_call.1} parent=1 // pred_check_branch
      %49 = sbr.rel (0) target = $region17
    $region16: #{tpu_custom_call.1} parent=1 // pred_region
      %s51 = ssub.s32 36864, 36864
      %52 = vsyncadd [#allocation9], %s51
      %s53 = sshll.u32 [#allocation8], 4
      %s54 = int_to_ptr.vmem [resolvable:$true] %s53
      %59 = dma.hbm_to_vmem [thread:$0]  %s3, 36864, %s54, [#allocation9], 192, 192, 12
    $region17: #{tpu_custom_call.1} parent=1 // pred_fallthru
      _
    // Predicated region
    $region18: #{tpu_custom_call.1} parent=1 // pred_check
      _
    $region19: #{tpu_custom_call.1} parent=1 // pred_check_branch
      %61 = sbr.rel (0) target = $region21
    $region20: #{tpu_custom_call.1} parent=1 // pred_region
      %s63 = ssub.s32 48, 48
      %64 = vsyncadd [#allocation9], %s63
      %s66 = sshll.u32 [#allocation10], 4
      %s67 = int_to_ptr.vmem [resolvable:$true] %s66
      %69 = dma.hbm_to_vmem [thread:$0]  %s4, 48, %s67, [#allocation9]
    $region21: #{tpu_custom_call.1} parent=1 // pred_fallthru
      _
    // Predicated region
    $region22: #{tpu_custom_call.1} parent=1 // pred_check
      _
    $region23: #{tpu_custom_call.1} parent=1 // pred_check_branch
      %71 = sbr.rel (0) target = $region25
    $region24: #{tpu_custom_call.1} parent=1 // pred_region
      %72 = dma.done [#allocation3], 768
    $region25: #{tpu_custom_call.1} parent=1 // pred_fallthru
      _
    // Predicated region
    $region26: #{tpu_custom_call.1} parent=1 // pred_check
      _
    $region27: #{tpu_custom_call.1} parent=1 // pred_check_branch
      %74 = sbr.rel (0) target = $region29
    $region28: #{tpu_custom_call.1} parent=1 // pred_region
      %75 = dma.done [#allocation6], 36864
    $region29: #{tpu_custom_call.1} parent=1 // pred_fallthru
      _
    // Predicated region
    $region30: #{tpu_custom_call.1} parent=1 // pred_check
      _
    $region31: #{tpu_custom_call.1} parent=1 // pred_check_branch
      %77 = sbr.rel (0) target = $region33
    $region32: #{tpu_custom_call.1} parent=1 // pred_region
      %78 = dma.done [#allocation6], 192
    $region33: #{tpu_custom_call.1} parent=1 // pred_fallthru
      _
    // Predicated region
    $region34: #{tpu_custom_call.1} parent=1 // pred_check
      _
    $region35: #{tpu_custom_call.1} parent=1 // pred_check_branch
      %80 = sbr.rel (0) target = $region37
    $region36: #{tpu_custom_call.1} parent=1 // pred_region
      %81 = dma.done [#allocation9], 36864
    $region37: #{tpu_custom_call.1} parent=1 // pred_fallthru
      _
    // Predicated region
    $region38: #{tpu_custom_call.1} parent=1 // pred_check
      _
    $region39: #{tpu_custom_call.1} parent=1 // pred_check_branch
      %83 = sbr.rel (0) target = $region41
    $region40: #{tpu_custom_call.1} parent=1 // pred_region
      %84 = dma.done [#allocation9], 48
    $region41: #{tpu_custom_call.1} parent=1 // pred_fallthru
      _
    %v86 = vld [vmem:[#allocation2] sm:$0xff]
    %v87 = vld [vmem:[#allocation2 + $0x8] sm:$0xf]
    %v88 = vld [vmem:[#allocation2 + $0xc] sm:$0xff]
    %v89 = vld [vmem:[#allocation2 + $0x14] sm:$0xf]
    %v90 = vld [vmem:[#allocation2 + $0x18] sm:$0xff]
    %v91 = vld [vmem:[#allocation2 + $0x20] sm:$0xf]
    %v92 = vld [vmem:[#allocation2 + $0x24] sm:$0xff]
    %v93 = vld [vmem:[#allocation2 + $0x2c] sm:$0xf]
    %v94 = vld [vmem:[#allocation5] sm:$0xff]
    %v95 = vld [vmem:[#allocation5 + $0x8] sm:$0xff]
    %v96 = vld [vmem:[#allocation5 + $0x10] sm:$0xff]
    %v97 = vld [vmem:[#allocation5 + $0x18] sm:$0xff]
    %v98 = vld [vmem:[#allocation5 + $0x20] sm:$0xff]
    %v99 = vld [vmem:[#allocation5 + $0x28] sm:$0xff]
    %v100 = vld [vmem:[#allocation5 + $0x30] sm:$0xff]
    %v101 = vld [vmem:[#allocation5 + $0x38] sm:$0xff]
    %v102 = vld [vmem:[#allocation5 + $0x40] sm:$0xff]
    %v103 = vld [vmem:[#allocation5 + $0x48] sm:$0xff]
    %v104 = vld [vmem:[#allocation5 + $0x50] sm:$0xff]
    %v105 = vld [vmem:[#allocation5 + $0x58] sm:$0xff]
    %v106 = vld [vmem:[#allocation5 + $0x60] sm:$0xff]
    %v107 = vld [vmem:[#allocation5 + $0x68] sm:$0xff]
    %v108 = vld [vmem:[#allocation5 + $0x70] sm:$0xff]
    %v109 = vld [vmem:[#allocation5 + $0x78] sm:$0xff]
    %v110 = vld [vmem:[#allocation5 + $0x80] sm:$0xff]
    %v111 = vld [vmem:[#allocation5 + $0x88] sm:$0xff]
    %v112 = vld [vmem:[#allocation5 + $0x90] sm:$0xff]
    %v113 = vld [vmem:[#allocation5 + $0x98] sm:$0xff]
    %v114 = vld [vmem:[#allocation5 + $0xa0] sm:$0xff]
    %v115 = vld [vmem:[#allocation5 + $0xa8] sm:$0xff]
    %v116 = vld [vmem:[#allocation5 + $0xb0] sm:$0xff]
    %v117 = vld [vmem:[#allocation5 + $0xb8] sm:$0xff]
    %v118 = vld [vmem:[#allocation5 + $0xc0] sm:$0xff]
    %v119 = vld [vmem:[#allocation5 + $0xc8] sm:$0xff]
    %v120 = vld [vmem:[#allocation5 + $0xd0] sm:$0xff]
    %v121 = vld [vmem:[#allocation5 + $0xd8] sm:$0xff]
    %v122 = vld [vmem:[#allocation5 + $0xe0] sm:$0xff]
    %v123 = vld [vmem:[#allocation5 + $0xe8] sm:$0xff]
    %v124 = vld [vmem:[#allocation5 + $0xf0] sm:$0xff]
    %v125 = vld [vmem:[#allocation5 + $0xf8] sm:$0xff]
    %v126 = vld [vmem:[#allocation5 + $0x100] sm:$0xff]
    %v127 = vld [vmem:[#allocation5 + $0x108] sm:$0xff]
    %v128 = vld [vmem:[#allocation5 + $0x110] sm:$0xff]
    %v129 = vld [vmem:[#allocation5 + $0x118] sm:$0xff]
    %v130 = vld [vmem:[#allocation5 + $0x120] sm:$0xff]
    %v131 = vld [vmem:[#allocation5 + $0x128] sm:$0xff]
    %v132 = vld [vmem:[#allocation5 + $0x130] sm:$0xff]
    %v133 = vld [vmem:[#allocation5 + $0x138] sm:$0xff]
    %v134 = vld [vmem:[#allocation5 + $0x140] sm:$0xff]
    %v135 = vld [vmem:[#allocation5 + $0x148] sm:$0xff]
    %v136 = vld [vmem:[#allocation5 + $0x150] sm:$0xff]
    %v137 = vld [vmem:[#allocation5 + $0x158] sm:$0xff]
    %v138 = vld [vmem:[#allocation5 + $0x160] sm:$0xff]
    %v139 = vld [vmem:[#allocation5 + $0x168] sm:$0xff]
    %v140 = vld [vmem:[#allocation5 + $0x170] sm:$0xff]
    %v141 = vld [vmem:[#allocation5 + $0x178] sm:$0xff]
    %v142 = vld [vmem:[#allocation5 + $0x180] sm:$0xff]
    %v143 = vld [vmem:[#allocation5 + $0x188] sm:$0xff]
    %v144 = vld [vmem:[#allocation5 + $0x190] sm:$0xff]
    %v145 = vld [vmem:[#allocation5 + $0x198] sm:$0xff]
    %v146 = vld [vmem:[#allocation5 + $0x1a0] sm:$0xff]
    %v147 = vld [vmem:[#allocation5 + $0x1a8] sm:$0xff]
    %v148 = vld [vmem:[#allocation5 + $0x1b0] sm:$0xff]
    %v149 = vld [vmem:[#allocation5 + $0x1b8] sm:$0xff]
    %v150 = vld [vmem:[#allocation5 + $0x1c0] sm:$0xff]
    %v151 = vld [vmem:[#allocation5 + $0x1c8] sm:$0xff]
    %v152 = vld [vmem:[#allocation5 + $0x1d0] sm:$0xff]
    %v153 = vld [vmem:[#allocation5 + $0x1d8] sm:$0xff]
    %v154 = vld [vmem:[#allocation5 + $0x1e0] sm:$0xff]
    %v155 = vld [vmem:[#allocation5 + $0x1e8] sm:$0xff]
    %v156 = vld [vmem:[#allocation5 + $0x1f0] sm:$0xff]
    %v157 = vld [vmem:[#allocation5 + $0x1f8] sm:$0xff]
    %v158 = vld [vmem:[#allocation5 + $0x200] sm:$0xff]
    %v159 = vld [vmem:[#allocation5 + $0x208] sm:$0xff]
    %v160 = vld [vmem:[#allocation5 + $0x210] sm:$0xff]
    %v161 = vld [vmem:[#allocation5 + $0x218] sm:$0xff]
    %v162 = vld [vmem:[#allocation5 + $0x220] sm:$0xff]
    %v163 = vld [vmem:[#allocation5 + $0x228] sm:$0xff]
    %v164 = vld [vmem:[#allocation5 + $0x230] sm:$0xff]
    %v165 = vld [vmem:[#allocation5 + $0x238] sm:$0xff]
    %v166 = vld [vmem:[#allocation5 + $0x240] sm:$0xff]
    %v167 = vld [vmem:[#allocation5 + $0x248] sm:$0xff]
    %v168 = vld [vmem:[#allocation5 + $0x250] sm:$0xff]
    %v169 = vld [vmem:[#allocation5 + $0x258] sm:$0xff]
    %v170 = vld [vmem:[#allocation5 + $0x260] sm:$0xff]
    %v171 = vld [vmem:[#allocation5 + $0x268] sm:$0xff]
    %v172 = vld [vmem:[#allocation5 + $0x270] sm:$0xff]
    %v173 = vld [vmem:[#allocation5 + $0x278] sm:$0xff]
    %v174 = vld [vmem:[#allocation5 + $0x280] sm:$0xff]
    %v175 = vld [vmem:[#allocation5 + $0x288] sm:$0xff]
    %v176 = vld [vmem:[#allocation5 + $0x290] sm:$0xff]
    %v177 = vld [vmem:[#allocation5 + $0x298] sm:$0xff]
    %v178 = vld [vmem:[#allocation5 + $0x2a0] sm:$0xff]
    %v179 = vld [vmem:[#allocation5 + $0x2a8] sm:$0xff]
    %v180 = vld [vmem:[#allocation5 + $0x2b0] sm:$0xff]
    %v181 = vld [vmem:[#allocation5 + $0x2b8] sm:$0xff]
    %v182 = vld [vmem:[#allocation5 + $0x2c0] sm:$0xff]
    %v183 = vld [vmem:[#allocation5 + $0x2c8] sm:$0xff]
    %v184 = vld [vmem:[#allocation5 + $0x2d0] sm:$0xff]
    %v185 = vld [vmem:[#allocation5 + $0x2d8] sm:$0xff]
    %v186 = vld [vmem:[#allocation5 + $0x2e0] sm:$0xff]
    %v187 = vld [vmem:[#allocation5 + $0x2e8] sm:$0xff]
    %v188 = vld [vmem:[#allocation5 + $0x2f0] sm:$0xff]
    %v189 = vld [vmem:[#allocation5 + $0x2f8] sm:$0xff]
    %v190 = vld [vmem:[#allocation5 + $0x300] sm:$0xff]
    %v191 = vld [vmem:[#allocation5 + $0x308] sm:$0xff]
    %v192 = vld [vmem:[#allocation5 + $0x310] sm:$0xff]
    %v193 = vld [vmem:[#allocation5 + $0x318] sm:$0xff]
    %v194 = vld [vmem:[#allocation5 + $0x320] sm:$0xff]
    %v195 = vld [vmem:[#allocation5 + $0x328] sm:$0xff]
    %v196 = vld [vmem:[#allocation5 + $0x330] sm:$0xff]
    %v197 = vld [vmem:[#allocation5 + $0x338] sm:$0xff]
    %v198 = vld [vmem:[#allocation5 + $0x340] sm:$0xff]
    %v199 = vld [vmem:[#allocation5 + $0x348] sm:$0xff]
    %v200 = vld [vmem:[#allocation5 + $0x350] sm:$0xff]
    %v201 = vld [vmem:[#allocation5 + $0x358] sm:$0xff]
    %v202 = vld [vmem:[#allocation5 + $0x360] sm:$0xff]
    %v203 = vld [vmem:[#allocation5 + $0x368] sm:$0xff]
    %v204 = vld [vmem:[#allocation5 + $0x370] sm:$0xff]
    %v205 = vld [vmem:[#allocation5 + $0x378] sm:$0xff]
    %v206 = vld [vmem:[#allocation5 + $0x380] sm:$0xff]
    %v207 = vld [vmem:[#allocation5 + $0x388] sm:$0xff]
    %v208 = vld [vmem:[#allocation5 + $0x390] sm:$0xff]
    %v209 = vld [vmem:[#allocation5 + $0x398] sm:$0xff]
    %v210 = vld [vmem:[#allocation5 + $0x3a0] sm:$0xff]
    %v211 = vld [vmem:[#allocation5 + $0x3a8] sm:$0xff]
    %v212 = vld [vmem:[#allocation5 + $0x3b0] sm:$0xff]
    %v213 = vld [vmem:[#allocation5 + $0x3b8] sm:$0xff]
    %v214 = vld [vmem:[#allocation5 + $0x3c0] sm:$0xff]
    %v215 = vld [vmem:[#allocation5 + $0x3c8] sm:$0xff]
    %v216 = vld [vmem:[#allocation5 + $0x3d0] sm:$0xff]
    %v217 = vld [vmem:[#allocation5 + $0x3d8] sm:$0xff]
    %v218 = vld [vmem:[#allocation5 + $0x3e0] sm:$0xff]
    %v219 = vld [vmem:[#allocation5 + $0x3e8] sm:$0xff]
    %v220 = vld [vmem:[#allocation5 + $0x3f0] sm:$0xff]
    %v221 = vld [vmem:[#allocation5 + $0x3f8] sm:$0xff]
    %v222 = vld [vmem:[#allocation5 + $0x400] sm:$0xff]
    %v223 = vld [vmem:[#allocation5 + $0x408] sm:$0xff]
    %v224 = vld [vmem:[#allocation5 + $0x410] sm:$0xff]
    %v225 = vld [vmem:[#allocation5 + $0x418] sm:$0xff]
    %v226 = vld [vmem:[#allocation5 + $0x420] sm:$0xff]
    %v227 = vld [vmem:[#allocation5 + $0x428] sm:$0xff]
    %v228 = vld [vmem:[#allocation5 + $0x430] sm:$0xff]
    %v229 = vld [vmem:[#allocation5 + $0x438] sm:$0xff]
    %v230 = vld [vmem:[#allocation5 + $0x440] sm:$0xff]
    %v231 = vld [vmem:[#allocation5 + $0x448] sm:$0xff]
    %v232 = vld [vmem:[#allocation5 + $0x450] sm:$0xff]
    %v233 = vld [vmem:[#allocation5 + $0x458] sm:$0xff]
    %v234 = vld [vmem:[#allocation5 + $0x460] sm:$0xff]
    %v235 = vld [vmem:[#allocation5 + $0x468] sm:$0xff]
    %v236 = vld [vmem:[#allocation5 + $0x470] sm:$0xff]
    %v237 = vld [vmem:[#allocation5 + $0x478] sm:$0xff]
    %v238 = vld [vmem:[#allocation5 + $0x480] sm:$0xff]
    %v239 = vld [vmem:[#allocation5 + $0x488] sm:$0xff]
    %v240 = vld [vmem:[#allocation5 + $0x490] sm:$0xff]
    %v241 = vld [vmem:[#allocation5 + $0x498] sm:$0xff]
    %v242 = vld [vmem:[#allocation5 + $0x4a0] sm:$0xff]
    %v243 = vld [vmem:[#allocation5 + $0x4a8] sm:$0xff]
    %v244 = vld [vmem:[#allocation5 + $0x4b0] sm:$0xff]
    %v245 = vld [vmem:[#allocation5 + $0x4b8] sm:$0xff]
    %v246 = vld [vmem:[#allocation5 + $0x4c0] sm:$0xff]
    %v247 = vld [vmem:[#allocation5 + $0x4c8] sm:$0xff]
    %v248 = vld [vmem:[#allocation5 + $0x4d0] sm:$0xff]
    %v249 = vld [vmem:[#allocation5 + $0x4d8] sm:$0xff]
    %v250 = vld [vmem:[#allocation5 + $0x4e0] sm:$0xff]
    %v251 = vld [vmem:[#allocation5 + $0x4e8] sm:$0xff]
    %v252 = vld [vmem:[#allocation5 + $0x4f0] sm:$0xff]
    %v253 = vld [vmem:[#allocation5 + $0x4f8] sm:$0xff]
    %v254 = vld [vmem:[#allocation5 + $0x500] sm:$0xff]
    %v255 = vld [vmem:[#allocation5 + $0x508] sm:$0xff]
    %v256 = vld [vmem:[#allocation5 + $0x510] sm:$0xff]
    %v257 = vld [vmem:[#allocation5 + $0x518] sm:$0xff]
    %v258 = vld [vmem:[#allocation5 + $0x520] sm:$0xff]
    %v259 = vld [vmem:[#allocation5 + $0x528] sm:$0xff]
    %v260 = vld [vmem:[#allocation5 + $0x530] sm:$0xff]
    %v261 = vld [vmem:[#allocation5 + $0x538] sm:$0xff]
    %v262 = vld [vmem:[#allocation5 + $0x540] sm:$0xff]
    %v263 = vld [vmem:[#allocation5 + $0x548] sm:$0xff]
    %v264 = vld [vmem:[#allocation5 + $0x550] sm:$0xff]
    %v265 = vld [vmem:[#allocation5 + $0x558] sm:$0xff]
    %v266 = vld [vmem:[#allocation5 + $0x560] sm:$0xff]
    %v267 = vld [vmem:[#allocation5 + $0x568] sm:$0xff]
    %v268 = vld [vmem:[#allocation5 + $0x570] sm:$0xff]
    %v269 = vld [vmem:[#allocation5 + $0x578] sm:$0xff]
    %v270 = vld [vmem:[#allocation5 + $0x580] sm:$0xff]
    %v271 = vld [vmem:[#allocation5 + $0x588] sm:$0xff]
    %v272 = vld [vmem:[#allocation5 + $0x590] sm:$0xff]
    %v273 = vld [vmem:[#allocation5 + $0x598] sm:$0xff]
    %v274 = vld [vmem:[#allocation5 + $0x5a0] sm:$0xff]
    %v275 = vld [vmem:[#allocation5 + $0x5a8] sm:$0xff]
    %v276 = vld [vmem:[#allocation5 + $0x5b0] sm:$0xff]
    %v277 = vld [vmem:[#allocation5 + $0x5b8] sm:$0xff]
    %v278 = vld [vmem:[#allocation5 + $0x5c0] sm:$0xff]
    %v279 = vld [vmem:[#allocation5 + $0x5c8] sm:$0xff]
    %v280 = vld [vmem:[#allocation5 + $0x5d0] sm:$0xff]
    %v281 = vld [vmem:[#allocation5 + $0x5d8] sm:$0xff]
    %v282 = vld [vmem:[#allocation5 + $0x5e0] sm:$0xff]
    %v283 = vld [vmem:[#allocation5 + $0x5e8] sm:$0xff]
    %v284 = vld [vmem:[#allocation5 + $0x5f0] sm:$0xff]
    %v285 = vld [vmem:[#allocation5 + $0x5f8] sm:$0xff]
    %v286 = vld [vmem:[#allocation5 + $0x600] sm:$0xff]
    %v287 = vld [vmem:[#allocation5 + $0x608] sm:$0xff]
    %v288 = vld [vmem:[#allocation5 + $0x610] sm:$0xff]
    %v289 = vld [vmem:[#allocation5 + $0x618] sm:$0xff]
    %v290 = vld [vmem:[#allocation5 + $0x620] sm:$0xff]
    %v291 = vld [vmem:[#allocation5 + $0x628] sm:$0xff]
    %v292 = vld [vmem:[#allocation5 + $0x630] sm:$0xff]
    %v293 = vld [vmem:[#allocation5 + $0x638] sm:$0xff]
    %v294 = vld [vmem:[#allocation5 + $0x640] sm:$0xff]
    %v295 = vld [vmem:[#allocation5 + $0x648] sm:$0xff]
    %v296 = vld [vmem:[#allocation5 + $0x650] sm:$0xff]
    %v297 = vld [vmem:[#allocation5 + $0x658] sm:$0xff]
    %v298 = vld [vmem:[#allocation5 + $0x660] sm:$0xff]
    %v299 = vld [vmem:[#allocation5 + $0x668] sm:$0xff]
    %v300 = vld [vmem:[#allocation5 + $0x670] sm:$0xff]
    %v301 = vld [vmem:[#allocation5 + $0x678] sm:$0xff]
    %v302 = vld [vmem:[#allocation5 + $0x680] sm:$0xff]
    %v303 = vld [vmem:[#allocation5 + $0x688] sm:$0xff]
    %v304 = vld [vmem:[#allocation5 + $0x690] sm:$0xff]
    %v305 = vld [vmem:[#allocation5 + $0x698] sm:$0xff]
    %v306 = vld [vmem:[#allocation5 + $0x6a0] sm:$0xff]
    %v307 = vld [vmem:[#allocation5 + $0x6a8] sm:$0xff]
    %v308 = vld [vmem:[#allocation5 + $0x6b0] sm:$0xff]
    %v309 = vld [vmem:[#allocation5 + $0x6b8] sm:$0xff]
    %v310 = vld [vmem:[#allocation5 + $0x6c0] sm:$0xff]
    %v311 = vld [vmem:[#allocation5 + $0x6c8] sm:$0xff]
    %v312 = vld [vmem:[#allocation5 + $0x6d0] sm:$0xff]
    %v313 = vld [vmem:[#allocation5 + $0x6d8] sm:$0xff]
    %v314 = vld [vmem:[#allocation5 + $0x6e0] sm:$0xff]
    %v315 = vld [vmem:[#allocation5 + $0x6e8] sm:$0xff]
    %v316 = vld [vmem:[#allocation5 + $0x6f0] sm:$0xff]
    %v317 = vld [vmem:[#allocation5 + $0x6f8] sm:$0xff]
    %v318 = vld [vmem:[#allocation5 + $0x700] sm:$0xff]
    %v319 = vld [vmem:[#allocation5 + $0x708] sm:$0xff]
    %v320 = vld [vmem:[#allocation5 + $0x710] sm:$0xff]
    %v321 = vld [vmem:[#allocation5 + $0x718] sm:$0xff]
    %v322 = vld [vmem:[#allocation5 + $0x720] sm:$0xff]
    %v323 = vld [vmem:[#allocation5 + $0x728] sm:$0xff]
    %v324 = vld [vmem:[#allocation5 + $0x730] sm:$0xff]
    %v325 = vld [vmem:[#allocation5 + $0x738] sm:$0xff]
    %v326 = vld [vmem:[#allocation5 + $0x740] sm:$0xff]
    %v327 = vld [vmem:[#allocation5 + $0x748] sm:$0xff]
    %v328 = vld [vmem:[#allocation5 + $0x750] sm:$0xff]
    %v329 = vld [vmem:[#allocation5 + $0x758] sm:$0xff]
    %v330 = vld [vmem:[#allocation5 + $0x760] sm:$0xff]
    %v331 = vld [vmem:[#allocation5 + $0x768] sm:$0xff]
    %v332 = vld [vmem:[#allocation5 + $0x770] sm:$0xff]
    %v333 = vld [vmem:[#allocation5 + $0x778] sm:$0xff]
    %v334 = vld [vmem:[#allocation5 + $0x780] sm:$0xff]
    %v335 = vld [vmem:[#allocation5 + $0x788] sm:$0xff]
    %v336 = vld [vmem:[#allocation5 + $0x790] sm:$0xff]
    %v337 = vld [vmem:[#allocation5 + $0x798] sm:$0xff]
    %v338 = vld [vmem:[#allocation5 + $0x7a0] sm:$0xff]
    %v339 = vld [vmem:[#allocation5 + $0x7a8] sm:$0xff]
    %v340 = vld [vmem:[#allocation5 + $0x7b0] sm:$0xff]
    %v341 = vld [vmem:[#allocation5 + $0x7b8] sm:$0xff]
    %v342 = vld [vmem:[#allocation5 + $0x7c0] sm:$0xff]
    %v343 = vld [vmem:[#allocation5 + $0x7c8] sm:$0xff]
    %v344 = vld [vmem:[#allocation5 + $0x7d0] sm:$0xff]
    %v345 = vld [vmem:[#allocation5 + $0x7d8] sm:$0xff]
    %v346 = vld [vmem:[#allocation5 + $0x7e0] sm:$0xff]
    %v347 = vld [vmem:[#allocation5 + $0x7e8] sm:$0xff]
    %v348 = vld [vmem:[#allocation5 + $0x7f0] sm:$0xff]
    %v349 = vld [vmem:[#allocation5 + $0x7f8] sm:$0xff]
    %v350 = vld [vmem:[#allocation5 + $0x800] sm:$0xff]
    %v351 = vld [vmem:[#allocation5 + $0x808] sm:$0xff]
    %v352 = vld [vmem:[#allocation5 + $0x810] sm:$0xff]
    %v353 = vld [vmem:[#allocation5 + $0x818] sm:$0xff]
    %v354 = vld [vmem:[#allocation5 + $0x820] sm:$0xff]
    %v355 = vld [vmem:[#allocation5 + $0x828] sm:$0xff]
    %v356 = vld [vmem:[#allocation5 + $0x830] sm:$0xff]
    %v357 = vld [vmem:[#allocation5 + $0x838] sm:$0xff]
    %v358 = vld [vmem:[#allocation5 + $0x840] sm:$0xff]
    %v359 = vld [vmem:[#allocation5 + $0x848] sm:$0xff]
    %v360 = vld [vmem:[#allocation5 + $0x850] sm:$0xff]
    %v361 = vld [vmem:[#allocation5 + $0x858] sm:$0xff]
    %v362 = vld [vmem:[#allocation5 + $0x860] sm:$0xff]
    %v363 = vld [vmem:[#allocation5 + $0x868] sm:$0xff]
    %v364 = vld [vmem:[#allocation5 + $0x870] sm:$0xff]
    %v365 = vld [vmem:[#allocation5 + $0x878] sm:$0xff]
    %v366 = vld [vmem:[#allocation5 + $0x880] sm:$0xff]
    %v367 = vld [vmem:[#allocation5 + $0x888] sm:$0xff]
    %v368 = vld [vmem:[#allocation5 + $0x890] sm:$0xff]
    %v369 = vld [vmem:[#allocation5 + $0x898] sm:$0xff]
    %v370 = vld [vmem:[#allocation5 + $0x8a0] sm:$0xff]
    %v371 = vld [vmem:[#allocation5 + $0x8a8] sm:$0xff]
    %v372 = vld [vmem:[#allocation5 + $0x8b0] sm:$0xff]
    %v373 = vld [vmem:[#allocation5 + $0x8b8] sm:$0xff]
    %v374 = vld [vmem:[#allocation5 + $0x8c0] sm:$0xff]
    %v375 = vld [vmem:[#allocation5 + $0x8c8] sm:$0xff]
    %v376 = vld [vmem:[#allocation5 + $0x8d0] sm:$0xff]
    %v377 = vld [vmem:[#allocation5 + $0x8d8] sm:$0xff]
    %v378 = vld [vmem:[#allocation5 + $0x8e0] sm:$0xff]
    %v379 = vld [vmem:[#allocation5 + $0x8e8] sm:$0xff]
    %v380 = vld [vmem:[#allocation5 + $0x8f0] sm:$0xff]
    %v381 = vld [vmem:[#allocation5 + $0x8f8] sm:$0xff]
    %v382 = vld [vmem:[#allocation7] sm:$0xff]
    %v383 = vld [vmem:[#allocation7 + $0x8] sm:$0xf]
    %v386 = vlaneseq
    %v387 = vshrl.u32 %v386, 7
    %v388 = vsub.s32 0, %v387
    %v389 = vrot.slane %v382, %v388
    %v390 = vlaneseq
    %v391 = vshrl.u32 %v390, 7
    %v392 = vsub.s32 1, %v391
    %v393 = vrot.slane %v382, %v392
    %v394 = vlaneseq
    %v395 = vshrl.u32 %v394, 7
    %v396 = vsub.s32 2, %v395
    %v397 = vrot.slane %v382, %v396
    %v398 = vlaneseq
    %v399 = vshrl.u32 %v398, 7
    %v400 = vsub.s32 3, %v399
    %v401 = vrot.slane %v382, %v400
    %v402 = vlaneseq
    %v403 = vshrl.u32 %v402, 7
    %v404 = vsub.s32 4, %v403
    %v405 = vrot.slane %v382, %v404
    %v406 = vlaneseq
    %v407 = vshrl.u32 %v406, 7
    %v408 = vsub.s32 5, %v407
    %v409 = vrot.slane %v382, %v408
    %v410 = vlaneseq
    %v411 = vshrl.u32 %v410, 7
    %v412 = vsub.s32 6, %v411
    %v413 = vrot.slane %v382, %v412
    %v414 = vlaneseq
    %v415 = vshrl.u32 %v414, 7
    %v416 = vsub.s32 7, %v415
    %v417 = vrot.slane %v382, %v416
    %v418 = vlaneseq
    %v419 = vshrl.u32 %v418, 7
    %v420 = vsub.s32 0, %v419
    %v421 = vrot.slane %v383, %v420
    %v422 = vlaneseq
    %v423 = vshrl.u32 %v422, 7
    %v424 = vsub.s32 1, %v423
    %v425 = vrot.slane %v383, %v424
    %v426 = vlaneseq
    %v427 = vshrl.u32 %v426, 7
    %v428 = vsub.s32 2, %v427
    %v429 = vrot.slane %v383, %v428
    %v430 = vlaneseq
    %v431 = vshrl.u32 %v430, 7
    %v432 = vsub.s32 3, %v431
    %v433 = vrot.slane %v383, %v432
    %v454 = vunpack.c.l.b16 %v86
    %v455 = vunpack.c.h.b16 %v86
    %v456 = vunpack.c.l.b16 %v87
    %v457 = vunpack.c.l.b16 %v88
    %v458 = vunpack.c.h.b16 %v88
    %v459 = vunpack.c.l.b16 %v89
    %v460 = vunpack.c.l.b16 %v90
    %v461 = vunpack.c.h.b16 %v90
    %v462 = vunpack.c.l.b16 %v91
    %v463 = vunpack.c.l.b16 %v92
    %v464 = vunpack.c.h.b16 %v92
    %v465 = vunpack.c.l.b16 %v93
    %v466 = vpack.c.b16 %v457, %v454
    %v467 = vpack.c.b16 %v458, %v455
    %v468 = vpack.c.b16 %v459, %v456
    %v469 = vpack.c.b16 %v463, %v460
    %v470 = vpack.c.b16 %v464, %v461
    %v471 = vpack.c.b16 %v465, %v462
    %v766 = vunpack.c.l.b16 %v94
    %v767 = vunpack.c.h.b16 %v94
    %v768 = vunpack.c.l.b16 %v95
    %v769 = vunpack.c.h.b16 %v95
    %v770 = vunpack.c.l.b16 %v96
    %v771 = vunpack.c.h.b16 %v96
    %v772 = vunpack.c.l.b16 %v97
    %v773 = vunpack.c.h.b16 %v97
    %v774 = vunpack.c.l.b16 %v98
    %v775 = vunpack.c.h.b16 %v98
    %v776 = vunpack.c.l.b16 %v99
    %v777 = vunpack.c.h.b16 %v99
    %v778 = vunpack.c.l.b16 %v100
    %v779 = vunpack.c.h.b16 %v100
    %v780 = vunpack.c.l.b16 %v101
    %v781 = vunpack.c.h.b16 %v101
    %v782 = vunpack.c.l.b16 %v102
    %v783 = vunpack.c.h.b16 %v102
    %v784 = vunpack.c.l.b16 %v103
    %v785 = vunpack.c.h.b16 %v103
    %v786 = vunpack.c.l.b16 %v104
    %v787 = vunpack.c.h.b16 %v104
    %v788 = vunpack.c.l.b16 %v105
    %v789 = vunpack.c.h.b16 %v105
    %v790 = vunpack.c.l.b16 %v106
    %v791 = vunpack.c.h.b16 %v106
    %v792 = vunpack.c.l.b16 %v107
    %v793 = vunpack.c.h.b16 %v107
    %v794 = vunpack.c.l.b16 %v108
    %v795 = vunpack.c.h.b16 %v108
    %v796 = vunpack.c.l.b16 %v109
    %v797 = vunpack.c.h.b16 %v109
    %v798 = vunpack.c.l.b16 %v110
    %v799 = vunpack.c.h.b16 %v110
    %v800 = vunpack.c.l.b16 %v111
    %v801 = vunpack.c.h.b16 %v111
    %v802 = vunpack.c.l.b16 %v112
    %v803 = vunpack.c.h.b16 %v112
    %v804 = vunpack.c.l.b16 %v113
    %v805 = vunpack.c.h.b16 %v113
    %v806 = vunpack.c.l.b16 %v114
    %v807 = vunpack.c.h.b16 %v114
    %v808 = vunpack.c.l.b16 %v115
    %v809 = vunpack.c.h.b16 %v115
    %v810 = vunpack.c.l.b16 %v116
    %v811 = vunpack.c.h.b16 %v116
    %v812 = vunpack.c.l.b16 %v117
    %v813 = vunpack.c.h.b16 %v117
    %v814 = vunpack.c.l.b16 %v118
    %v815 = vunpack.c.h.b16 %v118
    %v816 = vunpack.c.l.b16 %v119
    %v817 = vunpack.c.h.b16 %v119
    %v818 = vunpack.c.l.b16 %v120
    %v819 = vunpack.c.h.b16 %v120
    %v820 = vunpack.c.l.b16 %v121
    %v821 = vunpack.c.h.b16 %v121
    %v822 = vunpack.c.l.b16 %v122
    %v823 = vunpack.c.h.b16 %v122
    %v824 = vunpack.c.l.b16 %v123
    %v825 = vunpack.c.h.b16 %v123
    %v826 = vunpack.c.l.b16 %v124
    %v827 = vunpack.c.h.b16 %v124
    %v828 = vunpack.c.l.b16 %v125
    %v829 = vunpack.c.h.b16 %v125
    %v830 = vunpack.c.l.b16 %v126
    %v831 = vunpack.c.h.b16 %v126
    %v832 = vunpack.c.l.b16 %v127
    %v833 = vunpack.c.h.b16 %v127
    %v834 = vunpack.c.l.b16 %v128
    %v835 = vunpack.c.h.b16 %v128
    %v836 = vunpack.c.l.b16 %v129
    %v837 = vunpack.c.h.b16 %v129
    %v838 = vunpack.c.l.b16 %v130
    %v839 = vunpack.c.h.b16 %v130
    %v840 = vunpack.c.l.b16 %v131
    %v841 = vunpack.c.h.b16 %v131
    %v842 = vunpack.c.l.b16 %v132
    %v843 = vunpack.c.h.b16 %v132
    %v844 = vunpack.c.l.b16 %v133
    %v845 = vunpack.c.h.b16 %v133
    %v846 = vunpack.c.l.b16 %v134
    %v847 = vunpack.c.h.b16 %v134
    %v848 = vunpack.c.l.b16 %v135
    %v849 = vunpack.c.h.b16 %v135
    %v850 = vunpack.c.l.b16 %v136
    %v851 = vunpack.c.h.b16 %v136
    %v852 = vunpack.c.l.b16 %v137
    %v853 = vunpack.c.h.b16 %v137
    %v854 = vunpack.c.l.b16 %v138
    %v855 = vunpack.c.h.b16 %v138
    %v856 = vunpack.c.l.b16 %v139
    %v857 = vunpack.c.h.b16 %v139
    %v858 = vunpack.c.l.b16 %v140
    %v859 = vunpack.c.h.b16 %v140
    %v860 = vunpack.c.l.b16 %v141
    %v861 = vunpack.c.h.b16 %v141
    %v862 = vunpack.c.l.b16 %v142
    %v863 = vunpack.c.h.b16 %v142
    %v864 = vunpack.c.l.b16 %v143
    %v865 = vunpack.c.h.b16 %v143
    %v866 = vunpack.c.l.b16 %v144
    %v867 = vunpack.c.h.b16 %v144
    %v868 = vunpack.c.l.b16 %v145
    %v869 = vunpack.c.h.b16 %v145
    %v870 = vunpack.c.l.b16 %v146
    %v871 = vunpack.c.h.b16 %v146
    %v872 = vunpack.c.l.b16 %v147
    %v873 = vunpack.c.h.b16 %v147
    %v874 = vunpack.c.l.b16 %v148
    %v875 = vunpack.c.h.b16 %v148
    %v876 = vunpack.c.l.b16 %v149
    %v877 = vunpack.c.h.b16 %v149
    %v878 = vunpack.c.l.b16 %v150
    %v879 = vunpack.c.h.b16 %v150
    %v880 = vunpack.c.l.b16 %v151
    %v881 = vunpack.c.h.b16 %v151
    %v882 = vunpack.c.l.b16 %v152
    %v883 = vunpack.c.h.b16 %v152
    %v884 = vunpack.c.l.b16 %v153
    %v885 = vunpack.c.h.b16 %v153
    %v886 = vunpack.c.l.b16 %v154
    %v887 = vunpack.c.h.b16 %v154
    %v888 = vunpack.c.l.b16 %v155
    %v889 = vunpack.c.h.b16 %v155
    %v890 = vunpack.c.l.b16 %v156
    %v891 = vunpack.c.h.b16 %v156
    %v892 = vunpack.c.l.b16 %v157
    %v893 = vunpack.c.h.b16 %v157
    %v894 = vunpack.c.l.b16 %v158
    %v895 = vunpack.c.h.b16 %v158
    %v896 = vunpack.c.l.b16 %v159
    %v897 = vunpack.c.h.b16 %v159
    %v898 = vunpack.c.l.b16 %v160
    %v899 = vunpack.c.h.b16 %v160
    %v900 = vunpack.c.l.b16 %v161
    %v901 = vunpack.c.h.b16 %v161
    %v902 = vunpack.c.l.b16 %v162
    %v903 = vunpack.c.h.b16 %v162
    %v904 = vunpack.c.l.b16 %v163
    %v905 = vunpack.c.h.b16 %v163
    %v906 = vunpack.c.l.b16 %v164
    %v907 = vunpack.c.h.b16 %v164
    %v908 = vunpack.c.l.b16 %v165
    %v909 = vunpack.c.h.b16 %v165
    %v910 = vunpack.c.l.b16 %v166
    %v911 = vunpack.c.h.b16 %v166
    %v912 = vunpack.c.l.b16 %v167
    %v913 = vunpack.c.h.b16 %v167
    %v914 = vunpack.c.l.b16 %v168
    %v915 = vunpack.c.h.b16 %v168
    %v916 = vunpack.c.l.b16 %v169
    %v917 = vunpack.c.h.b16 %v169
    %v918 = vunpack.c.l.b16 %v170
    %v919 = vunpack.c.h.b16 %v170
    %v920 = vunpack.c.l.b16 %v171
    %v921 = vunpack.c.h.b16 %v171
    %v922 = vunpack.c.l.b16 %v172
    %v923 = vunpack.c.h.b16 %v172
    %v924 = vunpack.c.l.b16 %v173
    %v925 = vunpack.c.h.b16 %v173
    %v926 = vunpack.c.l.b16 %v174
    %v927 = vunpack.c.h.b16 %v174
    %v928 = vunpack.c.l.b16 %v175
    %v929 = vunpack.c.h.b16 %v175
    %v930 = vunpack.c.l.b16 %v176
    %v931 = vunpack.c.h.b16 %v176
    %v932 = vunpack.c.l.b16 %v177
    %v933 = vunpack.c.h.b16 %v177
    %v934 = vunpack.c.l.b16 %v178
    %v935 = vunpack.c.h.b16 %v178
    %v936 = vunpack.c.l.b16 %v179
    %v937 = vunpack.c.h.b16 %v179
    %v938 = vunpack.c.l.b16 %v180
    %v939 = vunpack.c.h.b16 %v180
    %v940 = vunpack.c.l.b16 %v181
    %v941 = vunpack.c.h.b16 %v181
    %v942 = vunpack.c.l.b16 %v182
    %v943 = vunpack.c.h.b16 %v182
    %v944 = vunpack.c.l.b16 %v183
    %v945 = vunpack.c.h.b16 %v183
    %v946 = vunpack.c.l.b16 %v184
    %v947 = vunpack.c.h.b16 %v184
    %v948 = vunpack.c.l.b16 %v185
    %v949 = vunpack.c.h.b16 %v185
    %v950 = vunpack.c.l.b16 %v186
    %v951 = vunpack.c.h.b16 %v186
    %v952 = vunpack.c.l.b16 %v187
    %v953 = vunpack.c.h.b16 %v187
    %v954 = vunpack.c.l.b16 %v188
    %v955 = vunpack.c.h.b16 %v188
    %v956 = vunpack.c.l.b16 %v189
    %v957 = vunpack.c.h.b16 %v189
    %v958 = vunpack.c.l.b16 %v190
    %v959 = vunpack.c.h.b16 %v190
    %v960 = vunpack.c.l.b16 %v191
    %v961 = vunpack.c.h.b16 %v191
    %v962 = vunpack.c.l.b16 %v192
    %v963 = vunpack.c.h.b16 %v192
    %v964 = vunpack.c.l.b16 %v193
    %v965 = vunpack.c.h.b16 %v193
    %v966 = vunpack.c.l.b16 %v194
    %v967 = vunpack.c.h.b16 %v194
    %v968 = vunpack.c.l.b16 %v195
    %v969 = vunpack.c.h.b16 %v195
    %v970 = vunpack.c.l.b16 %v196
    %v971 = vunpack.c.h.b16 %v196
    %v972 = vunpack.c.l.b16 %v197
    %v973 = vunpack.c.h.b16 %v197
    %v974 = vunpack.c.l.b16 %v198
    %v975 = vunpack.c.h.b16 %v198
    %v976 = vunpack.c.l.b16 %v199
    %v977 = vunpack.c.h.b16 %v199
    %v978 = vunpack.c.l.b16 %v200
    %v979 = vunpack.c.h.b16 %v200
    %v980 = vunpack.c.l.b16 %v201
    %v981 = vunpack.c.h.b16 %v201
    %v982 = vunpack.c.l.b16 %v202
    %v983 = vunpack.c.h.b16 %v202
    %v984 = vunpack.c.l.b16 %v203
    %v985 = vunpack.c.h.b16 %v203
    %v986 = vunpack.c.l.b16 %v204
    %v987 = vunpack.c.h.b16 %v204
    %v988 = vunpack.c.l.b16 %v205
    %v989 = vunpack.c.h.b16 %v205
    %v990 = vunpack.c.l.b16 %v206
    %v991 = vunpack.c.h.b16 %v206
    %v992 = vunpack.c.l.b16 %v207
    %v993 = vunpack.c.h.b16 %v207
    %v994 = vunpack.c.l.b16 %v208
    %v995 = vunpack.c.h.b16 %v208
    %v996 = vunpack.c.l.b16 %v209
    %v997 = vunpack.c.h.b16 %v209
    %v998 = vunpack.c.l.b16 %v210
    %v999 = vunpack.c.h.b16 %v210
    %v1000 = vunpack.c.l.b16 %v211
    %v1001 = vunpack.c.h.b16 %v211
    %v1002 = vunpack.c.l.b16 %v212
    %v1003 = vunpack.c.h.b16 %v212
    %v1004 = vunpack.c.l.b16 %v213
    %v1005 = vunpack.c.h.b16 %v213
    %v1006 = vunpack.c.l.b16 %v214
    %v1007 = vunpack.c.h.b16 %v214
    %v1008 = vunpack.c.l.b16 %v215
    %v1009 = vunpack.c.h.b16 %v215
    %v1010 = vunpack.c.l.b16 %v216
    %v1011 = vunpack.c.h.b16 %v216
    %v1012 = vunpack.c.l.b16 %v217
    %v1013 = vunpack.c.h.b16 %v217
    %v1014 = vunpack.c.l.b16 %v218
    %v1015 = vunpack.c.h.b16 %v218
    %v1016 = vunpack.c.l.b16 %v219
    %v1017 = vunpack.c.h.b16 %v219
    %v1018 = vunpack.c.l.b16 %v220
    %v1019 = vunpack.c.h.b16 %v220
    %v1020 = vunpack.c.l.b16 %v221
    %v1021 = vunpack.c.h.b16 %v221
    %v1022 = vunpack.c.l.b16 %v222
    %v1023 = vunpack.c.h.b16 %v222
    %v1024 = vunpack.c.l.b16 %v223
    %v1025 = vunpack.c.h.b16 %v223
    %v1026 = vunpack.c.l.b16 %v224
    %v1027 = vunpack.c.h.b16 %v224
    %v1028 = vunpack.c.l.b16 %v225
    %v1029 = vunpack.c.h.b16 %v225
    %v1030 = vunpack.c.l.b16 %v226
    %v1031 = vunpack.c.h.b16 %v226
    %v1032 = vunpack.c.l.b16 %v227
    %v1033 = vunpack.c.h.b16 %v227
    %v1034 = vunpack.c.l.b16 %v228
    %v1035 = vunpack.c.h.b16 %v228
    %v1036 = vunpack.c.l.b16 %v229
    %v1037 = vunpack.c.h.b16 %v229
    %v1038 = vunpack.c.l.b16 %v230
    %v1039 = vunpack.c.h.b16 %v230
    %v1040 = vunpack.c.l.b16 %v231
    %v1041 = vunpack.c.h.b16 %v231
    %v1042 = vunpack.c.l.b16 %v232
    %v1043 = vunpack.c.h.b16 %v232
    %v1044 = vunpack.c.l.b16 %v233
    %v1045 = vunpack.c.h.b16 %v233
    %v1046 = vunpack.c.l.b16 %v234
    %v1047 = vunpack.c.h.b16 %v234
    %v1048 = vunpack.c.l.b16 %v235
    %v1049 = vunpack.c.h.b16 %v235
    %v1050 = vunpack.c.l.b16 %v236
    %v1051 = vunpack.c.h.b16 %v236
    %v1052 = vunpack.c.l.b16 %v237
    %v1053 = vunpack.c.h.b16 %v237
    %v1054 = vunpack.c.l.b16 %v238
    %v1055 = vunpack.c.h.b16 %v238
    %v1056 = vunpack.c.l.b16 %v239
    %v1057 = vunpack.c.h.b16 %v239
    %v1058 = vunpack.c.l.b16 %v240
    %v1059 = vunpack.c.h.b16 %v240
    %v1060 = vunpack.c.l.b16 %v241
    %v1061 = vunpack.c.h.b16 %v241
    %v1062 = vunpack.c.l.b16 %v242
    %v1063 = vunpack.c.h.b16 %v242
    %v1064 = vunpack.c.l.b16 %v243
    %v1065 = vunpack.c.h.b16 %v243
    %v1066 = vunpack.c.l.b16 %v244
    %v1067 = vunpack.c.h.b16 %v244
    %v1068 = vunpack.c.l.b16 %v245
    %v1069 = vunpack.c.h.b16 %v245
    %v1070 = vunpack.c.l.b16 %v246
    %v1071 = vunpack.c.h.b16 %v246
    %v1072 = vunpack.c.l.b16 %v247
    %v1073 = vunpack.c.h.b16 %v247
    %v1074 = vunpack.c.l.b16 %v248
    %v1075 = vunpack.c.h.b16 %v248
    %v1076 = vunpack.c.l.b16 %v249
    %v1077 = vunpack.c.h.b16 %v249
    %v1078 = vunpack.c.l.b16 %v250
    %v1079 = vunpack.c.h.b16 %v250
    %v1080 = vunpack.c.l.b16 %v251
    %v1081 = vunpack.c.h.b16 %v251
    %v1082 = vunpack.c.l.b16 %v252
    %v1083 = vunpack.c.h.b16 %v252
    %v1084 = vunpack.c.l.b16 %v253
    %v1085 = vunpack.c.h.b16 %v253
    %v1086 = vunpack.c.l.b16 %v254
    %v1087 = vunpack.c.h.b16 %v254
    %v1088 = vunpack.c.l.b16 %v255
    %v1089 = vunpack.c.h.b16 %v255
    %v1090 = vunpack.c.l.b16 %v256
    %v1091 = vunpack.c.h.b16 %v256
    %v1092 = vunpack.c.l.b16 %v257
    %v1093 = vunpack.c.h.b16 %v257
    %v1094 = vunpack.c.l.b16 %v258
    %v1095 = vunpack.c.h.b16 %v258
    %v1096 = vunpack.c.l.b16 %v259
    %v1097 = vunpack.c.h.b16 %v259
    %v1098 = vunpack.c.l.b16 %v260
    %v1099 = vunpack.c.h.b16 %v260
    %v1100 = vunpack.c.l.b16 %v261
    %v1101 = vunpack.c.h.b16 %v261
    %v1102 = vunpack.c.l.b16 %v262
    %v1103 = vunpack.c.h.b16 %v262
    %v1104 = vunpack.c.l.b16 %v263
    %v1105 = vunpack.c.h.b16 %v263
    %v1106 = vunpack.c.l.b16 %v264
    %v1107 = vunpack.c.h.b16 %v264
    %v1108 = vunpack.c.l.b16 %v265
    %v1109 = vunpack.c.h.b16 %v265
    %v1110 = vunpack.c.l.b16 %v266
    %v1111 = vunpack.c.h.b16 %v266
    %v1112 = vunpack.c.l.b16 %v267
    %v1113 = vunpack.c.h.b16 %v267
    %v1114 = vunpack.c.l.b16 %v268
    %v1115 = vunpack.c.h.b16 %v268
    %v1116 = vunpack.c.l.b16 %v269
    %v1117 = vunpack.c.h.b16 %v269
    %v1118 = vunpack.c.l.b16 %v270
    %v1119 = vunpack.c.h.b16 %v270
    %v1120 = vunpack.c.l.b16 %v271
    %v1121 = vunpack.c.h.b16 %v271
    %v1122 = vunpack.c.l.b16 %v272
    %v1123 = vunpack.c.h.b16 %v272
    %v1124 = vunpack.c.l.b16 %v273
    %v1125 = vunpack.c.h.b16 %v273
    %v1126 = vunpack.c.l.b16 %v274
    %v1127 = vunpack.c.h.b16 %v274
    %v1128 = vunpack.c.l.b16 %v275
    %v1129 = vunpack.c.h.b16 %v275
    %v1130 = vunpack.c.l.b16 %v276
    %v1131 = vunpack.c.h.b16 %v276
    %v1132 = vunpack.c.l.b16 %v277
    %v1133 = vunpack.c.h.b16 %v277
    %v1134 = vunpack.c.l.b16 %v278
    %v1135 = vunpack.c.h.b16 %v278
    %v1136 = vunpack.c.l.b16 %v279
    %v1137 = vunpack.c.h.b16 %v279
    %v1138 = vunpack.c.l.b16 %v280
    %v1139 = vunpack.c.h.b16 %v280
    %v1140 = vunpack.c.l.b16 %v281
    %v1141 = vunpack.c.h.b16 %v281
    %v1142 = vunpack.c.l.b16 %v282
    %v1143 = vunpack.c.h.b16 %v282
    %v1144 = vunpack.c.l.b16 %v283
    %v1145 = vunpack.c.h.b16 %v283
    %v1146 = vunpack.c.l.b16 %v284
    %v1147 = vunpack.c.h.b16 %v284
    %v1148 = vunpack.c.l.b16 %v285
    %v1149 = vunpack.c.h.b16 %v285
    %v1150 = vunpack.c.l.b16 %v286
    %v1151 = vunpack.c.h.b16 %v286
    %v1152 = vunpack.c.l.b16 %v287
    %v1153 = vunpack.c.h.b16 %v287
    %v1154 = vunpack.c.l.b16 %v288
    %v1155 = vunpack.c.h.b16 %v288
    %v1156 = vunpack.c.l.b16 %v289
    %v1157 = vunpack.c.h.b16 %v289
    %v1158 = vunpack.c.l.b16 %v290
    %v1159 = vunpack.c.h.b16 %v290
    %v1160 = vunpack.c.l.b16 %v291
    %v1161 = vunpack.c.h.b16 %v291
    %v1162 = vunpack.c.l.b16 %v292
    %v1163 = vunpack.c.h.b16 %v292
    %v1164 = vunpack.c.l.b16 %v293
    %v1165 = vunpack.c.h.b16 %v293
    %v1166 = vunpack.c.l.b16 %v294
    %v1167 = vunpack.c.h.b16 %v294
    %v1168 = vunpack.c.l.b16 %v295
    %v1169 = vunpack.c.h.b16 %v295
    %v1170 = vunpack.c.l.b16 %v296
    %v1171 = vunpack.c.h.b16 %v296
    %v1172 = vunpack.c.l.b16 %v297
    %v1173 = vunpack.c.h.b16 %v297
    %v1174 = vunpack.c.l.b16 %v298
    %v1175 = vunpack.c.h.b16 %v298
    %v1176 = vunpack.c.l.b16 %v299
    %v1177 = vunpack.c.h.b16 %v299
    %v1178 = vunpack.c.l.b16 %v300
    %v1179 = vunpack.c.h.b16 %v300
    %v1180 = vunpack.c.l.b16 %v301
    %v1181 = vunpack.c.h.b16 %v301
    %v1182 = vunpack.c.l.b16 %v302
    %v1183 = vunpack.c.h.b16 %v302
    %v1184 = vunpack.c.l.b16 %v303
    %v1185 = vunpack.c.h.b16 %v303
    %v1186 = vunpack.c.l.b16 %v304
    %v1187 = vunpack.c.h.b16 %v304
    %v1188 = vunpack.c.l.b16 %v305
    %v1189 = vunpack.c.h.b16 %v305
    %v1190 = vunpack.c.l.b16 %v306
    %v1191 = vunpack.c.h.b16 %v306
    %v1192 = vunpack.c.l.b16 %v307
    %v1193 = vunpack.c.h.b16 %v307
    %v1194 = vunpack.c.l.b16 %v308
    %v1195 = vunpack.c.h.b16 %v308
    %v1196 = vunpack.c.l.b16 %v309
    %v1197 = vunpack.c.h.b16 %v309
    %v1198 = vunpack.c.l.b16 %v310
    %v1199 = vunpack.c.h.b16 %v310
    %v1200 = vunpack.c.l.b16 %v311
    %v1201 = vunpack.c.h.b16 %v311
    %v1202 = vunpack.c.l.b16 %v312
    %v1203 = vunpack.c.h.b16 %v312
    %v1204 = vunpack.c.l.b16 %v313
    %v1205 = vunpack.c.h.b16 %v313
    %v1206 = vunpack.c.l.b16 %v314
    %v1207 = vunpack.c.h.b16 %v314
    %v1208 = vunpack.c.l.b16 %v315
    %v1209 = vunpack.c.h.b16 %v315
    %v1210 = vunpack.c.l.b16 %v316
    %v1211 = vunpack.c.h.b16 %v316
    %v1212 = vunpack.c.l.b16 %v317
    %v1213 = vunpack.c.h.b16 %v317
    %v1214 = vunpack.c.l.b16 %v318
    %v1215 = vunpack.c.h.b16 %v318
    %v1216 = vunpack.c.l.b16 %v319
    %v1217 = vunpack.c.h.b16 %v319
    %v1218 = vunpack.c.l.b16 %v320
    %v1219 = vunpack.c.h.b16 %v320
    %v1220 = vunpack.c.l.b16 %v321
    %v1221 = vunpack.c.h.b16 %v321
    %v1222 = vunpack.c.l.b16 %v322
    %v1223 = vunpack.c.h.b16 %v322
    %v1224 = vunpack.c.l.b16 %v323
    %v1225 = vunpack.c.h.b16 %v323
    %v1226 = vunpack.c.l.b16 %v324
    %v1227 = vunpack.c.h.b16 %v324
    %v1228 = vunpack.c.l.b16 %v325
    %v1229 = vunpack.c.h.b16 %v325
    %v1230 = vunpack.c.l.b16 %v326
    %v1231 = vunpack.c.h.b16 %v326
    %v1232 = vunpack.c.l.b16 %v327
    %v1233 = vunpack.c.h.b16 %v327
    %v1234 = vunpack.c.l.b16 %v328
    %v1235 = vunpack.c.h.b16 %v328
    %v1236 = vunpack.c.l.b16 %v329
    %v1237 = vunpack.c.h.b16 %v329
    %v1238 = vunpack.c.l.b16 %v330
    %v1239 = vunpack.c.h.b16 %v330
    %v1240 = vunpack.c.l.b16 %v331
    %v1241 = vunpack.c.h.b16 %v331
    %v1242 = vunpack.c.l.b16 %v332
    %v1243 = vunpack.c.h.b16 %v332
    %v1244 = vunpack.c.l.b16 %v333
    %v1245 = vunpack.c.h.b16 %v333
    %v1246 = vunpack.c.l.b16 %v334
    %v1247 = vunpack.c.h.b16 %v334
    %v1248 = vunpack.c.l.b16 %v335
    %v1249 = vunpack.c.h.b16 %v335
    %v1250 = vunpack.c.l.b16 %v336
    %v1251 = vunpack.c.h.b16 %v336
    %v1252 = vunpack.c.l.b16 %v337
    %v1253 = vunpack.c.h.b16 %v337
    %v1254 = vunpack.c.l.b16 %v338
    %v1255 = vunpack.c.h.b16 %v338
    %v1256 = vunpack.c.l.b16 %v339
    %v1257 = vunpack.c.h.b16 %v339
    %v1258 = vunpack.c.l.b16 %v340
    %v1259 = vunpack.c.h.b16 %v340
    %v1260 = vunpack.c.l.b16 %v341
    %v1261 = vunpack.c.h.b16 %v341
    %v1262 = vunpack.c.l.b16 %v342
    %v1263 = vunpack.c.h.b16 %v342
    %v1264 = vunpack.c.l.b16 %v343
    %v1265 = vunpack.c.h.b16 %v343
    %v1266 = vunpack.c.l.b16 %v344
    %v1267 = vunpack.c.h.b16 %v344
    %v1268 = vunpack.c.l.b16 %v345
    %v1269 = vunpack.c.h.b16 %v345
    %v1270 = vunpack.c.l.b16 %v346
    %v1271 = vunpack.c.h.b16 %v346
    %v1272 = vunpack.c.l.b16 %v347
    %v1273 = vunpack.c.h.b16 %v347
    %v1274 = vunpack.c.l.b16 %v348
    %v1275 = vunpack.c.h.b16 %v348
    %v1276 = vunpack.c.l.b16 %v349
    %v1277 = vunpack.c.h.b16 %v349
    %v1278 = vunpack.c.l.b16 %v350
    %v1279 = vunpack.c.h.b16 %v350
    %v1280 = vunpack.c.l.b16 %v351
    %v1281 = vunpack.c.h.b16 %v351
    %v1282 = vunpack.c.l.b16 %v352
    %v1283 = vunpack.c.h.b16 %v352
    %v1284 = vunpack.c.l.b16 %v353
    %v1285 = vunpack.c.h.b16 %v353
    %v1286 = vunpack.c.l.b16 %v354
    %v1287 = vunpack.c.h.b16 %v354
    %v1288 = vunpack.c.l.b16 %v355
    %v1289 = vunpack.c.h.b16 %v355
    %v1290 = vunpack.c.l.b16 %v356
    %v1291 = vunpack.c.h.b16 %v356
    %v1292 = vunpack.c.l.b16 %v357
    %v1293 = vunpack.c.h.b16 %v357
    %v1294 = vunpack.c.l.b16 %v358
    %v1295 = vunpack.c.h.b16 %v358
    %v1296 = vunpack.c.l.b16 %v359
    %v1297 = vunpack.c.h.b16 %v359
    %v1298 = vunpack.c.l.b16 %v360
    %v1299 = vunpack.c.h.b16 %v360
    %v1300 = vunpack.c.l.b16 %v361
    %v1301 = vunpack.c.h.b16 %v361
    %v1302 = vunpack.c.l.b16 %v362
    %v1303 = vunpack.c.h.b16 %v362
    %v1304 = vunpack.c.l.b16 %v363
    %v1305 = vunpack.c.h.b16 %v363
    %v1306 = vunpack.c.l.b16 %v364
    %v1307 = vunpack.c.h.b16 %v364
    %v1308 = vunpack.c.l.b16 %v365
    %v1309 = vunpack.c.h.b16 %v365
    %v1310 = vunpack.c.l.b16 %v366
    %v1311 = vunpack.c.h.b16 %v366
    %v1312 = vunpack.c.l.b16 %v367
    %v1313 = vunpack.c.h.b16 %v367
    %v1314 = vunpack.c.l.b16 %v368
    %v1315 = vunpack.c.h.b16 %v368
    %v1316 = vunpack.c.l.b16 %v369
    %v1317 = vunpack.c.h.b16 %v369
    %v1318 = vunpack.c.l.b16 %v370
    %v1319 = vunpack.c.h.b16 %v370
    %v1320 = vunpack.c.l.b16 %v371
    %v1321 = vunpack.c.h.b16 %v371
    %v1322 = vunpack.c.l.b16 %v372
    %v1323 = vunpack.c.h.b16 %v372
    %v1324 = vunpack.c.l.b16 %v373
    %v1325 = vunpack.c.h.b16 %v373
    %v1326 = vunpack.c.l.b16 %v374
    %v1327 = vunpack.c.h.b16 %v374
    %v1328 = vunpack.c.l.b16 %v375
    %v1329 = vunpack.c.h.b16 %v375
    %v1330 = vunpack.c.l.b16 %v376
    %v1331 = vunpack.c.h.b16 %v376
    %v1332 = vunpack.c.l.b16 %v377
    %v1333 = vunpack.c.h.b16 %v377
    %v1334 = vunpack.c.l.b16 %v378
    %v1335 = vunpack.c.h.b16 %v378
    %v1336 = vunpack.c.l.b16 %v379
    %v1337 = vunpack.c.h.b16 %v379
    %v1338 = vunpack.c.l.b16 %v380
    %v1339 = vunpack.c.h.b16 %v380
    %v1340 = vunpack.c.l.b16 %v381
    %v1341 = vunpack.c.h.b16 %v381
    %v1342 = vpack.c.b16 %v778, %v766
    %v1343 = vpack.c.b16 %v779, %v767
    %v1344 = vpack.c.b16 %v780, %v768
    %v1345 = vpack.c.b16 %v781, %v769
    %v1346 = vpack.c.b16 %v782, %v770
    %v1347 = vpack.c.b16 %v783, %v771
    %v1348 = vpack.c.b16 %v784, %v772
    %v1349 = vpack.c.b16 %v785, %v773
    %v1350 = vpack.c.b16 %v786, %v774
    %v1351 = vpack.c.b16 %v787, %v775
    %v1352 = vpack.c.b16 %v788, %v776
    %v1353 = vpack.c.b16 %v789, %v777
    %v1354 = vpack.c.b16 %v802, %v790
    %v1355 = vpack.c.b16 %v803, %v791
    %v1356 = vpack.c.b16 %v804, %v792
    %v1357 = vpack.c.b16 %v805, %v793
    %v1358 = vpack.c.b16 %v806, %v794
    %v1359 = vpack.c.b16 %v807, %v795
    %v1360 = vpack.c.b16 %v808, %v796
    %v1361 = vpack.c.b16 %v809, %v797
    %v1362 = vpack.c.b16 %v810, %v798
    %v1363 = vpack.c.b16 %v811, %v799
    %v1364 = vpack.c.b16 %v812, %v800
    %v1365 = vpack.c.b16 %v813, %v801
    %v1366 = vpack.c.b16 %v826, %v814
    %v1367 = vpack.c.b16 %v827, %v815
    %v1368 = vpack.c.b16 %v828, %v816
    %v1369 = vpack.c.b16 %v829, %v817
    %v1370 = vpack.c.b16 %v830, %v818
    %v1371 = vpack.c.b16 %v831, %v819
    %v1372 = vpack.c.b16 %v832, %v820
    %v1373 = vpack.c.b16 %v833, %v821
    %v1374 = vpack.c.b16 %v834, %v822
    %v1375 = vpack.c.b16 %v835, %v823
    %v1376 = vpack.c.b16 %v836, %v824
    %v1377 = vpack.c.b16 %v837, %v825
    %v1378 = vpack.c.b16 %v850, %v838
    %v1379 = vpack.c.b16 %v851, %v839
    %v1380 = vpack.c.b16 %v852, %v840
    %v1381 = vpack.c.b16 %v853, %v841
    %v1382 = vpack.c.b16 %v854, %v842
    %v1383 = vpack.c.b16 %v855, %v843
    %v1384 = vpack.c.b16 %v856, %v844
    %v1385 = vpack.c.b16 %v857, %v845
    %v1386 = vpack.c.b16 %v858, %v846
    %v1387 = vpack.c.b16 %v859, %v847
    %v1388 = vpack.c.b16 %v860, %v848
    %v1389 = vpack.c.b16 %v861, %v849
    %v1390 = vpack.c.b16 %v874, %v862
    %v1391 = vpack.c.b16 %v875, %v863
    %v1392 = vpack.c.b16 %v876, %v864
    %v1393 = vpack.c.b16 %v877, %v865
    %v1394 = vpack.c.b16 %v878, %v866
    %v1395 = vpack.c.b16 %v879, %v867
    %v1396 = vpack.c.b16 %v880, %v868
    %v1397 = vpack.c.b16 %v881, %v869
    %v1398 = vpack.c.b16 %v882, %v870
    %v1399 = vpack.c.b16 %v883, %v871
    %v1400 = vpack.c.b16 %v884, %v872
    %v1401 = vpack.c.b16 %v885, %v873
    %v1402 = vpack.c.b16 %v898, %v886
    %v1403 = vpack.c.b16 %v899, %v887
    %v1404 = vpack.c.b16 %v900, %v888
    %v1405 = vpack.c.b16 %v901, %v889
    %v1406 = vpack.c.b16 %v902, %v890
    %v1407 = vpack.c.b16 %v903, %v891
    %v1408 = vpack.c.b16 %v904, %v892
    %v1409 = vpack.c.b16 %v905, %v893
    %v1410 = vpack.c.b16 %v906, %v894
    %v1411 = vpack.c.b16 %v907, %v895
    %v1412 = vpack.c.b16 %v908, %v896
    %v1413 = vpack.c.b16 %v909, %v897
    %v1414 = vpack.c.b16 %v922, %v910
    %v1415 = vpack.c.b16 %v923, %v911
    %v1416 = vpack.c.b16 %v924, %v912
    %v1417 = vpack.c.b16 %v925, %v913
    %v1418 = vpack.c.b16 %v926, %v914
    %v1419 = vpack.c.b16 %v927, %v915
    %v1420 = vpack.c.b16 %v928, %v916
    %v1421 = vpack.c.b16 %v929, %v917
    %v1422 = vpack.c.b16 %v930, %v918
    %v1423 = vpack.c.b16 %v931, %v919
    %v1424 = vpack.c.b16 %v932, %v920
    %v1425 = vpack.c.b16 %v933, %v921
    %v1426 = vpack.c.b16 %v946, %v934
    %v1427 = vpack.c.b16 %v947, %v935
    %v1428 = vpack.c.b16 %v948, %v936
    %v1429 = vpack.c.b16 %v949, %v937
    %v1430 = vpack.c.b16 %v950, %v938
    %v1431 = vpack.c.b16 %v951, %v939
    %v1432 = vpack.c.b16 %v952, %v940
    %v1433 = vpack.c.b16 %v953, %v941
    %v1434 = vpack.c.b16 %v954, %v942
    %v1435 = vpack.c.b16 %v955, %v943
    %v1436 = vpack.c.b16 %v956, %v944
    %v1437 = vpack.c.b16 %v957, %v945
    %v1438 = vpack.c.b16 %v970, %v958
    %v1439 = vpack.c.b16 %v971, %v959
    %v1440 = vpack.c.b16 %v972, %v960
    %v1441 = vpack.c.b16 %v973, %v961
    %v1442 = vpack.c.b16 %v974, %v962
    %v1443 = vpack.c.b16 %v975, %v963
    %v1444 = vpack.c.b16 %v976, %v964
    %v1445 = vpack.c.b16 %v977, %v965
    %v1446 = vpack.c.b16 %v978, %v966
    %v1447 = vpack.c.b16 %v979, %v967
    %v1448 = vpack.c.b16 %v980, %v968
    %v1449 = vpack.c.b16 %v981, %v969
    %v1450 = vpack.c.b16 %v994, %v982
    %v1451 = vpack.c.b16 %v995, %v983
    %v1452 = vpack.c.b16 %v996, %v984
    %v1453 = vpack.c.b16 %v997, %v985
    %v1454 = vpack.c.b16 %v998, %v986
    %v1455 = vpack.c.b16 %v999, %v987
    %v1456 = vpack.c.b16 %v1000, %v988
    %v1457 = vpack.c.b16 %v1001, %v989
    %v1458 = vpack.c.b16 %v1002, %v990
    %v1459 = vpack.c.b16 %v1003, %v991
    %v1460 = vpack.c.b16 %v1004, %v992
    %v1461 = vpack.c.b16 %v1005, %v993
    %v1462 = vpack.c.b16 %v1018, %v1006
    %v1463 = vpack.c.b16 %v1019, %v1007
    %v1464 = vpack.c.b16 %v1020, %v1008
    %v1465 = vpack.c.b16 %v1021, %v1009
    %v1466 = vpack.c.b16 %v1022, %v1010
    %v1467 = vpack.c.b16 %v1023, %v1011
    %v1468 = vpack.c.b16 %v1024, %v1012
    %v1469 = vpack.c.b16 %v1025, %v1013
    %v1470 = vpack.c.b16 %v1026, %v1014
    %v1471 = vpack.c.b16 %v1027, %v1015
    %v1472 = vpack.c.b16 %v1028, %v1016
    %v1473 = vpack.c.b16 %v1029, %v1017
    %v1474 = vpack.c.b16 %v1042, %v1030
    %v1475 = vpack.c.b16 %v1043, %v1031
    %v1476 = vpack.c.b16 %v1044, %v1032
    %v1477 = vpack.c.b16 %v1045, %v1033
    %v1478 = vpack.c.b16 %v1046, %v1034
    %v1479 = vpack.c.b16 %v1047, %v1035
    %v1480 = vpack.c.b16 %v1048, %v1036
    %v1481 = vpack.c.b16 %v1049, %v1037
    %v1482 = vpack.c.b16 %v1050, %v1038
    %v1483 = vpack.c.b16 %v1051, %v1039
    %v1484 = vpack.c.b16 %v1052, %v1040
    %v1485 = vpack.c.b16 %v1053, %v1041
    %v1486 = vpack.c.b16 %v1066, %v1054
    %v1487 = vpack.c.b16 %v1067, %v1055
    %v1488 = vpack.c.b16 %v1068, %v1056
    %v1489 = vpack.c.b16 %v1069, %v1057
    %v1490 = vpack.c.b16 %v1070, %v1058
    %v1491 = vpack.c.b16 %v1071, %v1059
    %v1492 = vpack.c.b16 %v1072, %v1060
    %v1493 = vpack.c.b16 %v1073, %v1061
    %v1494 = vpack.c.b16 %v1074, %v1062
    %v1495 = vpack.c.b16 %v1075, %v1063
    %v1496 = vpack.c.b16 %v1076, %v1064
    %v1497 = vpack.c.b16 %v1077, %v1065
    %v1498 = vpack.c.b16 %v1090, %v1078
    %v1499 = vpack.c.b16 %v1091, %v1079
    %v1500 = vpack.c.b16 %v1092, %v1080
    %v1501 = vpack.c.b16 %v1093, %v1081
    %v1502 = vpack.c.b16 %v1094, %v1082
    %v1503 = vpack.c.b16 %v1095, %v1083
    %v1504 = vpack.c.b16 %v1096, %v1084
    %v1505 = vpack.c.b16 %v1097, %v1085
    %v1506 = vpack.c.b16 %v1098, %v1086
    %v1507 = vpack.c.b16 %v1099, %v1087
    %v1508 = vpack.c.b16 %v1100, %v1088
    %v1509 = vpack.c.b16 %v1101, %v1089
    %v1510 = vpack.c.b16 %v1114, %v1102
    %v1511 = vpack.c.b16 %v1115, %v1103
    %v1512 = vpack.c.b16 %v1116, %v1104
    %v1513 = vpack.c.b16 %v1117, %v1105
    %v1514 = vpack.c.b16 %v1118, %v1106
    %v1515 = vpack.c.b16 %v1119, %v1107
    %v1516 = vpack.c.b16 %v1120, %v1108
    %v1517 = vpack.c.b16 %v1121, %v1109
    %v1518 = vpack.c.b16 %v1122, %v1110
    %v1519 = vpack.c.b16 %v1123, %v1111
    %v1520 = vpack.c.b16 %v1124, %v1112
    %v1521 = vpack.c.b16 %v1125, %v1113
    %v1522 = vpack.c.b16 %v1138, %v1126
    %v1523 = vpack.c.b16 %v1139, %v1127
    %v1524 = vpack.c.b16 %v1140, %v1128
    %v1525 = vpack.c.b16 %v1141, %v1129
    %v1526 = vpack.c.b16 %v1142, %v1130
    %v1527 = vpack.c.b16 %v1143, %v1131
    %v1528 = vpack.c.b16 %v1144, %v1132
    %v1529 = vpack.c.b16 %v1145, %v1133
    %v1530 = vpack.c.b16 %v1146, %v1134
    %v1531 = vpack.c.b16 %v1147, %v1135
    %v1532 = vpack.c.b16 %v1148, %v1136
    %v1533 = vpack.c.b16 %v1149, %v1137
    %v1534 = vpack.c.b16 %v1162, %v1150
    %v1535 = vpack.c.b16 %v1163, %v1151
    %v1536 = vpack.c.b16 %v1164, %v1152
    %v1537 = vpack.c.b16 %v1165, %v1153
    %v1538 = vpack.c.b16 %v1166, %v1154
    %v1539 = vpack.c.b16 %v1167, %v1155
    %v1540 = vpack.c.b16 %v1168, %v1156
    %v1541 = vpack.c.b16 %v1169, %v1157
    %v1542 = vpack.c.b16 %v1170, %v1158
    %v1543 = vpack.c.b16 %v1171, %v1159
    %v1544 = vpack.c.b16 %v1172, %v1160
    %v1545 = vpack.c.b16 %v1173, %v1161
    %v1546 = vpack.c.b16 %v1186, %v1174
    %v1547 = vpack.c.b16 %v1187, %v1175
    %v1548 = vpack.c.b16 %v1188, %v1176
    %v1549 = vpack.c.b16 %v1189, %v1177
    %v1550 = vpack.c.b16 %v1190, %v1178
    %v1551 = vpack.c.b16 %v1191, %v1179
    %v1552 = vpack.c.b16 %v1192, %v1180
    %v1553 = vpack.c.b16 %v1193, %v1181
    %v1554 = vpack.c.b16 %v1194, %v1182
    %v1555 = vpack.c.b16 %v1195, %v1183
    %v1556 = vpack.c.b16 %v1196, %v1184
    %v1557 = vpack.c.b16 %v1197, %v1185
    %v1558 = vpack.c.b16 %v1210, %v1198
    %v1559 = vpack.c.b16 %v1211, %v1199
    %v1560 = vpack.c.b16 %v1212, %v1200
    %v1561 = vpack.c.b16 %v1213, %v1201
    %v1562 = vpack.c.b16 %v1214, %v1202
    %v1563 = vpack.c.b16 %v1215, %v1203
    %v1564 = vpack.c.b16 %v1216, %v1204
    %v1565 = vpack.c.b16 %v1217, %v1205
    %v1566 = vpack.c.b16 %v1218, %v1206
    %v1567 = vpack.c.b16 %v1219, %v1207
    %v1568 = vpack.c.b16 %v1220, %v1208
    %v1569 = vpack.c.b16 %v1221, %v1209
    %v1570 = vpack.c.b16 %v1234, %v1222
    %v1571 = vpack.c.b16 %v1235, %v1223
    %v1572 = vpack.c.b16 %v1236, %v1224
    %v1573 = vpack.c.b16 %v1237, %v1225
    %v1574 = vpack.c.b16 %v1238, %v1226
    %v1575 = vpack.c.b16 %v1239, %v1227
    %v1576 = vpack.c.b16 %v1240, %v1228
    %v1577 = vpack.c.b16 %v1241, %v1229
    %v1578 = vpack.c.b16 %v1242, %v1230
    %v1579 = vpack.c.b16 %v1243, %v1231
    %v1580 = vpack.c.b16 %v1244, %v1232
    %v1581 = vpack.c.b16 %v1245, %v1233
    %v1582 = vpack.c.b16 %v1258, %v1246
    %v1583 = vpack.c.b16 %v1259, %v1247
    %v1584 = vpack.c.b16 %v1260, %v1248
    %v1585 = vpack.c.b16 %v1261, %v1249
    %v1586 = vpack.c.b16 %v1262, %v1250
    %v1587 = vpack.c.b16 %v1263, %v1251
    %v1588 = vpack.c.b16 %v1264, %v1252
    %v1589 = vpack.c.b16 %v1265, %v1253
    %v1590 = vpack.c.b16 %v1266, %v1254
    %v1591 = vpack.c.b16 %v1267, %v1255
    %v1592 = vpack.c.b16 %v1268, %v1256
    %v1593 = vpack.c.b16 %v1269, %v1257
    %v1594 = vpack.c.b16 %v1282, %v1270
    %v1595 = vpack.c.b16 %v1283, %v1271
    %v1596 = vpack.c.b16 %v1284, %v1272
    %v1597 = vpack.c.b16 %v1285, %v1273
    %v1598 = vpack.c.b16 %v1286, %v1274
    %v1599 = vpack.c.b16 %v1287, %v1275
    %v1600 = vpack.c.b16 %v1288, %v1276
    %v1601 = vpack.c.b16 %v1289, %v1277
    %v1602 = vpack.c.b16 %v1290, %v1278
    %v1603 = vpack.c.b16 %v1291, %v1279
    %v1604 = vpack.c.b16 %v1292, %v1280
    %v1605 = vpack.c.b16 %v1293, %v1281
    %v1606 = vpack.c.b16 %v1306, %v1294
    %v1607 = vpack.c.b16 %v1307, %v1295
    %v1608 = vpack.c.b16 %v1308, %v1296
    %v1609 = vpack.c.b16 %v1309, %v1297
    %v1610 = vpack.c.b16 %v1310, %v1298
    %v1611 = vpack.c.b16 %v1311, %v1299
    %v1612 = vpack.c.b16 %v1312, %v1300
    %v1613 = vpack.c.b16 %v1313, %v1301
    %v1614 = vpack.c.b16 %v1314, %v1302
    %v1615 = vpack.c.b16 %v1315, %v1303
    %v1616 = vpack.c.b16 %v1316, %v1304
    %v1617 = vpack.c.b16 %v1317, %v1305
    %v1618 = vpack.c.b16 %v1330, %v1318
    %v1619 = vpack.c.b16 %v1331, %v1319
    %v1620 = vpack.c.b16 %v1332, %v1320
    %v1621 = vpack.c.b16 %v1333, %v1321
    %v1622 = vpack.c.b16 %v1334, %v1322
    %v1623 = vpack.c.b16 %v1335, %v1323
    %v1624 = vpack.c.b16 %v1336, %v1324
    %v1625 = vpack.c.b16 %v1337, %v1325
    %v1626 = vpack.c.b16 %v1338, %v1326
    %v1627 = vpack.c.b16 %v1339, %v1327
    %v1628 = vpack.c.b16 %v1340, %v1328
    %v1629 = vpack.c.b16 %v1341, %v1329
    %1918 = vmatprep.subr.bf16.mxu0 %v1343
    %1919 = vmatpush1.bf16.msra.mxu0 %v1342
    %1920 = vmatprep.subr.bf16.mxu0 %v1355
    %1921 = vmatpush1.bf16.msra.mxu0 %v1354
    %1922 = vmatprep.subr.bf16.mxu0 %v1367
    %1923 = vmatpush1.bf16.msra.mxu0 %v1366
    %1924 = vmatprep.subr.bf16.mxu0 %v1379
    %1925 = vmatpush1.bf16.msra.mxu0 %v1378
    %1926 = vmatprep.subr.bf16.mxu0 %v1391
    %1927 = vmatpush1.bf16.msra.mxu0 %v1390
    %1928 = vmatprep.subr.bf16.mxu0 %v1403
    %1929 = vmatpush1.bf16.msra.mxu0 %v1402
    %1930 = vmatprep.subr.bf16.mxu0 %v1415
    %1931 = vmatpush1.bf16.msra.mxu0 %v1414
    %1932 = vmatprep.subr.bf16.mxu0 %v1427
    %1933 = vmatpush1.bf16.msra.mxu0 %v1426
    %1934 = vmatprep.subr.bf16.mxu0 %v1439
    %1935 = vmatpush1.bf16.msra.mxu0 %v1438
    %1936 = vmatprep.subr.bf16.mxu0 %v1451
    %1937 = vmatpush1.bf16.msra.mxu0 %v1450
    %1938 = vmatprep.subr.bf16.mxu0 %v1463
    %1939 = vmatpush1.bf16.msra.mxu0 %v1462
    %1940 = vmatprep.subr.bf16.mxu0 %v1475
    %1941 = vmatpush1.bf16.msra.mxu0 %v1474
    %1942 = vmatprep.subr.bf16.mxu0 %v1487
    %1943 = vmatpush1.bf16.msra.mxu0 %v1486
    %1944 = vmatprep.subr.bf16.mxu0 %v1499
    %1945 = vmatpush1.bf16.msra.mxu0 %v1498
    %1946 = vmatprep.subr.bf16.mxu0 %v1511
    %1947 = vmatpush1.bf16.msra.mxu0 %v1510
    %1948 = vmatprep.subr.bf16.mxu0 %v1523
    %1949 = vmatpush1.bf16.msra.mxu0 %v1522
    %1950 = vmatprep.mubr.bf16.mxu0 %v467
    %1951 = vmatmul.mubr.bf16.gmra.mrb[0].mxu0 %v466
    %v1952 = vpop.f32.mrb[0].mxu0
    %v1953 = vadd.f32 %v389, %v1952
    %v1954 = vpop.f32.mrb[0].mxu0
    %v1955 = vadd.f32 %v393, %v1954
    %v1956 = vpop.f32.mrb[0].mxu0
    %v1957 = vadd.f32 %v389, %v1956
    %v1958 = vpop.f32.mrb[0].mxu0
    %v1959 = vadd.f32 %v393, %v1958
    %1960 = vmatprep.mubr.bf16.mxu0 %v470
    %1961 = vmatmul.mubr.bf16.gmra.mrb[0].mxu0 %v469
    %v1962 = vpop.f32.mrb[0].mxu0
    %v1963 = vadd.f32 %v389, %v1962
    %v1964 = vpop.f32.mrb[0].mxu0
    %v1965 = vadd.f32 %v393, %v1964
    %v1966 = vpop.f32.mrb[0].mxu0
    %v1967 = vadd.f32 %v389, %v1966
    %v1968 = vpop.f32.mrb[0].mxu0
    %v1969 = vadd.f32 %v393, %v1968
    %1970 = vdwg.mxu0
    %1971 = vmatprep.subr.bf16.mxu0 %v1535
    %1972 = vmatpush1.bf16.msra.mxu0 %v1534
    %1973 = vmatprep.subr.bf16.mxu0 %v1547
    %1974 = vmatpush1.bf16.msra.mxu0 %v1546
    %1975 = vmatprep.subr.bf16.mxu0 %v1559
    %1976 = vmatpush1.bf16.msra.mxu0 %v1558
    %1977 = vmatprep.subr.bf16.mxu0 %v1571
    %1978 = vmatpush1.bf16.msra.mxu0 %v1570
    %1979 = vmatprep.subr.bf16.mxu0 %v1583
    %1980 = vmatpush1.bf16.msra.mxu0 %v1582
    %1981 = vmatprep.subr.bf16.mxu0 %v1595
    %1982 = vmatpush1.bf16.msra.mxu0 %v1594
    %1983 = vmatprep.subr.bf16.mxu0 %v1607
    %1984 = vmatpush1.bf16.msra.mxu0 %v1606
    %1985 = vmatprep.subr.bf16.mxu0 %v1619
    %1986 = vmatpush1.bf16.msra.mxu0 %v1618
    %1987 = vmatprep.subr.bf16.mxu0 0
    %1988 = vmatpush1.bf16.msra.mxu0 0
    %1989 = vmatprep.subr.bf16.mxu0 0
    %1990 = vmatpush1.bf16.msra.mxu0 0
    %1991 = vmatprep.subr.bf16.mxu0 0
    %1992 = vmatpush1.bf16.msra.mxu0 0
    %1993 = vmatprep.subr.bf16.mxu0 0
    %1994 = vmatpush1.bf16.msra.mxu0 0
    %1995 = vmatprep.subr.bf16.mxu0 0
    %1996 = vmatpush1.bf16.msra.mxu0 0
    %1997 = vmatprep.subr.bf16.mxu0 0
    %1998 = vmatpush1.bf16.msra.mxu0 0
    %1999 = vmatprep.subr.bf16.mxu0 0
    %2000 = vmatpush1.bf16.msra.mxu0 0
    %2001 = vmatprep.subr.bf16.mxu0 0
    %2002 = vmatpush1.bf16.msra.mxu0 0
    %2003 = vmatprep.mubr.bf16.mxu0 0
    %2004 = vmatmul.mubr.bf16.gmra.mrb[0].mxu0 %v468
    %v2005 = vpop.f32.mrb[0].mxu0
    %v2006 = vadd.f32 %v1953, %v2005
    %v2007 = vpop.f32.mrb[0].mxu0
    %v2008 = vadd.f32 %v1955, %v2007
    %v2009 = vpop.f32.mrb[0].mxu0
    %v2010 = vadd.f32 %v1957, %v2009
    %v2011 = vpop.f32.mrb[0].mxu0
    %v2012 = vadd.f32 %v1959, %v2011
    %2013 = vmatprep.mubr.bf16.mxu0 0
    %2014 = vmatmul.mubr.bf16.gmra.mrb[0].mxu0 %v471
    %v2015 = vpop.f32.mrb[0].mxu0
    %v2016 = vadd.f32 %v1963, %v2015
    %v2017 = vpop.f32.mrb[0].mxu0
    %v2018 = vadd.f32 %v1965, %v2017
    %v2019 = vpop.f32.mrb[0].mxu0
    %v2020 = vadd.f32 %v1967, %v2019
    %v2021 = vpop.f32.mrb[0].mxu0
    %v2022 = vadd.f32 %v1969, %v2021
    %2023 = vdwg.mxu0
    %2024 = vmatprep.subr.bf16.mxu0 %v1345
    %2025 = vmatpush1.bf16.msra.mxu0 %v1344
    %2026 = vmatprep.subr.bf16.mxu0 %v1357
    %2027 = vmatpush1.bf16.msra.mxu0 %v1356
    %2028 = vmatprep.subr.bf16.mxu0 %v1369
    %2029 = vmatpush1.bf16.msra.mxu0 %v1368
    %2030 = vmatprep.subr.bf16.mxu0 %v1381
    %2031 = vmatpush1.bf16.msra.mxu0 %v1380
    %2032 = vmatprep.subr.bf16.mxu0 %v1393
    %2033 = vmatpush1.bf16.msra.mxu0 %v1392
    %2034 = vmatprep.subr.bf16.mxu0 %v1405
    %2035 = vmatpush1.bf16.msra.mxu0 %v1404
    %2036 = vmatprep.subr.bf16.mxu0 %v1417
    %2037 = vmatpush1.bf16.msra.mxu0 %v1416
    %2038 = vmatprep.subr.bf16.mxu0 %v1429
    %2039 = vmatpush1.bf16.msra.mxu0 %v1428
    %2040 = vmatprep.subr.bf16.mxu0 %v1441
    %2041 = vmatpush1.bf16.msra.mxu0 %v1440
    %2042 = vmatprep.subr.bf16.mxu0 %v1453
    %2043 = vmatpush1.bf16.msra.mxu0 %v1452
    %2044 = vmatprep.subr.bf16.mxu0 %v1465
    %2045 = vmatpush1.bf16.msra.mxu0 %v1464
    %2046 = vmatprep.subr.bf16.mxu0 %v1477
    %2047 = vmatpush1.bf16.msra.mxu0 %v1476
    %2048 = vmatprep.subr.bf16.mxu0 %v1489
    %2049 = vmatpush1.bf16.msra.mxu0 %v1488
    %2050 = vmatprep.subr.bf16.mxu0 %v1501
    %2051 = vmatpush1.bf16.msra.mxu0 %v1500
    %2052 = vmatprep.subr.bf16.mxu0 %v1513
    %2053 = vmatpush1.bf16.msra.mxu0 %v1512
    %2054 = vmatprep.subr.bf16.mxu0 %v1525
    %2055 = vmatpush1.bf16.msra.mxu0 %v1524
    %2056 = vmatprep.mubr.bf16.mxu0 %v467
    %2057 = vmatmul.mubr.bf16.gmra.mrb[0].mxu0 %v466
    %v2058 = vpop.f32.mrb[0].mxu0
    %v2059 = vadd.f32 %v397, %v2058
    %v2060 = vpop.f32.mrb[0].mxu0
    %v2061 = vadd.f32 %v401, %v2060
    %v2062 = vpop.f32.mrb[0].mxu0
    %v2063 = vadd.f32 %v397, %v2062
    %v2064 = vpop.f32.mrb[0].mxu0
    %v2065 = vadd.f32 %v401, %v2064
    %2066 = vmatprep.mubr.bf16.mxu0 %v470
    %2067 = vmatmul.mubr.bf16.gmra.mrb[0].mxu0 %v469
    %v2068 = vpop.f32.mrb[0].mxu0
    %v2069 = vadd.f32 %v397, %v2068
    %v2070 = vpop.f32.mrb[0].mxu0
    %v2071 = vadd.f32 %v401, %v2070
    %v2072 = vpop.f32.mrb[0].mxu0
    %v2073 = vadd.f32 %v397, %v2072
    %v2074 = vpop.f32.mrb[0].mxu0
    %v2075 = vadd.f32 %v401, %v2074
    %2076 = vdwg.mxu0
    %2077 = vmatprep.subr.bf16.mxu0 %v1537
    %2078 = vmatpush1.bf16.msra.mxu0 %v1536
    %2079 = vmatprep.subr.bf16.mxu0 %v1549
    %2080 = vmatpush1.bf16.msra.mxu0 %v1548
    %2081 = vmatprep.subr.bf16.mxu0 %v1561
    %2082 = vmatpush1.bf16.msra.mxu0 %v1560
    %2083 = vmatprep.subr.bf16.mxu0 %v1573
    %2084 = vmatpush1.bf16.msra.mxu0 %v1572
    %2085 = vmatprep.subr.bf16.mxu0 %v1585
    %2086 = vmatpush1.bf16.msra.mxu0 %v1584
    %2087 = vmatprep.subr.bf16.mxu0 %v1597
    %2088 = vmatpush1.bf16.msra.mxu0 %v1596
    %2089 = vmatprep.subr.bf16.mxu0 %v1609
    %2090 = vmatpush1.bf16.msra.mxu0 %v1608
    %2091 = vmatprep.subr.bf16.mxu0 %v1621
    %2092 = vmatpush1.bf16.msra.mxu0 %v1620
    %2093 = vmatprep.subr.bf16.mxu0 0
    %2094 = vmatpush1.bf16.msra.mxu0 0
    %2095 = vmatprep.subr.bf16.mxu0 0
    %2096 = vmatpush1.bf16.msra.mxu0 0
    %2097 = vmatprep.subr.bf16.mxu0 0
    %2098 = vmatpush1.bf16.msra.mxu0 0
    %2099 = vmatprep.subr.bf16.mxu0 0
    %2100 = vmatpush1.bf16.msra.mxu0 0
    %2101 = vmatprep.subr.bf16.mxu0 0
    %2102 = vmatpush1.bf16.msra.mxu0 0
    %2103 = vmatprep.subr.bf16.mxu0 0
    %2104 = vmatpush1.bf16.msra.mxu0 0
    %2105 = vmatprep.subr.bf16.mxu0 0
    %2106 = vmatpush1.bf16.msra.mxu0 0
    %2107 = vmatprep.subr.bf16.mxu0 0
    %2108 = vmatpush1.bf16.msra.mxu0 0
    %2109 = vmatprep.mubr.bf16.mxu0 0
    %2110 = vmatmul.mubr.bf16.gmra.mrb[0].mxu0 %v468
    %v2111 = vpop.f32.mrb[0].mxu0
    %v2112 = vadd.f32 %v2059, %v2111
    %v2113 = vpop.f32.mrb[0].mxu0
    %v2114 = vadd.f32 %v2061, %v2113
    %v2115 = vpop.f32.mrb[0].mxu0
    %v2116 = vadd.f32 %v2063, %v2115
    %v2117 = vpop.f32.mrb[0].mxu0
    %v2118 = vadd.f32 %v2065, %v2117
    %2119 = vmatprep.mubr.bf16.mxu0 0
    %2120 = vmatmul.mubr.bf16.gmra.mrb[0].mxu0 %v471
    %v2121 = vpop.f32.mrb[0].mxu0
    %v2122 = vadd.f32 %v2069, %v2121
    %v2123 = vpop.f32.mrb[0].mxu0
    %v2124 = vadd.f32 %v2071, %v2123
    %v2125 = vpop.f32.mrb[0].mxu0
    %v2126 = vadd.f32 %v2073, %v2125
    %v2127 = vpop.f32.mrb[0].mxu0
    %v2128 = vadd.f32 %v2075, %v2127
    %2129 = vdwg.mxu0
    %2130 = vmatprep.subr.bf16.mxu0 %v1347
    %2131 = vmatpush1.bf16.msra.mxu0 %v1346
    %2132 = vmatprep.subr.bf16.mxu0 %v1359
    %2133 = vmatpush1.bf16.msra.mxu0 %v1358
    %2134 = vmatprep.subr.bf16.mxu0 %v1371
    %2135 = vmatpush1.bf16.msra.mxu0 %v1370
    %2136 = vmatprep.subr.bf16.mxu0 %v1383
    %2137 = vmatpush1.bf16.msra.mxu0 %v1382
    %2138 = vmatprep.subr.bf16.mxu0 %v1395
    %2139 = vmatpush1.bf16.msra.mxu0 %v1394
    %2140 = vmatprep.subr.bf16.mxu0 %v1407
    %2141 = vmatpush1.bf16.msra.mxu0 %v1406
    %2142 = vmatprep.subr.bf16.mxu0 %v1419
    %2143 = vmatpush1.bf16.msra.mxu0 %v1418
    %2144 = vmatprep.subr.bf16.mxu0 %v1431
    %2145 = vmatpush1.bf16.msra.mxu0 %v1430
    %2146 = vmatprep.subr.bf16.mxu0 %v1443
    %2147 = vmatpush1.bf16.msra.mxu0 %v1442
    %2148 = vmatprep.subr.bf16.mxu0 %v1455
    %2149 = vmatpush1.bf16.msra.mxu0 %v1454
    %2150 = vmatprep.subr.bf16.mxu0 %v1467
    %2151 = vmatpush1.bf16.msra.mxu0 %v1466
    %2152 = vmatprep.subr.bf16.mxu0 %v1479
    %2153 = vmatpush1.bf16.msra.mxu0 %v1478
    %2154 = vmatprep.subr.bf16.mxu0 %v1491
    %2155 = vmatpush1.bf16.msra.mxu0 %v1490
    %2156 = vmatprep.subr.bf16.mxu0 %v1503
    %2157 = vmatpush1.bf16.msra.mxu0 %v1502
    %2158 = vmatprep.subr.bf16.mxu0 %v1515
    %2159 = vmatpush1.bf16.msra.mxu0 %v1514
    %2160 = vmatprep.subr.bf16.mxu0 %v1527
    %2161 = vmatpush1.bf16.msra.mxu0 %v1526
    %2162 = vmatprep.mubr.bf16.mxu0 %v467
    %2163 = vmatmul.mubr.bf16.gmra.mrb[0].mxu0 %v466
    %v2164 = vpop.f32.mrb[0].mxu0
    %v2165 = vadd.f32 %v405, %v2164
    %v2166 = vpop.f32.mrb[0].mxu0
    %v2167 = vadd.f32 %v409, %v2166
    %v2168 = vpop.f32.mrb[0].mxu0
    %v2169 = vadd.f32 %v405, %v2168
    %v2170 = vpop.f32.mrb[0].mxu0
    %v2171 = vadd.f32 %v409, %v2170
    %2172 = vmatprep.mubr.bf16.mxu0 %v470
    %2173 = vmatmul.mubr.bf16.gmra.mrb[0].mxu0 %v469
    %v2174 = vpop.f32.mrb[0].mxu0
    %v2175 = vadd.f32 %v405, %v2174
    %v2176 = vpop.f32.mrb[0].mxu0
    %v2177 = vadd.f32 %v409, %v2176
    %v2178 = vpop.f32.mrb[0].mxu0
    %v2179 = vadd.f32 %v405, %v2178
    %v2180 = vpop.f32.mrb[0].mxu0
    %v2181 = vadd.f32 %v409, %v2180
    %2182 = vdwg.mxu0
    %2183 = vmatprep.subr.bf16.mxu0 %v1539
    %2184 = vmatpush1.bf16.msra.mxu0 %v1538
    %2185 = vmatprep.subr.bf16.mxu0 %v1551
    %2186 = vmatpush1.bf16.msra.mxu0 %v1550
    %2187 = vmatprep.subr.bf16.mxu0 %v1563
    %2188 = vmatpush1.bf16.msra.mxu0 %v1562
    %2189 = vmatprep.subr.bf16.mxu0 %v1575
    %2190 = vmatpush1.bf16.msra.mxu0 %v1574
    %2191 = vmatprep.subr.bf16.mxu0 %v1587
    %2192 = vmatpush1.bf16.msra.mxu0 %v1586
    %2193 = vmatprep.subr.bf16.mxu0 %v1599
    %2194 = vmatpush1.bf16.msra.mxu0 %v1598
    %2195 = vmatprep.subr.bf16.mxu0 %v1611
    %2196 = vmatpush1.bf16.msra.mxu0 %v1610
    %2197 = vmatprep.subr.bf16.mxu0 %v1623
    %2198 = vmatpush1.bf16.msra.mxu0 %v1622
    %2199 = vmatprep.subr.bf16.mxu0 0
    %2200 = vmatpush1.bf16.msra.mxu0 0
    %2201 = vmatprep.subr.bf16.mxu0 0
    %2202 = vmatpush1.bf16.msra.mxu0 0
    %2203 = vmatprep.subr.bf16.mxu0 0
    %2204 = vmatpush1.bf16.msra.mxu0 0
    %2205 = vmatprep.subr.bf16.mxu0 0
    %2206 = vmatpush1.bf16.msra.mxu0 0
    %2207 = vmatprep.subr.bf16.mxu0 0
    %2208 = vmatpush1.bf16.msra.mxu0 0
    %2209 = vmatprep.subr.bf16.mxu0 0
    %2210 = vmatpush1.bf16.msra.mxu0 0
    %2211 = vmatprep.subr.bf16.mxu0 0
    %2212 = vmatpush1.bf16.msra.mxu0 0
    %2213 = vmatprep.subr.bf16.mxu0 0
    %2214 = vmatpush1.bf16.msra.mxu0 0
    %2215 = vmatprep.mubr.bf16.mxu0 0
    %2216 = vmatmul.mubr.bf16.gmra.mrb[0].mxu0 %v468
    %v2217 = vpop.f32.mrb[0].mxu0
    %v2218 = vadd.f32 %v2165, %v2217
    %v2219 = vpop.f32.mrb[0].mxu0
    %v2220 = vadd.f32 %v2167, %v2219
    %v2221 = vpop.f32.mrb[0].mxu0
    %v2222 = vadd.f32 %v2169, %v2221
    %v2223 = vpop.f32.mrb[0].mxu0
    %v2224 = vadd.f32 %v2171, %v2223
    %2225 = vmatprep.mubr.bf16.mxu0 0
    %2226 = vmatmul.mubr.bf16.gmra.mrb[0].mxu0 %v471
    %v2227 = vpop.f32.mrb[0].mxu0
    %v2228 = vadd.f32 %v2175, %v2227
    %v2229 = vpop.f32.mrb[0].mxu0
    %v2230 = vadd.f32 %v2177, %v2229
    %v2231 = vpop.f32.mrb[0].mxu0
    %v2232 = vadd.f32 %v2179, %v2231
    %v2233 = vpop.f32.mrb[0].mxu0
    %v2234 = vadd.f32 %v2181, %v2233
    %2235 = vdwg.mxu0
    %2236 = vmatprep.subr.bf16.mxu0 %v1349
    %2237 = vmatpush1.bf16.msra.mxu0 %v1348
    %2238 = vmatprep.subr.bf16.mxu0 %v1361
    %2239 = vmatpush1.bf16.msra.mxu0 %v1360
    %2240 = vmatprep.subr.bf16.mxu0 %v1373
    %2241 = vmatpush1.bf16.msra.mxu0 %v1372
    %2242 = vmatprep.subr.bf16.mxu0 %v1385
    %2243 = vmatpush1.bf16.msra.mxu0 %v1384
    %2244 = vmatprep.subr.bf16.mxu0 %v1397
    %2245 = vmatpush1.bf16.msra.mxu0 %v1396
    %2246 = vmatprep.subr.bf16.mxu0 %v1409
    %2247 = vmatpush1.bf16.msra.mxu0 %v1408
    %2248 = vmatprep.subr.bf16.mxu0 %v1421
    %2249 = vmatpush1.bf16.msra.mxu0 %v1420
    %2250 = vmatprep.subr.bf16.mxu0 %v1433
    %2251 = vmatpush1.bf16.msra.mxu0 %v1432
    %2252 = vmatprep.subr.bf16.mxu0 %v1445
    %2253 = vmatpush1.bf16.msra.mxu0 %v1444
    %2254 = vmatprep.subr.bf16.mxu0 %v1457
    %2255 = vmatpush1.bf16.msra.mxu0 %v1456
    %2256 = vmatprep.subr.bf16.mxu0 %v1469
    %2257 = vmatpush1.bf16.msra.mxu0 %v1468
    %2258 = vmatprep.subr.bf16.mxu0 %v1481
    %2259 = vmatpush1.bf16.msra.mxu0 %v1480
    %2260 = vmatprep.subr.bf16.mxu0 %v1493
    %2261 = vmatpush1.bf16.msra.mxu0 %v1492
    %2262 = vmatprep.subr.bf16.mxu0 %v1505
    %2263 = vmatpush1.bf16.msra.mxu0 %v1504
    %2264 = vmatprep.subr.bf16.mxu0 %v1517
    %2265 = vmatpush1.bf16.msra.mxu0 %v1516
    %2266 = vmatprep.subr.bf16.mxu0 %v1529
    %2267 = vmatpush1.bf16.msra.mxu0 %v1528
    %2268 = vmatprep.mubr.bf16.mxu0 %v467
    %2269 = vmatmul.mubr.bf16.gmra.mrb[0].mxu0 %v466
    %v2270 = vpop.f32.mrb[0].mxu0
    %v2271 = vadd.f32 %v413, %v2270
    %v2272 = vpop.f32.mrb[0].mxu0
    %v2273 = vadd.f32 %v417, %v2272
    %v2274 = vpop.f32.mrb[0].mxu0
    %v2275 = vadd.f32 %v413, %v2274
    %v2276 = vpop.f32.mrb[0].mxu0
    %v2277 = vadd.f32 %v417, %v2276
    %2278 = vmatprep.mubr.bf16.mxu0 %v470
    %2279 = vmatmul.mubr.bf16.gmra.mrb[0].mxu0 %v469
    %v2280 = vpop.f32.mrb[0].mxu0
    %v2281 = vadd.f32 %v413, %v2280
    %v2282 = vpop.f32.mrb[0].mxu0
    %v2283 = vadd.f32 %v417, %v2282
    %v2284 = vpop.f32.mrb[0].mxu0
    %v2285 = vadd.f32 %v413, %v2284
    %v2286 = vpop.f32.mrb[0].mxu0
    %v2287 = vadd.f32 %v417, %v2286
    %2288 = vdwg.mxu0
    %2289 = vmatprep.subr.bf16.mxu0 %v1541
    %2290 = vmatpush1.bf16.msra.mxu0 %v1540
    %2291 = vmatprep.subr.bf16.mxu0 %v1553
    %2292 = vmatpush1.bf16.msra.mxu0 %v1552
    %2293 = vmatprep.subr.bf16.mxu0 %v1565
    %2294 = vmatpush1.bf16.msra.mxu0 %v1564
    %2295 = vmatprep.subr.bf16.mxu0 %v1577
    %2296 = vmatpush1.bf16.msra.mxu0 %v1576
    %2297 = vmatprep.subr.bf16.mxu0 %v1589
    %2298 = vmatpush1.bf16.msra.mxu0 %v1588
    %2299 = vmatprep.subr.bf16.mxu0 %v1601
    %2300 = vmatpush1.bf16.msra.mxu0 %v1600
    %2301 = vmatprep.subr.bf16.mxu0 %v1613
    %2302 = vmatpush1.bf16.msra.mxu0 %v1612
    %2303 = vmatprep.subr.bf16.mxu0 %v1625
    %2304 = vmatpush1.bf16.msra.mxu0 %v1624
    %2305 = vmatprep.subr.bf16.mxu0 0
    %2306 = vmatpush1.bf16.msra.mxu0 0
    %2307 = vmatprep.subr.bf16.mxu0 0
    %2308 = vmatpush1.bf16.msra.mxu0 0
    %2309 = vmatprep.subr.bf16.mxu0 0
    %2310 = vmatpush1.bf16.msra.mxu0 0
    %2311 = vmatprep.subr.bf16.mxu0 0
    %2312 = vmatpush1.bf16.msra.mxu0 0
    %2313 = vmatprep.subr.bf16.mxu0 0
    %2314 = vmatpush1.bf16.msra.mxu0 0
    %2315 = vmatprep.subr.bf16.mxu0 0
    %2316 = vmatpush1.bf16.msra.mxu0 0
    %2317 = vmatprep.subr.bf16.mxu0 0
    %2318 = vmatpush1.bf16.msra.mxu0 0
    %2319 = vmatprep.subr.bf16.mxu0 0
    %2320 = vmatpush1.bf16.msra.mxu0 0
    %2321 = vmatprep.mubr.bf16.mxu0 0
    %2322 = vmatmul.mubr.bf16.gmra.mrb[0].mxu0 %v468
    %v2323 = vpop.f32.mrb[0].mxu0
    %v2324 = vadd.f32 %v2271, %v2323
    %v2325 = vpop.f32.mrb[0].mxu0
    %v2326 = vadd.f32 %v2273, %v2325
    %v2327 = vpop.f32.mrb[0].mxu0
    %v2328 = vadd.f32 %v2275, %v2327
    %v2329 = vpop.f32.mrb[0].mxu0
    %v2330 = vadd.f32 %v2277, %v2329
    %2331 = vmatprep.mubr.bf16.mxu0 0
    %2332 = vmatmul.mubr.bf16.gmra.mrb[0].mxu0 %v471
    %v2333 = vpop.f32.mrb[0].mxu0
    %v2334 = vadd.f32 %v2281, %v2333
    %v2335 = vpop.f32.mrb[0].mxu0
    %v2336 = vadd.f32 %v2283, %v2335
    %v2337 = vpop.f32.mrb[0].mxu0
    %v2338 = vadd.f32 %v2285, %v2337
    %v2339 = vpop.f32.mrb[0].mxu0
    %v2340 = vadd.f32 %v2287, %v2339
    %2341 = vdwg.mxu0
    %2342 = vmatprep.subr.bf16.mxu0 %v1351
    %2343 = vmatpush1.bf16.msra.mxu0 %v1350
    %2344 = vmatprep.subr.bf16.mxu0 %v1363
    %2345 = vmatpush1.bf16.msra.mxu0 %v1362
    %2346 = vmatprep.subr.bf16.mxu0 %v1375
    %2347 = vmatpush1.bf16.msra.mxu0 %v1374
    %2348 = vmatprep.subr.bf16.mxu0 %v1387
    %2349 = vmatpush1.bf16.msra.mxu0 %v1386
    %2350 = vmatprep.subr.bf16.mxu0 %v1399
    %2351 = vmatpush1.bf16.msra.mxu0 %v1398
    %2352 = vmatprep.subr.bf16.mxu0 %v1411
    %2353 = vmatpush1.bf16.msra.mxu0 %v1410
    %2354 = vmatprep.subr.bf16.mxu0 %v1423
    %2355 = vmatpush1.bf16.msra.mxu0 %v1422
    %2356 = vmatprep.subr.bf16.mxu0 %v1435
    %2357 = vmatpush1.bf16.msra.mxu0 %v1434
    %2358 = vmatprep.subr.bf16.mxu0 %v1447
    %2359 = vmatpush1.bf16.msra.mxu0 %v1446
    %2360 = vmatprep.subr.bf16.mxu0 %v1459
    %2361 = vmatpush1.bf16.msra.mxu0 %v1458
    %2362 = vmatprep.subr.bf16.mxu0 %v1471
    %2363 = vmatpush1.bf16.msra.mxu0 %v1470
    %2364 = vmatprep.subr.bf16.mxu0 %v1483
    %2365 = vmatpush1.bf16.msra.mxu0 %v1482
    %2366 = vmatprep.subr.bf16.mxu0 %v1495
    %2367 = vmatpush1.bf16.msra.mxu0 %v1494
    %2368 = vmatprep.subr.bf16.mxu0 %v1507
    %2369 = vmatpush1.bf16.msra.mxu0 %v1506
    %2370 = vmatprep.subr.bf16.mxu0 %v1519
    %2371 = vmatpush1.bf16.msra.mxu0 %v1518
    %2372 = vmatprep.subr.bf16.mxu0 %v1531
    %2373 = vmatpush1.bf16.msra.mxu0 %v1530
    %2374 = vmatprep.mubr.bf16.mxu0 %v467
    %2375 = vmatmul.mubr.bf16.gmra.mrb[0].mxu0 %v466
    %v2376 = vpop.f32.mrb[0].mxu0
    %v2377 = vadd.f32 %v421, %v2376
    %v2378 = vpop.f32.mrb[0].mxu0
    %v2379 = vadd.f32 %v425, %v2378
    %v2380 = vpop.f32.mrb[0].mxu0
    %v2381 = vadd.f32 %v421, %v2380
    %v2382 = vpop.f32.mrb[0].mxu0
    %v2383 = vadd.f32 %v425, %v2382
    %2384 = vmatprep.mubr.bf16.mxu0 %v470
    %2385 = vmatmul.mubr.bf16.gmra.mrb[0].mxu0 %v469
    %v2386 = vpop.f32.mrb[0].mxu0
    %v2387 = vadd.f32 %v421, %v2386
    %v2388 = vpop.f32.mrb[0].mxu0
    %v2389 = vadd.f32 %v425, %v2388
    %v2390 = vpop.f32.mrb[0].mxu0
    %v2391 = vadd.f32 %v421, %v2390
    %v2392 = vpop.f32.mrb[0].mxu0
    %v2393 = vadd.f32 %v425, %v2392
    %2394 = vdwg.mxu0
    %2395 = vmatprep.subr.bf16.mxu0 %v1543
    %2396 = vmatpush1.bf16.msra.mxu0 %v1542
    %2397 = vmatprep.subr.bf16.mxu0 %v1555
    %2398 = vmatpush1.bf16.msra.mxu0 %v1554
    %2399 = vmatprep.subr.bf16.mxu0 %v1567
    %2400 = vmatpush1.bf16.msra.mxu0 %v1566
    %2401 = vmatprep.subr.bf16.mxu0 %v1579
    %2402 = vmatpush1.bf16.msra.mxu0 %v1578
    %2403 = vmatprep.subr.bf16.mxu0 %v1591
    %2404 = vmatpush1.bf16.msra.mxu0 %v1590
    %2405 = vmatprep.subr.bf16.mxu0 %v1603
    %2406 = vmatpush1.bf16.msra.mxu0 %v1602
    %2407 = vmatprep.subr.bf16.mxu0 %v1615
    %2408 = vmatpush1.bf16.msra.mxu0 %v1614
    %2409 = vmatprep.subr.bf16.mxu0 %v1627
    %2410 = vmatpush1.bf16.msra.mxu0 %v1626
    %2411 = vmatprep.subr.bf16.mxu0 0
    %2412 = vmatpush1.bf16.msra.mxu0 0
    %2413 = vmatprep.subr.bf16.mxu0 0
    %2414 = vmatpush1.bf16.msra.mxu0 0
    %2415 = vmatprep.subr.bf16.mxu0 0
    %2416 = vmatpush1.bf16.msra.mxu0 0
    %2417 = vmatprep.subr.bf16.mxu0 0
    %2418 = vmatpush1.bf16.msra.mxu0 0
    %2419 = vmatprep.subr.bf16.mxu0 0
    %2420 = vmatpush1.bf16.msra.mxu0 0
    %2421 = vmatprep.subr.bf16.mxu0 0
    %2422 = vmatpush1.bf16.msra.mxu0 0
    %2423 = vmatprep.subr.bf16.mxu0 0
    %2424 = vmatpush1.bf16.msra.mxu0 0
    %2425 = vmatprep.subr.bf16.mxu0 0
    %2426 = vmatpush1.bf16.msra.mxu0 0
    %2427 = vmatprep.mubr.bf16.mxu0 0
    %2428 = vmatmul.mubr.bf16.gmra.mrb[0].mxu0 %v468
    %v2429 = vpop.f32.mrb[0].mxu0
    %v2430 = vadd.f32 %v2377, %v2429
    %v2431 = vpop.f32.mrb[0].mxu0
    %v2432 = vadd.f32 %v2379, %v2431
    %v2433 = vpop.f32.mrb[0].mxu0
    %v2434 = vadd.f32 %v2381, %v2433
    %v2435 = vpop.f32.mrb[0].mxu0
    %v2436 = vadd.f32 %v2383, %v2435
    %2437 = vmatprep.mubr.bf16.mxu0 0
    %2438 = vmatmul.mubr.bf16.gmra.mrb[0].mxu0 %v471
    %v2439 = vpop.f32.mrb[0].mxu0
    %v2440 = vadd.f32 %v2387, %v2439
    %v2441 = vpop.f32.mrb[0].mxu0
    %v2442 = vadd.f32 %v2389, %v2441
    %v2443 = vpop.f32.mrb[0].mxu0
    %v2444 = vadd.f32 %v2391, %v2443
    %v2445 = vpop.f32.mrb[0].mxu0
    %v2446 = vadd.f32 %v2393, %v2445
    %2447 = vdwg.mxu0
    %2448 = vmatprep.subr.bf16.mxu0 %v1353
    %2449 = vmatpush1.bf16.msra.mxu0 %v1352
    %2450 = vmatprep.subr.bf16.mxu0 %v1365
    %2451 = vmatpush1.bf16.msra.mxu0 %v1364
    %2452 = vmatprep.subr.bf16.mxu0 %v1377
    %2453 = vmatpush1.bf16.msra.mxu0 %v1376
    %2454 = vmatprep.subr.bf16.mxu0 %v1389
    %2455 = vmatpush1.bf16.msra.mxu0 %v1388
    %2456 = vmatprep.subr.bf16.mxu0 %v1401
    %2457 = vmatpush1.bf16.msra.mxu0 %v1400
    %2458 = vmatprep.subr.bf16.mxu0 %v1413
    %2459 = vmatpush1.bf16.msra.mxu0 %v1412
    %2460 = vmatprep.subr.bf16.mxu0 %v1425
    %2461 = vmatpush1.bf16.msra.mxu0 %v1424
    %2462 = vmatprep.subr.bf16.mxu0 %v1437
    %2463 = vmatpush1.bf16.msra.mxu0 %v1436
    %2464 = vmatprep.subr.bf16.mxu0 %v1449
    %2465 = vmatpush1.bf16.msra.mxu0 %v1448
    %2466 = vmatprep.subr.bf16.mxu0 %v1461
    %2467 = vmatpush1.bf16.msra.mxu0 %v1460
    %2468 = vmatprep.subr.bf16.mxu0 %v1473
    %2469 = vmatpush1.bf16.msra.mxu0 %v1472
    %2470 = vmatprep.subr.bf16.mxu0 %v1485
    %2471 = vmatpush1.bf16.msra.mxu0 %v1484
    %2472 = vmatprep.subr.bf16.mxu0 %v1497
    %2473 = vmatpush1.bf16.msra.mxu0 %v1496
    %2474 = vmatprep.subr.bf16.mxu0 %v1509
    %2475 = vmatpush1.bf16.msra.mxu0 %v1508
    %2476 = vmatprep.subr.bf16.mxu0 %v1521
    %2477 = vmatpush1.bf16.msra.mxu0 %v1520
    %2478 = vmatprep.subr.bf16.mxu0 %v1533
    %2479 = vmatpush1.bf16.msra.mxu0 %v1532
    %2480 = vmatprep.mubr.bf16.mxu0 %v467
    %2481 = vmatmul.mubr.bf16.gmra.mrb[0].mxu0 %v466
    %v2482 = vpop.f32.mrb[0].mxu0
    %v2483 = vadd.f32 %v429, %v2482
    %v2484 = vpop.f32.mrb[0].mxu0
    %v2485 = vadd.f32 %v433, %v2484
    %v2486 = vpop.f32.mrb[0].mxu0
    %v2487 = vadd.f32 %v429, %v2486
    %v2488 = vpop.f32.mrb[0].mxu0
    %v2489 = vadd.f32 %v433, %v2488
    %2490 = vmatprep.mubr.bf16.mxu0 %v470
    %2491 = vmatmul.mubr.bf16.gmra.mrb[0].mxu0 %v469
    %v2492 = vpop.f32.mrb[0].mxu0
    %v2493 = vadd.f32 %v429, %v2492
    %v2494 = vpop.f32.mrb[0].mxu0
    %v2495 = vadd.f32 %v433, %v2494
    %v2496 = vpop.f32.mrb[0].mxu0
    %v2497 = vadd.f32 %v429, %v2496
    %v2498 = vpop.f32.mrb[0].mxu0
    %v2499 = vadd.f32 %v433, %v2498
    %2500 = vdwg.mxu0
    %2501 = vmatprep.subr.bf16.mxu0 %v1545
    %2502 = vmatpush1.bf16.msra.mxu0 %v1544
    %2503 = vmatprep.subr.bf16.mxu0 %v1557
    %2504 = vmatpush1.bf16.msra.mxu0 %v1556
    %2505 = vmatprep.subr.bf16.mxu0 %v1569
    %2506 = vmatpush1.bf16.msra.mxu0 %v1568
    %2507 = vmatprep.subr.bf16.mxu0 %v1581
    %2508 = vmatpush1.bf16.msra.mxu0 %v1580
    %2509 = vmatprep.subr.bf16.mxu0 %v1593
    %2510 = vmatpush1.bf16.msra.mxu0 %v1592
    %2511 = vmatprep.subr.bf16.mxu0 %v1605
    %2512 = vmatpush1.bf16.msra.mxu0 %v1604
    %2513 = vmatprep.subr.bf16.mxu0 %v1617
    %2514 = vmatpush1.bf16.msra.mxu0 %v1616
    %2515 = vmatprep.subr.bf16.mxu0 %v1629
    %2516 = vmatpush1.bf16.msra.mxu0 %v1628
    %2517 = vmatprep.subr.bf16.mxu0 0
    %2518 = vmatpush1.bf16.msra.mxu0 0
    %2519 = vmatprep.subr.bf16.mxu0 0
    %2520 = vmatpush1.bf16.msra.mxu0 0
    %2521 = vmatprep.subr.bf16.mxu0 0
    %2522 = vmatpush1.bf16.msra.mxu0 0
    %2523 = vmatprep.subr.bf16.mxu0 0
    %2524 = vmatpush1.bf16.msra.mxu0 0
    %2525 = vmatprep.subr.bf16.mxu0 0
    %2526 = vmatpush1.bf16.msra.mxu0 0
    %2527 = vmatprep.subr.bf16.mxu0 0
    %2528 = vmatpush1.bf16.msra.mxu0 0
    %2529 = vmatprep.subr.bf16.mxu0 0
    %2530 = vmatpush1.bf16.msra.mxu0 0
    %2531 = vmatprep.subr.bf16.mxu0 0
    %2532 = vmatpush1.bf16.msra.mxu0 0
    %2533 = vmatprep.mubr.bf16.mxu0 0
    %2534 = vmatmul.mubr.bf16.gmra.mrb[0].mxu0 %v468
    %v2535 = vpop.f32.mrb[0].mxu0
    %v2536 = vadd.f32 %v2483, %v2535
    %v2537 = vpop.f32.mrb[0].mxu0
    %v2538 = vadd.f32 %v2485, %v2537
    %v2539 = vpop.f32.mrb[0].mxu0
    %v2540 = vadd.f32 %v2487, %v2539
    %v2541 = vpop.f32.mrb[0].mxu0
    %v2542 = vadd.f32 %v2489, %v2541
    %2543 = vmatprep.mubr.bf16.mxu0 0
    %2544 = vmatmul.mubr.bf16.gmra.mrb[0].mxu0 %v471
    %v2545 = vpop.f32.mrb[0].mxu0
    %v2546 = vadd.f32 %v2493, %v2545
    %v2547 = vpop.f32.mrb[0].mxu0
    %v2548 = vadd.f32 %v2495, %v2547
    %v2549 = vpop.f32.mrb[0].mxu0
    %v2550 = vadd.f32 %v2497, %v2549
    %v2551 = vpop.f32.mrb[0].mxu0
    %v2552 = vadd.f32 %v2499, %v2551
    %2553 = vdwg.mxu0
    %v2554 = vmax.f32 %v2006, 0.0
    %v2555 = vmax.f32 %v2008, 0.0
    %v2556 = vmax.f32 %v2112, 0.0
    %v2557 = vmax.f32 %v2114, 0.0
    %v2558 = vmax.f32 %v2218, 0.0
    %v2559 = vmax.f32 %v2220, 0.0
    %v2560 = vmax.f32 %v2324, 0.0
    %v2561 = vmax.f32 %v2326, 0.0
    %v2562 = vmax.f32 %v2430, 0.0
    %v2563 = vmax.f32 %v2432, 0.0
    %v2564 = vmax.f32 %v2536, 0.0
    %v2565 = vmax.f32 %v2538, 0.0
    %v2566 = vmax.f32 %v2010, 0.0
    %v2567 = vmax.f32 %v2012, 0.0
    %v2568 = vmax.f32 %v2116, 0.0
    %v2569 = vmax.f32 %v2118, 0.0
    %v2570 = vmax.f32 %v2222, 0.0
    %v2571 = vmax.f32 %v2224, 0.0
    %v2572 = vmax.f32 %v2328, 0.0
    %v2573 = vmax.f32 %v2330, 0.0
    %v2574 = vmax.f32 %v2434, 0.0
    %v2575 = vmax.f32 %v2436, 0.0
    %v2576 = vmax.f32 %v2540, 0.0
    %v2577 = vmax.f32 %v2542, 0.0
    %v2578 = vmax.f32 %v2016, 0.0
    %v2579 = vmax.f32 %v2018, 0.0
    %v2580 = vmax.f32 %v2122, 0.0
    %v2581 = vmax.f32 %v2124, 0.0
    %v2582 = vmax.f32 %v2228, 0.0
    %v2583 = vmax.f32 %v2230, 0.0
    %v2584 = vmax.f32 %v2334, 0.0
    %v2585 = vmax.f32 %v2336, 0.0
    %v2586 = vmax.f32 %v2440, 0.0
    %v2587 = vmax.f32 %v2442, 0.0
    %v2588 = vmax.f32 %v2546, 0.0
    %v2589 = vmax.f32 %v2548, 0.0
    %v2590 = vmax.f32 %v2020, 0.0
    %v2591 = vmax.f32 %v2022, 0.0
    %v2592 = vmax.f32 %v2126, 0.0
    %v2593 = vmax.f32 %v2128, 0.0
    %v2594 = vmax.f32 %v2232, 0.0
    %v2595 = vmax.f32 %v2234, 0.0
    %v2596 = vmax.f32 %v2338, 0.0
    %v2597 = vmax.f32 %v2340, 0.0
    %v2598 = vmax.f32 %v2444, 0.0
    %v2599 = vmax.f32 %v2446, 0.0
    %v2600 = vmax.f32 %v2550, 0.0
    %v2601 = vmax.f32 %v2552, 0.0
    %v2602 = vpack.c.bf16 %v2566, %v2554
    %v2603 = vpack.c.bf16 %v2567, %v2555
    %v2604 = vpack.c.bf16 %v2568, %v2556
    %v2605 = vpack.c.bf16 %v2569, %v2557
    %v2606 = vpack.c.bf16 %v2570, %v2558
    %v2607 = vpack.c.bf16 %v2571, %v2559
    %v2608 = vpack.c.bf16 %v2572, %v2560
    %v2609 = vpack.c.bf16 %v2573, %v2561
    %v2610 = vpack.c.bf16 %v2574, %v2562
    %v2611 = vpack.c.bf16 %v2575, %v2563
    %v2612 = vpack.c.bf16 %v2576, %v2564
    %v2613 = vpack.c.bf16 %v2577, %v2565
    %v2614 = vpack.c.bf16 %v2590, %v2578
    %v2615 = vpack.c.bf16 %v2591, %v2579
    %v2616 = vpack.c.bf16 %v2592, %v2580
    %v2617 = vpack.c.bf16 %v2593, %v2581
    %v2618 = vpack.c.bf16 %v2594, %v2582
    %v2619 = vpack.c.bf16 %v2595, %v2583
    %v2620 = vpack.c.bf16 %v2596, %v2584
    %v2621 = vpack.c.bf16 %v2597, %v2585
    %v2622 = vpack.c.bf16 %v2598, %v2586
    %v2623 = vpack.c.bf16 %v2599, %v2587
    %v2624 = vpack.c.bf16 %v2600, %v2588
    %v2625 = vpack.c.bf16 %v2601, %v2589
    %v2626 = vld [vmem:[#allocation8] sm:$0xff]
    %v2627 = vld [vmem:[#allocation8 + $0x8] sm:$0xf]
    %v2628 = vld [vmem:[#allocation8 + $0xc] sm:$0xff]
    %v2629 = vld [vmem:[#allocation8 + $0x14] sm:$0xf]
    %v2630 = vld [vmem:[#allocation8 + $0x18] sm:$0xff]
    %v2631 = vld [vmem:[#allocation8 + $0x20] sm:$0xf]
    %v2632 = vld [vmem:[#allocation8 + $0x24] sm:$0xff]
    %v2633 = vld [vmem:[#allocation8 + $0x2c] sm:$0xf]
    %v2634 = vld [vmem:[#allocation8 + $0x30] sm:$0xff]
    %v2635 = vld [vmem:[#allocation8 + $0x38] sm:$0xf]
    %v2636 = vld [vmem:[#allocation8 + $0x3c] sm:$0xff]
    %v2637 = vld [vmem:[#allocation8 + $0x44] sm:$0xf]
    %v2638 = vld [vmem:[#allocation8 + $0x48] sm:$0xff]
    %v2639 = vld [vmem:[#allocation8 + $0x50] sm:$0xf]
    %v2640 = vld [vmem:[#allocation8 + $0x54] sm:$0xff]
    %v2641 = vld [vmem:[#allocation8 + $0x5c] sm:$0xf]
    %v2642 = vld [vmem:[#allocation8 + $0x60] sm:$0xff]
    %v2643 = vld [vmem:[#allocation8 + $0x68] sm:$0xf]
    %v2644 = vld [vmem:[#allocation8 + $0x6c] sm:$0xff]
    %v2645 = vld [vmem:[#allocation8 + $0x74] sm:$0xf]
    %v2646 = vld [vmem:[#allocation8 + $0x78] sm:$0xff]
    %v2647 = vld [vmem:[#allocation8 + $0x80] sm:$0xf]
    %v2648 = vld [vmem:[#allocation8 + $0x84] sm:$0xff]
    %v2649 = vld [vmem:[#allocation8 + $0x8c] sm:$0xf]
    %v2650 = vld [vmem:[#allocation8 + $0x90] sm:$0xff]
    %v2651 = vld [vmem:[#allocation8 + $0x98] sm:$0xf]
    %v2652 = vld [vmem:[#allocation8 + $0x9c] sm:$0xff]
    %v2653 = vld [vmem:[#allocation8 + $0xa4] sm:$0xf]
    %v2654 = vld [vmem:[#allocation8 + $0xa8] sm:$0xff]
    %v2655 = vld [vmem:[#allocation8 + $0xb0] sm:$0xf]
    %v2656 = vld [vmem:[#allocation8 + $0xb4] sm:$0xff]
    %v2657 = vld [vmem:[#allocation8 + $0xbc] sm:$0xf]
    %v2658 = vld [vmem:[#allocation8 + $0xc0] sm:$0xff]
    %v2659 = vld [vmem:[#allocation8 + $0xc8] sm:$0xf]
    %v2660 = vld [vmem:[#allocation8 + $0xcc] sm:$0xff]
    %v2661 = vld [vmem:[#allocation8 + $0xd4] sm:$0xf]
    %v2662 = vld [vmem:[#allocation8 + $0xd8] sm:$0xff]
    %v2663 = vld [vmem:[#allocation8 + $0xe0] sm:$0xf]
    %v2664 = vld [vmem:[#allocation8 + $0xe4] sm:$0xff]
    %v2665 = vld [vmem:[#allocation8 + $0xec] sm:$0xf]
    %v2666 = vld [vmem:[#allocation8 + $0xf0] sm:$0xff]
    %v2667 = vld [vmem:[#allocation8 + $0xf8] sm:$0xf]
    %v2668 = vld [vmem:[#allocation8 + $0xfc] sm:$0xff]
    %v2669 = vld [vmem:[#allocation8 + $0x104] sm:$0xf]
    %v2670 = vld [vmem:[#allocation8 + $0x108] sm:$0xff]
    %v2671 = vld [vmem:[#allocation8 + $0x110] sm:$0xf]
    %v2672 = vld [vmem:[#allocation8 + $0x114] sm:$0xff]
    %v2673 = vld [vmem:[#allocation8 + $0x11c] sm:$0xf]
    %v2674 = vld [vmem:[#allocation8 + $0x120] sm:$0xff]
    %v2675 = vld [vmem:[#allocation8 + $0x128] sm:$0xf]
    %v2676 = vld [vmem:[#allocation8 + $0x12c] sm:$0xff]
    %v2677 = vld [vmem:[#allocation8 + $0x134] sm:$0xf]
    %v2678 = vld [vmem:[#allocation8 + $0x138] sm:$0xff]
    %v2679 = vld [vmem:[#allocation8 + $0x140] sm:$0xf]
    %v2680 = vld [vmem:[#allocation8 + $0x144] sm:$0xff]
    %v2681 = vld [vmem:[#allocation8 + $0x14c] sm:$0xf]
    %v2682 = vld [vmem:[#allocation8 + $0x150] sm:$0xff]
    %v2683 = vld [vmem:[#allocation8 + $0x158] sm:$0xf]
    %v2684 = vld [vmem:[#allocation8 + $0x15c] sm:$0xff]
    %v2685 = vld [vmem:[#allocation8 + $0x164] sm:$0xf]
    %v2686 = vld [vmem:[#allocation8 + $0x168] sm:$0xff]
    %v2687 = vld [vmem:[#allocation8 + $0x170] sm:$0xf]
    %v2688 = vld [vmem:[#allocation8 + $0x174] sm:$0xff]
    %v2689 = vld [vmem:[#allocation8 + $0x17c] sm:$0xf]
    %v2690 = vld [vmem:[#allocation8 + $0x180] sm:$0xff]
    %v2691 = vld [vmem:[#allocation8 + $0x188] sm:$0xf]
    %v2692 = vld [vmem:[#allocation8 + $0x18c] sm:$0xff]
    %v2693 = vld [vmem:[#allocation8 + $0x194] sm:$0xf]
    %v2694 = vld [vmem:[#allocation8 + $0x198] sm:$0xff]
    %v2695 = vld [vmem:[#allocation8 + $0x1a0] sm:$0xf]
    %v2696 = vld [vmem:[#allocation8 + $0x1a4] sm:$0xff]
    %v2697 = vld [vmem:[#allocation8 + $0x1ac] sm:$0xf]
    %v2698 = vld [vmem:[#allocation8 + $0x1b0] sm:$0xff]
    %v2699 = vld [vmem:[#allocation8 + $0x1b8] sm:$0xf]
    %v2700 = vld [vmem:[#allocation8 + $0x1bc] sm:$0xff]
    %v2701 = vld [vmem:[#allocation8 + $0x1c4] sm:$0xf]
    %v2702 = vld [vmem:[#allocation8 + $0x1c8] sm:$0xff]
    %v2703 = vld [vmem:[#allocation8 + $0x1d0] sm:$0xf]
    %v2704 = vld [vmem:[#allocation8 + $0x1d4] sm:$0xff]
    %v2705 = vld [vmem:[#allocation8 + $0x1dc] sm:$0xf]
    %v2706 = vld [vmem:[#allocation8 + $0x1e0] sm:$0xff]
    %v2707 = vld [vmem:[#allocation8 + $0x1e8] sm:$0xf]
    %v2708 = vld [vmem:[#allocation8 + $0x1ec] sm:$0xff]
    %v2709 = vld [vmem:[#allocation8 + $0x1f4] sm:$0xf]
    %v2710 = vld [vmem:[#allocation8 + $0x1f8] sm:$0xff]
    %v2711 = vld [vmem:[#allocation8 + $0x200] sm:$0xf]
    %v2712 = vld [vmem:[#allocation8 + $0x204] sm:$0xff]
    %v2713 = vld [vmem:[#allocation8 + $0x20c] sm:$0xf]
    %v2714 = vld [vmem:[#allocation8 + $0x210] sm:$0xff]
    %v2715 = vld [vmem:[#allocation8 + $0x218] sm:$0xf]
    %v2716 = vld [vmem:[#allocation8 + $0x21c] sm:$0xff]
    %v2717 = vld [vmem:[#allocation8 + $0x224] sm:$0xf]
    %v2718 = vld [vmem:[#allocation8 + $0x228] sm:$0xff]
    %v2719 = vld [vmem:[#allocation8 + $0x230] sm:$0xf]
    %v2720 = vld [vmem:[#allocation8 + $0x234] sm:$0xff]
    %v2721 = vld [vmem:[#allocation8 + $0x23c] sm:$0xf]
    %v2722 = vld [vmem:[#allocation8 + $0x240] sm:$0xff]
    %v2723 = vld [vmem:[#allocation8 + $0x248] sm:$0xf]
    %v2724 = vld [vmem:[#allocation8 + $0x24c] sm:$0xff]
    %v2725 = vld [vmem:[#allocation8 + $0x254] sm:$0xf]
    %v2726 = vld [vmem:[#allocation8 + $0x258] sm:$0xff]
    %v2727 = vld [vmem:[#allocation8 + $0x260] sm:$0xf]
    %v2728 = vld [vmem:[#allocation8 + $0x264] sm:$0xff]
    %v2729 = vld [vmem:[#allocation8 + $0x26c] sm:$0xf]
    %v2730 = vld [vmem:[#allocation8 + $0x270] sm:$0xff]
    %v2731 = vld [vmem:[#allocation8 + $0x278] sm:$0xf]
    %v2732 = vld [vmem:[#allocation8 + $0x27c] sm:$0xff]
    %v2733 = vld [vmem:[#allocation8 + $0x284] sm:$0xf]
    %v2734 = vld [vmem:[#allocation8 + $0x288] sm:$0xff]
    %v2735 = vld [vmem:[#allocation8 + $0x290] sm:$0xf]
    %v2736 = vld [vmem:[#allocation8 + $0x294] sm:$0xff]
    %v2737 = vld [vmem:[#allocation8 + $0x29c] sm:$0xf]
    %v2738 = vld [vmem:[#allocation8 + $0x2a0] sm:$0xff]
    %v2739 = vld [vmem:[#allocation8 + $0x2a8] sm:$0xf]
    %v2740 = vld [vmem:[#allocation8 + $0x2ac] sm:$0xff]
    %v2741 = vld [vmem:[#allocation8 + $0x2b4] sm:$0xf]
    %v2742 = vld [vmem:[#allocation8 + $0x2b8] sm:$0xff]
    %v2743 = vld [vmem:[#allocation8 + $0x2c0] sm:$0xf]
    %v2744 = vld [vmem:[#allocation8 + $0x2c4] sm:$0xff]
    %v2745 = vld [vmem:[#allocation8 + $0x2cc] sm:$0xf]
    %v2746 = vld [vmem:[#allocation8 + $0x2d0] sm:$0xff]
    %v2747 = vld [vmem:[#allocation8 + $0x2d8] sm:$0xf]
    %v2748 = vld [vmem:[#allocation8 + $0x2dc] sm:$0xff]
    %v2749 = vld [vmem:[#allocation8 + $0x2e4] sm:$0xf]
    %v2750 = vld [vmem:[#allocation8 + $0x2e8] sm:$0xff]
    %v2751 = vld [vmem:[#allocation8 + $0x2f0] sm:$0xf]
    %v2752 = vld [vmem:[#allocation8 + $0x2f4] sm:$0xff]
    %v2753 = vld [vmem:[#allocation8 + $0x2fc] sm:$0xf]
    %v2754 = vld [vmem:[#allocation8 + $0x300] sm:$0xff]
    %v2755 = vld [vmem:[#allocation8 + $0x308] sm:$0xf]
    %v2756 = vld [vmem:[#allocation8 + $0x30c] sm:$0xff]
    %v2757 = vld [vmem:[#allocation8 + $0x314] sm:$0xf]
    %v2758 = vld [vmem:[#allocation8 + $0x318] sm:$0xff]
    %v2759 = vld [vmem:[#allocation8 + $0x320] sm:$0xf]
    %v2760 = vld [vmem:[#allocation8 + $0x324] sm:$0xff]
    %v2761 = vld [vmem:[#allocation8 + $0x32c] sm:$0xf]
    %v2762 = vld [vmem:[#allocation8 + $0x330] sm:$0xff]
    %v2763 = vld [vmem:[#allocation8 + $0x338] sm:$0xf]
    %v2764 = vld [vmem:[#allocation8 + $0x33c] sm:$0xff]
    %v2765 = vld [vmem:[#allocation8 + $0x344] sm:$0xf]
    %v2766 = vld [vmem:[#allocation8 + $0x348] sm:$0xff]
    %v2767 = vld [vmem:[#allocation8 + $0x350] sm:$0xf]
    %v2768 = vld [vmem:[#allocation8 + $0x354] sm:$0xff]
    %v2769 = vld [vmem:[#allocation8 + $0x35c] sm:$0xf]
    %v2770 = vld [vmem:[#allocation8 + $0x360] sm:$0xff]
    %v2771 = vld [vmem:[#allocation8 + $0x368] sm:$0xf]
    %v2772 = vld [vmem:[#allocation8 + $0x36c] sm:$0xff]
    %v2773 = vld [vmem:[#allocation8 + $0x374] sm:$0xf]
    %v2774 = vld [vmem:[#allocation8 + $0x378] sm:$0xff]
    %v2775 = vld [vmem:[#allocation8 + $0x380] sm:$0xf]
    %v2776 = vld [vmem:[#allocation8 + $0x384] sm:$0xff]
    %v2777 = vld [vmem:[#allocation8 + $0x38c] sm:$0xf]
    %v2778 = vld [vmem:[#allocation8 + $0x390] sm:$0xff]
    %v2779 = vld [vmem:[#allocation8 + $0x398] sm:$0xf]
    %v2780 = vld [vmem:[#allocation8 + $0x39c] sm:$0xff]
    %v2781 = vld [vmem:[#allocation8 + $0x3a4] sm:$0xf]
    %v2782 = vld [vmem:[#allocation8 + $0x3a8] sm:$0xff]
    %v2783 = vld [vmem:[#allocation8 + $0x3b0] sm:$0xf]
    %v2784 = vld [vmem:[#allocation8 + $0x3b4] sm:$0xff]
    %v2785 = vld [vmem:[#allocation8 + $0x3bc] sm:$0xf]
    %v2786 = vld [vmem:[#allocation8 + $0x3c0] sm:$0xff]
    %v2787 = vld [vmem:[#allocation8 + $0x3c8] sm:$0xf]
    %v2788 = vld [vmem:[#allocation8 + $0x3cc] sm:$0xff]
    %v2789 = vld [vmem:[#allocation8 + $0x3d4] sm:$0xf]
    %v2790 = vld [vmem:[#allocation8 + $0x3d8] sm:$0xff]
    %v2791 = vld [vmem:[#allocation8 + $0x3e0] sm:$0xf]
    %v2792 = vld [vmem:[#allocation8 + $0x3e4] sm:$0xff]
    %v2793 = vld [vmem:[#allocation8 + $0x3ec] sm:$0xf]
    %v2794 = vld [vmem:[#allocation8 + $0x3f0] sm:$0xff]
    %v2795 = vld [vmem:[#allocation8 + $0x3f8] sm:$0xf]
    %v2796 = vld [vmem:[#allocation8 + $0x3fc] sm:$0xff]
    %v2797 = vld [vmem:[#allocation8 + $0x404] sm:$0xf]
    %v2798 = vld [vmem:[#allocation8 + $0x408] sm:$0xff]
    %v2799 = vld [vmem:[#allocation8 + $0x410] sm:$0xf]
    %v2800 = vld [vmem:[#allocation8 + $0x414] sm:$0xff]
    %v2801 = vld [vmem:[#allocation8 + $0x41c] sm:$0xf]
    %v2802 = vld [vmem:[#allocation8 + $0x420] sm:$0xff]
    %v2803 = vld [vmem:[#allocation8 + $0x428] sm:$0xf]
    %v2804 = vld [vmem:[#allocation8 + $0x42c] sm:$0xff]
    %v2805 = vld [vmem:[#allocation8 + $0x434] sm:$0xf]
    %v2806 = vld [vmem:[#allocation8 + $0x438] sm:$0xff]
    %v2807 = vld [vmem:[#allocation8 + $0x440] sm:$0xf]
    %v2808 = vld [vmem:[#allocation8 + $0x444] sm:$0xff]
    %v2809 = vld [vmem:[#allocation8 + $0x44c] sm:$0xf]
    %v2810 = vld [vmem:[#allocation8 + $0x450] sm:$0xff]
    %v2811 = vld [vmem:[#allocation8 + $0x458] sm:$0xf]
    %v2812 = vld [vmem:[#allocation8 + $0x45c] sm:$0xff]
    %v2813 = vld [vmem:[#allocation8 + $0x464] sm:$0xf]
    %v2814 = vld [vmem:[#allocation8 + $0x468] sm:$0xff]
    %v2815 = vld [vmem:[#allocation8 + $0x470] sm:$0xf]
    %v2816 = vld [vmem:[#allocation8 + $0x474] sm:$0xff]
    %v2817 = vld [vmem:[#allocation8 + $0x47c] sm:$0xf]
    %v2818 = vld [vmem:[#allocation8 + $0x480] sm:$0xff]
    %v2819 = vld [vmem:[#allocation8 + $0x488] sm:$0xf]
    %v2820 = vld [vmem:[#allocation8 + $0x48c] sm:$0xff]
    %v2821 = vld [vmem:[#allocation8 + $0x494] sm:$0xf]
    %v2822 = vld [vmem:[#allocation8 + $0x498] sm:$0xff]
    %v2823 = vld [vmem:[#allocation8 + $0x4a0] sm:$0xf]
    %v2824 = vld [vmem:[#allocation8 + $0x4a4] sm:$0xff]
    %v2825 = vld [vmem:[#allocation8 + $0x4ac] sm:$0xf]
    %v2826 = vld [vmem:[#allocation8 + $0x4b0] sm:$0xff]
    %v2827 = vld [vmem:[#allocation8 + $0x4b8] sm:$0xf]
    %v2828 = vld [vmem:[#allocation8 + $0x4bc] sm:$0xff]
    %v2829 = vld [vmem:[#allocation8 + $0x4c4] sm:$0xf]
    %v2830 = vld [vmem:[#allocation8 + $0x4c8] sm:$0xff]
    %v2831 = vld [vmem:[#allocation8 + $0x4d0] sm:$0xf]
    %v2832 = vld [vmem:[#allocation8 + $0x4d4] sm:$0xff]
    %v2833 = vld [vmem:[#allocation8 + $0x4dc] sm:$0xf]
    %v2834 = vld [vmem:[#allocation8 + $0x4e0] sm:$0xff]
    %v2835 = vld [vmem:[#allocation8 + $0x4e8] sm:$0xf]
    %v2836 = vld [vmem:[#allocation8 + $0x4ec] sm:$0xff]
    %v2837 = vld [vmem:[#allocation8 + $0x4f4] sm:$0xf]
    %v2838 = vld [vmem:[#allocation8 + $0x4f8] sm:$0xff]
    %v2839 = vld [vmem:[#allocation8 + $0x500] sm:$0xf]
    %v2840 = vld [vmem:[#allocation8 + $0x504] sm:$0xff]
    %v2841 = vld [vmem:[#allocation8 + $0x50c] sm:$0xf]
    %v2842 = vld [vmem:[#allocation8 + $0x510] sm:$0xff]
    %v2843 = vld [vmem:[#allocation8 + $0x518] sm:$0xf]
    %v2844 = vld [vmem:[#allocation8 + $0x51c] sm:$0xff]
    %v2845 = vld [vmem:[#allocation8 + $0x524] sm:$0xf]
    %v2846 = vld [vmem:[#allocation8 + $0x528] sm:$0xff]
    %v2847 = vld [vmem:[#allocation8 + $0x530] sm:$0xf]
    %v2848 = vld [vmem:[#allocation8 + $0x534] sm:$0xff]
    %v2849 = vld [vmem:[#allocation8 + $0x53c] sm:$0xf]
    %v2850 = vld [vmem:[#allocation8 + $0x540] sm:$0xff]
    %v2851 = vld [vmem:[#allocation8 + $0x548] sm:$0xf]
    %v2852 = vld [vmem:[#allocation8 + $0x54c] sm:$0xff]
    %v2853 = vld [vmem:[#allocation8 + $0x554] sm:$0xf]
    %v2854 = vld [vmem:[#allocation8 + $0x558] sm:$0xff]
    %v2855 = vld [vmem:[#allocation8 + $0x560] sm:$0xf]
    %v2856 = vld [vmem:[#allocation8 + $0x564] sm:$0xff]
    %v2857 = vld [vmem:[#allocation8 + $0x56c] sm:$0xf]
    %v2858 = vld [vmem:[#allocation8 + $0x570] sm:$0xff]
    %v2859 = vld [vmem:[#allocation8 + $0x578] sm:$0xf]
    %v2860 = vld [vmem:[#allocation8 + $0x57c] sm:$0xff]
    %v2861 = vld [vmem:[#allocation8 + $0x584] sm:$0xf]
    %v2862 = vld [vmem:[#allocation8 + $0x588] sm:$0xff]
    %v2863 = vld [vmem:[#allocation8 + $0x590] sm:$0xf]
    %v2864 = vld [vmem:[#allocation8 + $0x594] sm:$0xff]
    %v2865 = vld [vmem:[#allocation8 + $0x59c] sm:$0xf]
    %v2866 = vld [vmem:[#allocation8 + $0x5a0] sm:$0xff]
    %v2867 = vld [vmem:[#allocation8 + $0x5a8] sm:$0xf]
    %v2868 = vld [vmem:[#allocation8 + $0x5ac] sm:$0xff]
    %v2869 = vld [vmem:[#allocation8 + $0x5b4] sm:$0xf]
    %v2870 = vld [vmem:[#allocation8 + $0x5b8] sm:$0xff]
    %v2871 = vld [vmem:[#allocation8 + $0x5c0] sm:$0xf]
    %v2872 = vld [vmem:[#allocation8 + $0x5c4] sm:$0xff]
    %v2873 = vld [vmem:[#allocation8 + $0x5cc] sm:$0xf]
    %v2874 = vld [vmem:[#allocation8 + $0x5d0] sm:$0xff]
    %v2875 = vld [vmem:[#allocation8 + $0x5d8] sm:$0xf]
    %v2876 = vld [vmem:[#allocation8 + $0x5dc] sm:$0xff]
    %v2877 = vld [vmem:[#allocation8 + $0x5e4] sm:$0xf]
    %v2878 = vld [vmem:[#allocation8 + $0x5e8] sm:$0xff]
    %v2879 = vld [vmem:[#allocation8 + $0x5f0] sm:$0xf]
    %v2880 = vld [vmem:[#allocation8 + $0x5f4] sm:$0xff]
    %v2881 = vld [vmem:[#allocation8 + $0x5fc] sm:$0xf]
    %v2882 = vld [vmem:[#allocation8 + $0x600] sm:$0xff]
    %v2883 = vld [vmem:[#allocation8 + $0x608] sm:$0xf]
    %v2884 = vld [vmem:[#allocation8 + $0x60c] sm:$0xff]
    %v2885 = vld [vmem:[#allocation8 + $0x614] sm:$0xf]
    %v2886 = vld [vmem:[#allocation8 + $0x618] sm:$0xff]
    %v2887 = vld [vmem:[#allocation8 + $0x620] sm:$0xf]
    %v2888 = vld [vmem:[#allocation8 + $0x624] sm:$0xff]
    %v2889 = vld [vmem:[#allocation8 + $0x62c] sm:$0xf]
    %v2890 = vld [vmem:[#allocation8 + $0x630] sm:$0xff]
    %v2891 = vld [vmem:[#allocation8 + $0x638] sm:$0xf]
    %v2892 = vld [vmem:[#allocation8 + $0x63c] sm:$0xff]
    %v2893 = vld [vmem:[#allocation8 + $0x644] sm:$0xf]
    %v2894 = vld [vmem:[#allocation8 + $0x648] sm:$0xff]
    %v2895 = vld [vmem:[#allocation8 + $0x650] sm:$0xf]
    %v2896 = vld [vmem:[#allocation8 + $0x654] sm:$0xff]
    %v2897 = vld [vmem:[#allocation8 + $0x65c] sm:$0xf]
    %v2898 = vld [vmem:[#allocation8 + $0x660] sm:$0xff]
    %v2899 = vld [vmem:[#allocation8 + $0x668] sm:$0xf]
    %v2900 = vld [vmem:[#allocation8 + $0x66c] sm:$0xff]
    %v2901 = vld [vmem:[#allocation8 + $0x674] sm:$0xf]
    %v2902 = vld [vmem:[#allocation8 + $0x678] sm:$0xff]
    %v2903 = vld [vmem:[#allocation8 + $0x680] sm:$0xf]
    %v2904 = vld [vmem:[#allocation8 + $0x684] sm:$0xff]
    %v2905 = vld [vmem:[#allocation8 + $0x68c] sm:$0xf]
    %v2906 = vld [vmem:[#allocation8 + $0x690] sm:$0xff]
    %v2907 = vld [vmem:[#allocation8 + $0x698] sm:$0xf]
    %v2908 = vld [vmem:[#allocation8 + $0x69c] sm:$0xff]
    %v2909 = vld [vmem:[#allocation8 + $0x6a4] sm:$0xf]
    %v2910 = vld [vmem:[#allocation8 + $0x6a8] sm:$0xff]
    %v2911 = vld [vmem:[#allocation8 + $0x6b0] sm:$0xf]
    %v2912 = vld [vmem:[#allocation8 + $0x6b4] sm:$0xff]
    %v2913 = vld [vmem:[#allocation8 + $0x6bc] sm:$0xf]
    %v2914 = vld [vmem:[#allocation8 + $0x6c0] sm:$0xff]
    %v2915 = vld [vmem:[#allocation8 + $0x6c8] sm:$0xf]
    %v2916 = vld [vmem:[#allocation8 + $0x6cc] sm:$0xff]
    %v2917 = vld [vmem:[#allocation8 + $0x6d4] sm:$0xf]
    %v2918 = vld [vmem:[#allocation8 + $0x6d8] sm:$0xff]
    %v2919 = vld [vmem:[#allocation8 + $0x6e0] sm:$0xf]
    %v2920 = vld [vmem:[#allocation8 + $0x6e4] sm:$0xff]
    %v2921 = vld [vmem:[#allocation8 + $0x6ec] sm:$0xf]
    %v2922 = vld [vmem:[#allocation8 + $0x6f0] sm:$0xff]
    %v2923 = vld [vmem:[#allocation8 + $0x6f8] sm:$0xf]
    %v2924 = vld [vmem:[#allocation8 + $0x6fc] sm:$0xff]
    %v2925 = vld [vmem:[#allocation8 + $0x704] sm:$0xf]
    %v2926 = vld [vmem:[#allocation8 + $0x708] sm:$0xff]
    %v2927 = vld [vmem:[#allocation8 + $0x710] sm:$0xf]
    %v2928 = vld [vmem:[#allocation8 + $0x714] sm:$0xff]
    %v2929 = vld [vmem:[#allocation8 + $0x71c] sm:$0xf]
    %v2930 = vld [vmem:[#allocation8 + $0x720] sm:$0xff]
    %v2931 = vld [vmem:[#allocation8 + $0x728] sm:$0xf]
    %v2932 = vld [vmem:[#allocation8 + $0x72c] sm:$0xff]
    %v2933 = vld [vmem:[#allocation8 + $0x734] sm:$0xf]
    %v2934 = vld [vmem:[#allocation8 + $0x738] sm:$0xff]
    %v2935 = vld [vmem:[#allocation8 + $0x740] sm:$0xf]
    %v2936 = vld [vmem:[#allocation8 + $0x744] sm:$0xff]
    %v2937 = vld [vmem:[#allocation8 + $0x74c] sm:$0xf]
    %v2938 = vld [vmem:[#allocation8 + $0x750] sm:$0xff]
    %v2939 = vld [vmem:[#allocation8 + $0x758] sm:$0xf]
    %v2940 = vld [vmem:[#allocation8 + $0x75c] sm:$0xff]
    %v2941 = vld [vmem:[#allocation8 + $0x764] sm:$0xf]
    %v2942 = vld [vmem:[#allocation8 + $0x768] sm:$0xff]
    %v2943 = vld [vmem:[#allocation8 + $0x770] sm:$0xf]
    %v2944 = vld [vmem:[#allocation8 + $0x774] sm:$0xff]
    %v2945 = vld [vmem:[#allocation8 + $0x77c] sm:$0xf]
    %v2946 = vld [vmem:[#allocation8 + $0x780] sm:$0xff]
    %v2947 = vld [vmem:[#allocation8 + $0x788] sm:$0xf]
    %v2948 = vld [vmem:[#allocation8 + $0x78c] sm:$0xff]
    %v2949 = vld [vmem:[#allocation8 + $0x794] sm:$0xf]
    %v2950 = vld [vmem:[#allocation8 + $0x798] sm:$0xff]
    %v2951 = vld [vmem:[#allocation8 + $0x7a0] sm:$0xf]
    %v2952 = vld [vmem:[#allocation8 + $0x7a4] sm:$0xff]
    %v2953 = vld [vmem:[#allocation8 + $0x7ac] sm:$0xf]
    %v2954 = vld [vmem:[#allocation8 + $0x7b0] sm:$0xff]
    %v2955 = vld [vmem:[#allocation8 + $0x7b8] sm:$0xf]
    %v2956 = vld [vmem:[#allocation8 + $0x7bc] sm:$0xff]
    %v2957 = vld [vmem:[#allocation8 + $0x7c4] sm:$0xf]
    %v2958 = vld [vmem:[#allocation8 + $0x7c8] sm:$0xff]
    %v2959 = vld [vmem:[#allocation8 + $0x7d0] sm:$0xf]
    %v2960 = vld [vmem:[#allocation8 + $0x7d4] sm:$0xff]
    %v2961 = vld [vmem:[#allocation8 + $0x7dc] sm:$0xf]
    %v2962 = vld [vmem:[#allocation8 + $0x7e0] sm:$0xff]
    %v2963 = vld [vmem:[#allocation8 + $0x7e8] sm:$0xf]
    %v2964 = vld [vmem:[#allocation8 + $0x7ec] sm:$0xff]
    %v2965 = vld [vmem:[#allocation8 + $0x7f4] sm:$0xf]
    %v2966 = vld [vmem:[#allocation8 + $0x7f8] sm:$0xff]
    %v2967 = vld [vmem:[#allocation8 + $0x800] sm:$0xf]
    %v2968 = vld [vmem:[#allocation8 + $0x804] sm:$0xff]
    %v2969 = vld [vmem:[#allocation8 + $0x80c] sm:$0xf]
    %v2970 = vld [vmem:[#allocation8 + $0x810] sm:$0xff]
    %v2971 = vld [vmem:[#allocation8 + $0x818] sm:$0xf]
    %v2972 = vld [vmem:[#allocation8 + $0x81c] sm:$0xff]
    %v2973 = vld [vmem:[#allocation8 + $0x824] sm:$0xf]
    %v2974 = vld [vmem:[#allocation8 + $0x828] sm:$0xff]
    %v2975 = vld [vmem:[#allocation8 + $0x830] sm:$0xf]
    %v2976 = vld [vmem:[#allocation8 + $0x834] sm:$0xff]
    %v2977 = vld [vmem:[#allocation8 + $0x83c] sm:$0xf]
    %v2978 = vld [vmem:[#allocation8 + $0x840] sm:$0xff]
    %v2979 = vld [vmem:[#allocation8 + $0x848] sm:$0xf]
    %v2980 = vld [vmem:[#allocation8 + $0x84c] sm:$0xff]
    %v2981 = vld [vmem:[#allocation8 + $0x854] sm:$0xf]
    %v2982 = vld [vmem:[#allocation8 + $0x858] sm:$0xff]
    %v2983 = vld [vmem:[#allocation8 + $0x860] sm:$0xf]
    %v2984 = vld [vmem:[#allocation8 + $0x864] sm:$0xff]
    %v2985 = vld [vmem:[#allocation8 + $0x86c] sm:$0xf]
    %v2986 = vld [vmem:[#allocation8 + $0x870] sm:$0xff]
    %v2987 = vld [vmem:[#allocation8 + $0x878] sm:$0xf]
    %v2988 = vld [vmem:[#allocation8 + $0x87c] sm:$0xff]
    %v2989 = vld [vmem:[#allocation8 + $0x884] sm:$0xf]
    %v2990 = vld [vmem:[#allocation8 + $0x888] sm:$0xff]
    %v2991 = vld [vmem:[#allocation8 + $0x890] sm:$0xf]
    %v2992 = vld [vmem:[#allocation8 + $0x894] sm:$0xff]
    %v2993 = vld [vmem:[#allocation8 + $0x89c] sm:$0xf]
    %v2994 = vld [vmem:[#allocation8 + $0x8a0] sm:$0xff]
    %v2995 = vld [vmem:[#allocation8 + $0x8a8] sm:$0xf]
    %v2996 = vld [vmem:[#allocation8 + $0x8ac] sm:$0xff]
    %v2997 = vld [vmem:[#allocation8 + $0x8b4] sm:$0xf]
    %v2998 = vld [vmem:[#allocation8 + $0x8b8] sm:$0xff]
    %v2999 = vld [vmem:[#allocation8 + $0x8c0] sm:$0xf]
    %v3000 = vld [vmem:[#allocation8 + $0x8c4] sm:$0xff]
    %v3001 = vld [vmem:[#allocation8 + $0x8cc] sm:$0xf]
    %v3002 = vld [vmem:[#allocation8 + $0x8d0] sm:$0xff]
    %v3003 = vld [vmem:[#allocation8 + $0x8d8] sm:$0xf]
    %v3004 = vld [vmem:[#allocation8 + $0x8dc] sm:$0xff]
    %v3005 = vld [vmem:[#allocation8 + $0x8e4] sm:$0xf]
    %v3006 = vld [vmem:[#allocation8 + $0x8e8] sm:$0xff]
    %v3007 = vld [vmem:[#allocation8 + $0x8f0] sm:$0xf]
    %v3008 = vld [vmem:[#allocation8 + $0x8f4] sm:$0xff]
    %v3009 = vld [vmem:[#allocation8 + $0x8fc] sm:$0xf]
    %v3010 = vld [vmem:[#allocation10] sm:$0x7]
    %v3012 = vlaneseq
    %v3013 = vshrl.u32 %v3012, 7
    %v3014 = vsub.s32 0, %v3013
    %v3015 = vrot.slane %v3010, %v3014
    %v3016 = vlaneseq
    %v3017 = vshrl.u32 %v3016, 7
    %v3018 = vsub.s32 1, %v3017
    %v3019 = vrot.slane %v3010, %v3018
    %v3020 = vlaneseq
    %v3021 = vshrl.u32 %v3020, 7
    %v3022 = vsub.s32 2, %v3021
    %v3023 = vrot.slane %v3010, %v3022
    %v3411 = vunpack.c.l.b16 %v2626
    %v3412 = vunpack.c.h.b16 %v2626
    %v3413 = vunpack.c.l.b16 %v2627
    %v3414 = vunpack.c.l.b16 %v2628
    %v3415 = vunpack.c.h.b16 %v2628
    %v3416 = vunpack.c.l.b16 %v2629
    %v3417 = vunpack.c.l.b16 %v2630
    %v3418 = vunpack.c.h.b16 %v2630
    %v3419 = vunpack.c.l.b16 %v2631
    %v3420 = vunpack.c.l.b16 %v2632
    %v3421 = vunpack.c.h.b16 %v2632
    %v3422 = vunpack.c.l.b16 %v2633
    %v3423 = vunpack.c.l.b16 %v2634
    %v3424 = vunpack.c.h.b16 %v2634
    %v3425 = vunpack.c.l.b16 %v2635
    %v3426 = vunpack.c.l.b16 %v2636
    %v3427 = vunpack.c.h.b16 %v2636
    %v3428 = vunpack.c.l.b16 %v2637
    %v3429 = vunpack.c.l.b16 %v2638
    %v3430 = vunpack.c.h.b16 %v2638
    %v3431 = vunpack.c.l.b16 %v2639
    %v3432 = vunpack.c.l.b16 %v2640
    %v3433 = vunpack.c.h.b16 %v2640
    %v3434 = vunpack.c.l.b16 %v2641
    %v3435 = vunpack.c.l.b16 %v2642
    %v3436 = vunpack.c.h.b16 %v2642
    %v3437 = vunpack.c.l.b16 %v2643
    %v3438 = vunpack.c.l.b16 %v2644
    %v3439 = vunpack.c.h.b16 %v2644
    %v3440 = vunpack.c.l.b16 %v2645
    %v3441 = vunpack.c.l.b16 %v2646
    %v3442 = vunpack.c.h.b16 %v2646
    %v3443 = vunpack.c.l.b16 %v2647
    %v3444 = vunpack.c.l.b16 %v2648
    %v3445 = vunpack.c.h.b16 %v2648
    %v3446 = vunpack.c.l.b16 %v2649
    %v3447 = vunpack.c.l.b16 %v2650
    %v3448 = vunpack.c.h.b16 %v2650
    %v3449 = vunpack.c.l.b16 %v2651
    %v3450 = vunpack.c.l.b16 %v2652
    %v3451 = vunpack.c.h.b16 %v2652
    %v3452 = vunpack.c.l.b16 %v2653
    %v3453 = vunpack.c.l.b16 %v2654
    %v3454 = vunpack.c.h.b16 %v2654
    %v3455 = vunpack.c.l.b16 %v2655
    %v3456 = vunpack.c.l.b16 %v2656
    %v3457 = vunpack.c.h.b16 %v2656
    %v3458 = vunpack.c.l.b16 %v2657
    %v3459 = vunpack.c.l.b16 %v2658
    %v3460 = vunpack.c.h.b16 %v2658
    %v3461 = vunpack.c.l.b16 %v2659
    %v3462 = vunpack.c.l.b16 %v2660
    %v3463 = vunpack.c.h.b16 %v2660
    %v3464 = vunpack.c.l.b16 %v2661
    %v3465 = vunpack.c.l.b16 %v2662
    %v3466 = vunpack.c.h.b16 %v2662
    %v3467 = vunpack.c.l.b16 %v2663
    %v3468 = vunpack.c.l.b16 %v2664
    %v3469 = vunpack.c.h.b16 %v2664
    %v3470 = vunpack.c.l.b16 %v2665
    %v3471 = vunpack.c.l.b16 %v2666
    %v3472 = vunpack.c.h.b16 %v2666
    %v3473 = vunpack.c.l.b16 %v2667
    %v3474 = vunpack.c.l.b16 %v2668
    %v3475 = vunpack.c.h.b16 %v2668
    %v3476 = vunpack.c.l.b16 %v2669
    %v3477 = vunpack.c.l.b16 %v2670
    %v3478 = vunpack.c.h.b16 %v2670
    %v3479 = vunpack.c.l.b16 %v2671
    %v3480 = vunpack.c.l.b16 %v2672
    %v3481 = vunpack.c.h.b16 %v2672
    %v3482 = vunpack.c.l.b16 %v2673
    %v3483 = vunpack.c.l.b16 %v2674
    %v3484 = vunpack.c.h.b16 %v2674
    %v3485 = vunpack.c.l.b16 %v2675
    %v3486 = vunpack.c.l.b16 %v2676
    %v3487 = vunpack.c.h.b16 %v2676
    %v3488 = vunpack.c.l.b16 %v2677
    %v3489 = vunpack.c.l.b16 %v2678
    %v3490 = vunpack.c.h.b16 %v2678
    %v3491 = vunpack.c.l.b16 %v2679
    %v3492 = vunpack.c.l.b16 %v2680
    %v3493 = vunpack.c.h.b16 %v2680
    %v3494 = vunpack.c.l.b16 %v2681
    %v3495 = vunpack.c.l.b16 %v2682
    %v3496 = vunpack.c.h.b16 %v2682
    %v3497 = vunpack.c.l.b16 %v2683
    %v3498 = vunpack.c.l.b16 %v2684
    %v3499 = vunpack.c.h.b16 %v2684
    %v3500 = vunpack.c.l.b16 %v2685
    %v3501 = vunpack.c.l.b16 %v2686
    %v3502 = vunpack.c.h.b16 %v2686
    %v3503 = vunpack.c.l.b16 %v2687
    %v3504 = vunpack.c.l.b16 %v2688
    %v3505 = vunpack.c.h.b16 %v2688
    %v3506 = vunpack.c.l.b16 %v2689
    %v3507 = vunpack.c.l.b16 %v2690
    %v3508 = vunpack.c.h.b16 %v2690
    %v3509 = vunpack.c.l.b16 %v2691
    %v3510 = vunpack.c.l.b16 %v2692
    %v3511 = vunpack.c.h.b16 %v2692
    %v3512 = vunpack.c.l.b16 %v2693
    %v3513 = vunpack.c.l.b16 %v2694
    %v3514 = vunpack.c.h.b16 %v2694
    %v3515 = vunpack.c.l.b16 %v2695
    %v3516 = vunpack.c.l.b16 %v2696
    %v3517 = vunpack.c.h.b16 %v2696
    %v3518 = vunpack.c.l.b16 %v2697
    %v3519 = vunpack.c.l.b16 %v2698
    %v3520 = vunpack.c.h.b16 %v2698
    %v3521 = vunpack.c.l.b16 %v2699
    %v3522 = vunpack.c.l.b16 %v2700
    %v3523 = vunpack.c.h.b16 %v2700
    %v3524 = vunpack.c.l.b16 %v2701
    %v3525 = vunpack.c.l.b16 %v2702
    %v3526 = vunpack.c.h.b16 %v2702
    %v3527 = vunpack.c.l.b16 %v2703
    %v3528 = vunpack.c.l.b16 %v2704
    %v3529 = vunpack.c.h.b16 %v2704
    %v3530 = vunpack.c.l.b16 %v2705
    %v3531 = vunpack.c.l.b16 %v2706
    %v3532 = vunpack.c.h.b16 %v2706
    %v3533 = vunpack.c.l.b16 %v2707
    %v3534 = vunpack.c.l.b16 %v2708
    %v3535 = vunpack.c.h.b16 %v2708
    %v3536 = vunpack.c.l.b16 %v2709
    %v3537 = vunpack.c.l.b16 %v2710
    %v3538 = vunpack.c.h.b16 %v2710
    %v3539 = vunpack.c.l.b16 %v2711
    %v3540 = vunpack.c.l.b16 %v2712
    %v3541 = vunpack.c.h.b16 %v2712
    %v3542 = vunpack.c.l.b16 %v2713
    %v3543 = vunpack.c.l.b16 %v2714
    %v3544 = vunpack.c.h.b16 %v2714
    %v3545 = vunpack.c.l.b16 %v2715
    %v3546 = vunpack.c.l.b16 %v2716
    %v3547 = vunpack.c.h.b16 %v2716
    %v3548 = vunpack.c.l.b16 %v2717
    %v3549 = vunpack.c.l.b16 %v2718
    %v3550 = vunpack.c.h.b16 %v2718
    %v3551 = vunpack.c.l.b16 %v2719
    %v3552 = vunpack.c.l.b16 %v2720
    %v3553 = vunpack.c.h.b16 %v2720
    %v3554 = vunpack.c.l.b16 %v2721
    %v3555 = vunpack.c.l.b16 %v2722
    %v3556 = vunpack.c.h.b16 %v2722
    %v3557 = vunpack.c.l.b16 %v2723
    %v3558 = vunpack.c.l.b16 %v2724
    %v3559 = vunpack.c.h.b16 %v2724
    %v3560 = vunpack.c.l.b16 %v2725
    %v3561 = vunpack.c.l.b16 %v2726
    %v3562 = vunpack.c.h.b16 %v2726
    %v3563 = vunpack.c.l.b16 %v2727
    %v3564 = vunpack.c.l.b16 %v2728
    %v3565 = vunpack.c.h.b16 %v2728
    %v3566 = vunpack.c.l.b16 %v2729
    %v3567 = vunpack.c.l.b16 %v2730
    %v3568 = vunpack.c.h.b16 %v2730
    %v3569 = vunpack.c.l.b16 %v2731
    %v3570 = vunpack.c.l.b16 %v2732
    %v3571 = vunpack.c.h.b16 %v2732
    %v3572 = vunpack.c.l.b16 %v2733
    %v3573 = vunpack.c.l.b16 %v2734
    %v3574 = vunpack.c.h.b16 %v2734
    %v3575 = vunpack.c.l.b16 %v2735
    %v3576 = vunpack.c.l.b16 %v2736
    %v3577 = vunpack.c.h.b16 %v2736
    %v3578 = vunpack.c.l.b16 %v2737
    %v3579 = vunpack.c.l.b16 %v2738
    %v3580 = vunpack.c.h.b16 %v2738
    %v3581 = vunpack.c.l.b16 %v2739
    %v3582 = vunpack.c.l.b16 %v2740
    %v3583 = vunpack.c.h.b16 %v2740
    %v3584 = vunpack.c.l.b16 %v2741
    %v3585 = vunpack.c.l.b16 %v2742
    %v3586 = vunpack.c.h.b16 %v2742
    %v3587 = vunpack.c.l.b16 %v2743
    %v3588 = vunpack.c.l.b16 %v2744
    %v3589 = vunpack.c.h.b16 %v2744
    %v3590 = vunpack.c.l.b16 %v2745
    %v3591 = vunpack.c.l.b16 %v2746
    %v3592 = vunpack.c.h.b16 %v2746
    %v3593 = vunpack.c.l.b16 %v2747
    %v3594 = vunpack.c.l.b16 %v2748
    %v3595 = vunpack.c.h.b16 %v2748
    %v3596 = vunpack.c.l.b16 %v2749
    %v3597 = vunpack.c.l.b16 %v2750
    %v3598 = vunpack.c.h.b16 %v2750
    %v3599 = vunpack.c.l.b16 %v2751
    %v3600 = vunpack.c.l.b16 %v2752
    %v3601 = vunpack.c.h.b16 %v2752
    %v3602 = vunpack.c.l.b16 %v2753
    %v3603 = vunpack.c.l.b16 %v2754
    %v3604 = vunpack.c.h.b16 %v2754
    %v3605 = vunpack.c.l.b16 %v2755
    %v3606 = vunpack.c.l.b16 %v2756
    %v3607 = vunpack.c.h.b16 %v2756
    %v3608 = vunpack.c.l.b16 %v2757
    %v3609 = vunpack.c.l.b16 %v2758
    %v3610 = vunpack.c.h.b16 %v2758
    %v3611 = vunpack.c.l.b16 %v2759
    %v3612 = vunpack.c.l.b16 %v2760
    %v3613 = vunpack.c.h.b16 %v2760
    %v3614 = vunpack.c.l.b16 %v2761
    %v3615 = vunpack.c.l.b16 %v2762
    %v3616 = vunpack.c.h.b16 %v2762
    %v3617 = vunpack.c.l.b16 %v2763
    %v3618 = vunpack.c.l.b16 %v2764
    %v3619 = vunpack.c.h.b16 %v2764
    %v3620 = vunpack.c.l.b16 %v2765
    %v3621 = vunpack.c.l.b16 %v2766
    %v3622 = vunpack.c.h.b16 %v2766
    %v3623 = vunpack.c.l.b16 %v2767
    %v3624 = vunpack.c.l.b16 %v2768
    %v3625 = vunpack.c.h.b16 %v2768
    %v3626 = vunpack.c.l.b16 %v2769
    %v3627 = vunpack.c.l.b16 %v2770
    %v3628 = vunpack.c.h.b16 %v2770
    %v3629 = vunpack.c.l.b16 %v2771
    %v3630 = vunpack.c.l.b16 %v2772
    %v3631 = vunpack.c.h.b16 %v2772
    %v3632 = vunpack.c.l.b16 %v2773
    %v3633 = vunpack.c.l.b16 %v2774
    %v3634 = vunpack.c.h.b16 %v2774
    %v3635 = vunpack.c.l.b16 %v2775
    %v3636 = vunpack.c.l.b16 %v2776
    %v3637 = vunpack.c.h.b16 %v2776
    %v3638 = vunpack.c.l.b16 %v2777
    %v3639 = vunpack.c.l.b16 %v2778
    %v3640 = vunpack.c.h.b16 %v2778
    %v3641 = vunpack.c.l.b16 %v2779
    %v3642 = vunpack.c.l.b16 %v2780
    %v3643 = vunpack.c.h.b16 %v2780
    %v3644 = vunpack.c.l.b16 %v2781
    %v3645 = vunpack.c.l.b16 %v2782
    %v3646 = vunpack.c.h.b16 %v2782
    %v3647 = vunpack.c.l.b16 %v2783
    %v3648 = vunpack.c.l.b16 %v2784
    %v3649 = vunpack.c.h.b16 %v2784
    %v3650 = vunpack.c.l.b16 %v2785
    %v3651 = vunpack.c.l.b16 %v2786
    %v3652 = vunpack.c.h.b16 %v2786
    %v3653 = vunpack.c.l.b16 %v2787
    %v3654 = vunpack.c.l.b16 %v2788
    %v3655 = vunpack.c.h.b16 %v2788
    %v3656 = vunpack.c.l.b16 %v2789
    %v3657 = vunpack.c.l.b16 %v2790
    %v3658 = vunpack.c.h.b16 %v2790
    %v3659 = vunpack.c.l.b16 %v2791
    %v3660 = vunpack.c.l.b16 %v2792
    %v3661 = vunpack.c.h.b16 %v2792
    %v3662 = vunpack.c.l.b16 %v2793
    %v3663 = vunpack.c.l.b16 %v2794
    %v3664 = vunpack.c.h.b16 %v2794
    %v3665 = vunpack.c.l.b16 %v2795
    %v3666 = vunpack.c.l.b16 %v2796
    %v3667 = vunpack.c.h.b16 %v2796
    %v3668 = vunpack.c.l.b16 %v2797
    %v3669 = vunpack.c.l.b16 %v2798
    %v3670 = vunpack.c.h.b16 %v2798
    %v3671 = vunpack.c.l.b16 %v2799
    %v3672 = vunpack.c.l.b16 %v2800
    %v3673 = vunpack.c.h.b16 %v2800
    %v3674 = vunpack.c.l.b16 %v2801
    %v3675 = vunpack.c.l.b16 %v2802
    %v3676 = vunpack.c.h.b16 %v2802
    %v3677 = vunpack.c.l.b16 %v2803
    %v3678 = vunpack.c.l.b16 %v2804
    %v3679 = vunpack.c.h.b16 %v2804
    %v3680 = vunpack.c.l.b16 %v2805
    %v3681 = vunpack.c.l.b16 %v2806
    %v3682 = vunpack.c.h.b16 %v2806
    %v3683 = vunpack.c.l.b16 %v2807
    %v3684 = vunpack.c.l.b16 %v2808
    %v3685 = vunpack.c.h.b16 %v2808
    %v3686 = vunpack.c.l.b16 %v2809
    %v3687 = vunpack.c.l.b16 %v2810
    %v3688 = vunpack.c.h.b16 %v2810
    %v3689 = vunpack.c.l.b16 %v2811
    %v3690 = vunpack.c.l.b16 %v2812
    %v3691 = vunpack.c.h.b16 %v2812
    %v3692 = vunpack.c.l.b16 %v2813
    %v3693 = vunpack.c.l.b16 %v2814
    %v3694 = vunpack.c.h.b16 %v2814
    %v3695 = vunpack.c.l.b16 %v2815
    %v3696 = vunpack.c.l.b16 %v2816
    %v3697 = vunpack.c.h.b16 %v2816
    %v3698 = vunpack.c.l.b16 %v2817
    %v3699 = vunpack.c.l.b16 %v2818
    %v3700 = vunpack.c.h.b16 %v2818
    %v3701 = vunpack.c.l.b16 %v2819
    %v3702 = vunpack.c.l.b16 %v2820
    %v3703 = vunpack.c.h.b16 %v2820
    %v3704 = vunpack.c.l.b16 %v2821
    %v3705 = vunpack.c.l.b16 %v2822
    %v3706 = vunpack.c.h.b16 %v2822
    %v3707 = vunpack.c.l.b16 %v2823
    %v3708 = vunpack.c.l.b16 %v2824
    %v3709 = vunpack.c.h.b16 %v2824
    %v3710 = vunpack.c.l.b16 %v2825
    %v3711 = vunpack.c.l.b16 %v2826
    %v3712 = vunpack.c.h.b16 %v2826
    %v3713 = vunpack.c.l.b16 %v2827
    %v3714 = vunpack.c.l.b16 %v2828
    %v3715 = vunpack.c.h.b16 %v2828
    %v3716 = vunpack.c.l.b16 %v2829
    %v3717 = vunpack.c.l.b16 %v2830
    %v3718 = vunpack.c.h.b16 %v2830
    %v3719 = vunpack.c.l.b16 %v2831
    %v3720 = vunpack.c.l.b16 %v2832
    %v3721 = vunpack.c.h.b16 %v2832
    %v3722 = vunpack.c.l.b16 %v2833
    %v3723 = vunpack.c.l.b16 %v2834
    %v3724 = vunpack.c.h.b16 %v2834
    %v3725 = vunpack.c.l.b16 %v2835
    %v3726 = vunpack.c.l.b16 %v2836
    %v3727 = vunpack.c.h.b16 %v2836
    %v3728 = vunpack.c.l.b16 %v2837
    %v3729 = vunpack.c.l.b16 %v2838
    %v3730 = vunpack.c.h.b16 %v2838
    %v3731 = vunpack.c.l.b16 %v2839
    %v3732 = vunpack.c.l.b16 %v2840
    %v3733 = vunpack.c.h.b16 %v2840
    %v3734 = vunpack.c.l.b16 %v2841
    %v3735 = vunpack.c.l.b16 %v2842
    %v3736 = vunpack.c.h.b16 %v2842
    %v3737 = vunpack.c.l.b16 %v2843
    %v3738 = vunpack.c.l.b16 %v2844
    %v3739 = vunpack.c.h.b16 %v2844
    %v3740 = vunpack.c.l.b16 %v2845
    %v3741 = vunpack.c.l.b16 %v2846
    %v3742 = vunpack.c.h.b16 %v2846
    %v3743 = vunpack.c.l.b16 %v2847
    %v3744 = vunpack.c.l.b16 %v2848
    %v3745 = vunpack.c.h.b16 %v2848
    %v3746 = vunpack.c.l.b16 %v2849
    %v3747 = vunpack.c.l.b16 %v2850
    %v3748 = vunpack.c.h.b16 %v2850
    %v3749 = vunpack.c.l.b16 %v2851
    %v3750 = vunpack.c.l.b16 %v2852
    %v3751 = vunpack.c.h.b16 %v2852
    %v3752 = vunpack.c.l.b16 %v2853
    %v3753 = vunpack.c.l.b16 %v2854
    %v3754 = vunpack.c.h.b16 %v2854
    %v3755 = vunpack.c.l.b16 %v2855
    %v3756 = vunpack.c.l.b16 %v2856
    %v3757 = vunpack.c.h.b16 %v2856
    %v3758 = vunpack.c.l.b16 %v2857
    %v3759 = vunpack.c.l.b16 %v2858
    %v3760 = vunpack.c.h.b16 %v2858
    %v3761 = vunpack.c.l.b16 %v2859
    %v3762 = vunpack.c.l.b16 %v2860
    %v3763 = vunpack.c.h.b16 %v2860
    %v3764 = vunpack.c.l.b16 %v2861
    %v3765 = vunpack.c.l.b16 %v2862
    %v3766 = vunpack.c.h.b16 %v2862
    %v3767 = vunpack.c.l.b16 %v2863
    %v3768 = vunpack.c.l.b16 %v2864
    %v3769 = vunpack.c.h.b16 %v2864
    %v3770 = vunpack.c.l.b16 %v2865
    %v3771 = vunpack.c.l.b16 %v2866
    %v3772 = vunpack.c.h.b16 %v2866
    %v3773 = vunpack.c.l.b16 %v2867
    %v3774 = vunpack.c.l.b16 %v2868
    %v3775 = vunpack.c.h.b16 %v2868
    %v3776 = vunpack.c.l.b16 %v2869
    %v3777 = vunpack.c.l.b16 %v2870
    %v3778 = vunpack.c.h.b16 %v2870
    %v3779 = vunpack.c.l.b16 %v2871
    %v3780 = vunpack.c.l.b16 %v2872
    %v3781 = vunpack.c.h.b16 %v2872
    %v3782 = vunpack.c.l.b16 %v2873
    %v3783 = vunpack.c.l.b16 %v2874
    %v3784 = vunpack.c.h.b16 %v2874
    %v3785 = vunpack.c.l.b16 %v2875
    %v3786 = vunpack.c.l.b16 %v2876
    %v3787 = vunpack.c.h.b16 %v2876
    %v3788 = vunpack.c.l.b16 %v2877
    %v3789 = vunpack.c.l.b16 %v2878
    %v3790 = vunpack.c.h.b16 %v2878
    %v3791 = vunpack.c.l.b16 %v2879
    %v3792 = vunpack.c.l.b16 %v2880
    %v3793 = vunpack.c.h.b16 %v2880
    %v3794 = vunpack.c.l.b16 %v2881
    %v3795 = vunpack.c.l.b16 %v2882
    %v3796 = vunpack.c.h.b16 %v2882
    %v3797 = vunpack.c.l.b16 %v2883
    %v3798 = vunpack.c.l.b16 %v2884
    %v3799 = vunpack.c.h.b16 %v2884
    %v3800 = vunpack.c.l.b16 %v2885
    %v3801 = vunpack.c.l.b16 %v2886
    %v3802 = vunpack.c.h.b16 %v2886
    %v3803 = vunpack.c.l.b16 %v2887
    %v3804 = vunpack.c.l.b16 %v2888
    %v3805 = vunpack.c.h.b16 %v2888
    %v3806 = vunpack.c.l.b16 %v2889
    %v3807 = vunpack.c.l.b16 %v2890
    %v3808 = vunpack.c.h.b16 %v2890
    %v3809 = vunpack.c.l.b16 %v2891
    %v3810 = vunpack.c.l.b16 %v2892
    %v3811 = vunpack.c.h.b16 %v2892
    %v3812 = vunpack.c.l.b16 %v2893
    %v3813 = vunpack.c.l.b16 %v2894
    %v3814 = vunpack.c.h.b16 %v2894
    %v3815 = vunpack.c.l.b16 %v2895
    %v3816 = vunpack.c.l.b16 %v2896
    %v3817 = vunpack.c.h.b16 %v2896
    %v3818 = vunpack.c.l.b16 %v2897
    %v3819 = vunpack.c.l.b16 %v2898
    %v3820 = vunpack.c.h.b16 %v2898
    %v3821 = vunpack.c.l.b16 %v2899
    %v3822 = vunpack.c.l.b16 %v2900
    %v3823 = vunpack.c.h.b16 %v2900
    %v3824 = vunpack.c.l.b16 %v2901
    %v3825 = vunpack.c.l.b16 %v2902
    %v3826 = vunpack.c.h.b16 %v2902
    %v3827 = vunpack.c.l.b16 %v2903
    %v3828 = vunpack.c.l.b16 %v2904
    %v3829 = vunpack.c.h.b16 %v2904
    %v3830 = vunpack.c.l.b16 %v2905
    %v3831 = vunpack.c.l.b16 %v2906
    %v3832 = vunpack.c.h.b16 %v2906
    %v3833 = vunpack.c.l.b16 %v2907
    %v3834 = vunpack.c.l.b16 %v2908
    %v3835 = vunpack.c.h.b16 %v2908
    %v3836 = vunpack.c.l.b16 %v2909
    %v3837 = vunpack.c.l.b16 %v2910
    %v3838 = vunpack.c.h.b16 %v2910
    %v3839 = vunpack.c.l.b16 %v2911
    %v3840 = vunpack.c.l.b16 %v2912
    %v3841 = vunpack.c.h.b16 %v2912
    %v3842 = vunpack.c.l.b16 %v2913
    %v3843 = vunpack.c.l.b16 %v2914
    %v3844 = vunpack.c.h.b16 %v2914
    %v3845 = vunpack.c.l.b16 %v2915
    %v3846 = vunpack.c.l.b16 %v2916
    %v3847 = vunpack.c.h.b16 %v2916
    %v3848 = vunpack.c.l.b16 %v2917
    %v3849 = vunpack.c.l.b16 %v2918
    %v3850 = vunpack.c.h.b16 %v2918
    %v3851 = vunpack.c.l.b16 %v2919
    %v3852 = vunpack.c.l.b16 %v2920
    %v3853 = vunpack.c.h.b16 %v2920
    %v3854 = vunpack.c.l.b16 %v2921
    %v3855 = vunpack.c.l.b16 %v2922
    %v3856 = vunpack.c.h.b16 %v2922
    %v3857 = vunpack.c.l.b16 %v2923
    %v3858 = vunpack.c.l.b16 %v2924
    %v3859 = vunpack.c.h.b16 %v2924
    %v3860 = vunpack.c.l.b16 %v2925
    %v3861 = vunpack.c.l.b16 %v2926
    %v3862 = vunpack.c.h.b16 %v2926
    %v3863 = vunpack.c.l.b16 %v2927
    %v3864 = vunpack.c.l.b16 %v2928
    %v3865 = vunpack.c.h.b16 %v2928
    %v3866 = vunpack.c.l.b16 %v2929
    %v3867 = vunpack.c.l.b16 %v2930
    %v3868 = vunpack.c.h.b16 %v2930
    %v3869 = vunpack.c.l.b16 %v2931
    %v3870 = vunpack.c.l.b16 %v2932
    %v3871 = vunpack.c.h.b16 %v2932
    %v3872 = vunpack.c.l.b16 %v2933
    %v3873 = vunpack.c.l.b16 %v2934
    %v3874 = vunpack.c.h.b16 %v2934
    %v3875 = vunpack.c.l.b16 %v2935
    %v3876 = vunpack.c.l.b16 %v2936
    %v3877 = vunpack.c.h.b16 %v2936
    %v3878 = vunpack.c.l.b16 %v2937
    %v3879 = vunpack.c.l.b16 %v2938
    %v3880 = vunpack.c.h.b16 %v2938
    %v3881 = vunpack.c.l.b16 %v2939
    %v3882 = vunpack.c.l.b16 %v2940
    %v3883 = vunpack.c.h.b16 %v2940
    %v3884 = vunpack.c.l.b16 %v2941
    %v3885 = vunpack.c.l.b16 %v2942
    %v3886 = vunpack.c.h.b16 %v2942
    %v3887 = vunpack.c.l.b16 %v2943
    %v3888 = vunpack.c.l.b16 %v2944
    %v3889 = vunpack.c.h.b16 %v2944
    %v3890 = vunpack.c.l.b16 %v2945
    %v3891 = vunpack.c.l.b16 %v2946
    %v3892 = vunpack.c.h.b16 %v2946
    %v3893 = vunpack.c.l.b16 %v2947
    %v3894 = vunpack.c.l.b16 %v2948
    %v3895 = vunpack.c.h.b16 %v2948
    %v3896 = vunpack.c.l.b16 %v2949
    %v3897 = vunpack.c.l.b16 %v2950
    %v3898 = vunpack.c.h.b16 %v2950
    %v3899 = vunpack.c.l.b16 %v2951
    %v3900 = vunpack.c.l.b16 %v2952
    %v3901 = vunpack.c.h.b16 %v2952
    %v3902 = vunpack.c.l.b16 %v2953
    %v3903 = vunpack.c.l.b16 %v2954
    %v3904 = vunpack.c.h.b16 %v2954
    %v3905 = vunpack.c.l.b16 %v2955
    %v3906 = vunpack.c.l.b16 %v2956
    %v3907 = vunpack.c.h.b16 %v2956
    %v3908 = vunpack.c.l.b16 %v2957
    %v3909 = vunpack.c.l.b16 %v2958
    %v3910 = vunpack.c.h.b16 %v2958
    %v3911 = vunpack.c.l.b16 %v2959
    %v3912 = vunpack.c.l.b16 %v2960
    %v3913 = vunpack.c.h.b16 %v2960
    %v3914 = vunpack.c.l.b16 %v2961
    %v3915 = vunpack.c.l.b16 %v2962
    %v3916 = vunpack.c.h.b16 %v2962
    %v3917 = vunpack.c.l.b16 %v2963
    %v3918 = vunpack.c.l.b16 %v2964
    %v3919 = vunpack.c.h.b16 %v2964
    %v3920 = vunpack.c.l.b16 %v2965
    %v3921 = vunpack.c.l.b16 %v2966
    %v3922 = vunpack.c.h.b16 %v2966
    %v3923 = vunpack.c.l.b16 %v2967
    %v3924 = vunpack.c.l.b16 %v2968
    %v3925 = vunpack.c.h.b16 %v2968
    %v3926 = vunpack.c.l.b16 %v2969
    %v3927 = vunpack.c.l.b16 %v2970
    %v3928 = vunpack.c.h.b16 %v2970
    %v3929 = vunpack.c.l.b16 %v2971
    %v3930 = vunpack.c.l.b16 %v2972
    %v3931 = vunpack.c.h.b16 %v2972
    %v3932 = vunpack.c.l.b16 %v2973
    %v3933 = vunpack.c.l.b16 %v2974
    %v3934 = vunpack.c.h.b16 %v2974
    %v3935 = vunpack.c.l.b16 %v2975
    %v3936 = vunpack.c.l.b16 %v2976
    %v3937 = vunpack.c.h.b16 %v2976
    %v3938 = vunpack.c.l.b16 %v2977
    %v3939 = vunpack.c.l.b16 %v2978
    %v3940 = vunpack.c.h.b16 %v2978
    %v3941 = vunpack.c.l.b16 %v2979
    %v3942 = vunpack.c.l.b16 %v2980
    %v3943 = vunpack.c.h.b16 %v2980
    %v3944 = vunpack.c.l.b16 %v2981
    %v3945 = vunpack.c.l.b16 %v2982
    %v3946 = vunpack.c.h.b16 %v2982
    %v3947 = vunpack.c.l.b16 %v2983
    %v3948 = vunpack.c.l.b16 %v2984
    %v3949 = vunpack.c.h.b16 %v2984
    %v3950 = vunpack.c.l.b16 %v2985
    %v3951 = vunpack.c.l.b16 %v2986
    %v3952 = vunpack.c.h.b16 %v2986
    %v3953 = vunpack.c.l.b16 %v2987
    %v3954 = vunpack.c.l.b16 %v2988
    %v3955 = vunpack.c.h.b16 %v2988
    %v3956 = vunpack.c.l.b16 %v2989
    %v3957 = vunpack.c.l.b16 %v2990
    %v3958 = vunpack.c.h.b16 %v2990
    %v3959 = vunpack.c.l.b16 %v2991
    %v3960 = vunpack.c.l.b16 %v2992
    %v3961 = vunpack.c.h.b16 %v2992
    %v3962 = vunpack.c.l.b16 %v2993
    %v3963 = vunpack.c.l.b16 %v2994
    %v3964 = vunpack.c.h.b16 %v2994
    %v3965 = vunpack.c.l.b16 %v2995
    %v3966 = vunpack.c.l.b16 %v2996
    %v3967 = vunpack.c.h.b16 %v2996
    %v3968 = vunpack.c.l.b16 %v2997
    %v3969 = vunpack.c.l.b16 %v2998
    %v3970 = vunpack.c.h.b16 %v2998
    %v3971 = vunpack.c.l.b16 %v2999
    %v3972 = vunpack.c.l.b16 %v3000
    %v3973 = vunpack.c.h.b16 %v3000
    %v3974 = vunpack.c.l.b16 %v3001
    %v3975 = vunpack.c.l.b16 %v3002
    %v3976 = vunpack.c.h.b16 %v3002
    %v3977 = vunpack.c.l.b16 %v3003
    %v3978 = vunpack.c.l.b16 %v3004
    %v3979 = vunpack.c.h.b16 %v3004
    %v3980 = vunpack.c.l.b16 %v3005
    %v3981 = vunpack.c.l.b16 %v3006
    %v3982 = vunpack.c.h.b16 %v3006
    %v3983 = vunpack.c.l.b16 %v3007
    %v3984 = vunpack.c.l.b16 %v3008
    %v3985 = vunpack.c.h.b16 %v3008
    %v3986 = vunpack.c.l.b16 %v3009
    %v3987 = vpack.c.b16 %v3414, %v3411
    %v3988 = vpack.c.b16 %v3415, %v3412
    %v3989 = vpack.c.b16 %v3416, %v3413
    %v3990 = vpack.c.b16 %v3420, %v3417
    %v3991 = vpack.c.b16 %v3421, %v3418
    %v3992 = vpack.c.b16 %v3422, %v3419
    %v3993 = vpack.c.b16 %v3426, %v3423
    %v3994 = vpack.c.b16 %v3427, %v3424
    %v3995 = vpack.c.b16 %v3428, %v3425
    %v3996 = vpack.c.b16 %v3432, %v3429
    %v3997 = vpack.c.b16 %v3433, %v3430
    %v3998 = vpack.c.b16 %v3434, %v3431
    %v3999 = vpack.c.b16 %v3438, %v3435
    %v4000 = vpack.c.b16 %v3439, %v3436
    %v4001 = vpack.c.b16 %v3440, %v3437
    %v4002 = vpack.c.b16 %v3444, %v3441
    %v4003 = vpack.c.b16 %v3445, %v3442
    %v4004 = vpack.c.b16 %v3446, %v3443
    %v4005 = vpack.c.b16 %v3450, %v3447
    %v4006 = vpack.c.b16 %v3451, %v3448
    %v4007 = vpack.c.b16 %v3452, %v3449
    %v4008 = vpack.c.b16 %v3456, %v3453
    %v4009 = vpack.c.b16 %v3457, %v3454
    %v4010 = vpack.c.b16 %v3458, %v3455
    %v4011 = vpack.c.b16 %v3462, %v3459
    %v4012 = vpack.c.b16 %v3463, %v3460
    %v4013 = vpack.c.b16 %v3464, %v3461
    %v4014 = vpack.c.b16 %v3468, %v3465
    %v4015 = vpack.c.b16 %v3469, %v3466
    %v4016 = vpack.c.b16 %v3470, %v3467
    %v4017 = vpack.c.b16 %v3474, %v3471
    %v4018 = vpack.c.b16 %v3475, %v3472
    %v4019 = vpack.c.b16 %v3476, %v3473
    %v4020 = vpack.c.b16 %v3480, %v3477
    %v4021 = vpack.c.b16 %v3481, %v3478
    %v4022 = vpack.c.b16 %v3482, %v3479
    %v4023 = vpack.c.b16 %v3486, %v3483
    %v4024 = vpack.c.b16 %v3487, %v3484
    %v4025 = vpack.c.b16 %v3488, %v3485
    %v4026 = vpack.c.b16 %v3492, %v3489
    %v4027 = vpack.c.b16 %v3493, %v3490
    %v4028 = vpack.c.b16 %v3494, %v3491
    %v4029 = vpack.c.b16 %v3498, %v3495
    %v4030 = vpack.c.b16 %v3499, %v3496
    %v4031 = vpack.c.b16 %v3500, %v3497
    %v4032 = vpack.c.b16 %v3504, %v3501
    %v4033 = vpack.c.b16 %v3505, %v3502
    %v4034 = vpack.c.b16 %v3506, %v3503
    %v4035 = vpack.c.b16 %v3510, %v3507
    %v4036 = vpack.c.b16 %v3511, %v3508
    %v4037 = vpack.c.b16 %v3512, %v3509
    %v4038 = vpack.c.b16 %v3516, %v3513
    %v4039 = vpack.c.b16 %v3517, %v3514
    %v4040 = vpack.c.b16 %v3518, %v3515
    %v4041 = vpack.c.b16 %v3522, %v3519
    %v4042 = vpack.c.b16 %v3523, %v3520
    %v4043 = vpack.c.b16 %v3524, %v3521
    %v4044 = vpack.c.b16 %v3528, %v3525
    %v4045 = vpack.c.b16 %v3529, %v3526
    %v4046 = vpack.c.b16 %v3530, %v3527
    %v4047 = vpack.c.b16 %v3534, %v3531
    %v4048 = vpack.c.b16 %v3535, %v3532
    %v4049 = vpack.c.b16 %v3536, %v3533
    %v4050 = vpack.c.b16 %v3540, %v3537
    %v4051 = vpack.c.b16 %v3541, %v3538
    %v4052 = vpack.c.b16 %v3542, %v3539
    %v4053 = vpack.c.b16 %v3546, %v3543
    %v4054 = vpack.c.b16 %v3547, %v3544
    %v4055 = vpack.c.b16 %v3548, %v3545
    %v4056 = vpack.c.b16 %v3552, %v3549
    %v4057 = vpack.c.b16 %v3553, %v3550
    %v4058 = vpack.c.b16 %v3554, %v3551
    %v4059 = vpack.c.b16 %v3558, %v3555
    %v4060 = vpack.c.b16 %v3559, %v3556
    %v4061 = vpack.c.b16 %v3560, %v3557
    %v4062 = vpack.c.b16 %v3564, %v3561
    %v4063 = vpack.c.b16 %v3565, %v3562
    %v4064 = vpack.c.b16 %v3566, %v3563
    %v4065 = vpack.c.b16 %v3570, %v3567
    %v4066 = vpack.c.b16 %v3571, %v3568
    %v4067 = vpack.c.b16 %v3572, %v3569
    %v4068 = vpack.c.b16 %v3576, %v3573
    %v4069 = vpack.c.b16 %v3577, %v3574
    %v4070 = vpack.c.b16 %v3578, %v3575
    %v4071 = vpack.c.b16 %v3582, %v3579
    %v4072 = vpack.c.b16 %v3583, %v3580
    %v4073 = vpack.c.b16 %v3584, %v3581
    %v4074 = vpack.c.b16 %v3588, %v3585
    %v4075 = vpack.c.b16 %v3589, %v3586
    %v4076 = vpack.c.b16 %v3590, %v3587
    %v4077 = vpack.c.b16 %v3594, %v3591
    %v4078 = vpack.c.b16 %v3595, %v3592
    %v4079 = vpack.c.b16 %v3596, %v3593
    %v4080 = vpack.c.b16 %v3600, %v3597
    %v4081 = vpack.c.b16 %v3601, %v3598
    %v4082 = vpack.c.b16 %v3602, %v3599
    %v4083 = vpack.c.b16 %v3606, %v3603
    %v4084 = vpack.c.b16 %v3607, %v3604
    %v4085 = vpack.c.b16 %v3608, %v3605
    %v4086 = vpack.c.b16 %v3612, %v3609
    %v4087 = vpack.c.b16 %v3613, %v3610
    %v4088 = vpack.c.b16 %v3614, %v3611
    %v4089 = vpack.c.b16 %v3618, %v3615
    %v4090 = vpack.c.b16 %v3619, %v3616
    %v4091 = vpack.c.b16 %v3620, %v3617
    %v4092 = vpack.c.b16 %v3624, %v3621
    %v4093 = vpack.c.b16 %v3625, %v3622
    %v4094 = vpack.c.b16 %v3626, %v3623
    %v4095 = vpack.c.b16 %v3630, %v3627
    %v4096 = vpack.c.b16 %v3631, %v3628
    %v4097 = vpack.c.b16 %v3632, %v3629
    %v4098 = vpack.c.b16 %v3636, %v3633
    %v4099 = vpack.c.b16 %v3637, %v3634
    %v4100 = vpack.c.b16 %v3638, %v3635
    %v4101 = vpack.c.b16 %v3642, %v3639
    %v4102 = vpack.c.b16 %v3643, %v3640
    %v4103 = vpack.c.b16 %v3644, %v3641
    %v4104 = vpack.c.b16 %v3648, %v3645
    %v4105 = vpack.c.b16 %v3649, %v3646
    %v4106 = vpack.c.b16 %v3650, %v3647
    %v4107 = vpack.c.b16 %v3654, %v3651
    %v4108 = vpack.c.b16 %v3655, %v3652
    %v4109 = vpack.c.b16 %v3656, %v3653
    %v4110 = vpack.c.b16 %v3660, %v3657
    %v4111 = vpack.c.b16 %v3661, %v3658
    %v4112 = vpack.c.b16 %v3662, %v3659
    %v4113 = vpack.c.b16 %v3666, %v3663
    %v4114 = vpack.c.b16 %v3667, %v3664
    %v4115 = vpack.c.b16 %v3668, %v3665
    %v4116 = vpack.c.b16 %v3672, %v3669
    %v4117 = vpack.c.b16 %v3673, %v3670
    %v4118 = vpack.c.b16 %v3674, %v3671
    %v4119 = vpack.c.b16 %v3678, %v3675
    %v4120 = vpack.c.b16 %v3679, %v3676
    %v4121 = vpack.c.b16 %v3680, %v3677
    %v4122 = vpack.c.b16 %v3684, %v3681
    %v4123 = vpack.c.b16 %v3685, %v3682
    %v4124 = vpack.c.b16 %v3686, %v3683
    %v4125 = vpack.c.b16 %v3690, %v3687
    %v4126 = vpack.c.b16 %v3691, %v3688
    %v4127 = vpack.c.b16 %v3692, %v3689
    %v4128 = vpack.c.b16 %v3696, %v3693
    %v4129 = vpack.c.b16 %v3697, %v3694
    %v4130 = vpack.c.b16 %v3698, %v3695
    %v4131 = vpack.c.b16 %v3702, %v3699
    %v4132 = vpack.c.b16 %v3703, %v3700
    %v4133 = vpack.c.b16 %v3704, %v3701
    %v4134 = vpack.c.b16 %v3708, %v3705
    %v4135 = vpack.c.b16 %v3709, %v3706
    %v4136 = vpack.c.b16 %v3710, %v3707
    %v4137 = vpack.c.b16 %v3714, %v3711
    %v4138 = vpack.c.b16 %v3715, %v3712
    %v4139 = vpack.c.b16 %v3716, %v3713
    %v4140 = vpack.c.b16 %v3720, %v3717
    %v4141 = vpack.c.b16 %v3721, %v3718
    %v4142 = vpack.c.b16 %v3722, %v3719
    %v4143 = vpack.c.b16 %v3726, %v3723
    %v4144 = vpack.c.b16 %v3727, %v3724
    %v4145 = vpack.c.b16 %v3728, %v3725
    %v4146 = vpack.c.b16 %v3732, %v3729
    %v4147 = vpack.c.b16 %v3733, %v3730
    %v4148 = vpack.c.b16 %v3734, %v3731
    %v4149 = vpack.c.b16 %v3738, %v3735
    %v4150 = vpack.c.b16 %v3739, %v3736
    %v4151 = vpack.c.b16 %v3740, %v3737
    %v4152 = vpack.c.b16 %v3744, %v3741
    %v4153 = vpack.c.b16 %v3745, %v3742
    %v4154 = vpack.c.b16 %v3746, %v3743
    %v4155 = vpack.c.b16 %v3750, %v3747
    %v4156 = vpack.c.b16 %v3751, %v3748
    %v4157 = vpack.c.b16 %v3752, %v3749
    %v4158 = vpack.c.b16 %v3756, %v3753
    %v4159 = vpack.c.b16 %v3757, %v3754
    %v4160 = vpack.c.b16 %v3758, %v3755
    %v4161 = vpack.c.b16 %v3762, %v3759
    %v4162 = vpack.c.b16 %v3763, %v3760
    %v4163 = vpack.c.b16 %v3764, %v3761
    %v4164 = vpack.c.b16 %v3768, %v3765
    %v4165 = vpack.c.b16 %v3769, %v3766
    %v4166 = vpack.c.b16 %v3770, %v3767
    %v4167 = vpack.c.b16 %v3774, %v3771
    %v4168 = vpack.c.b16 %v3775, %v3772
    %v4169 = vpack.c.b16 %v3776, %v3773
    %v4170 = vpack.c.b16 %v3780, %v3777
    %v4171 = vpack.c.b16 %v3781, %v3778
    %v4172 = vpack.c.b16 %v3782, %v3779
    %v4173 = vpack.c.b16 %v3786, %v3783
    %v4174 = vpack.c.b16 %v3787, %v3784
    %v4175 = vpack.c.b16 %v3788, %v3785
    %v4176 = vpack.c.b16 %v3792, %v3789
    %v4177 = vpack.c.b16 %v3793, %v3790
    %v4178 = vpack.c.b16 %v3794, %v3791
    %v4179 = vpack.c.b16 %v3798, %v3795
    %v4180 = vpack.c.b16 %v3799, %v3796
    %v4181 = vpack.c.b16 %v3800, %v3797
    %v4182 = vpack.c.b16 %v3804, %v3801
    %v4183 = vpack.c.b16 %v3805, %v3802
    %v4184 = vpack.c.b16 %v3806, %v3803
    %v4185 = vpack.c.b16 %v3810, %v3807
    %v4186 = vpack.c.b16 %v3811, %v3808
    %v4187 = vpack.c.b16 %v3812, %v3809
    %v4188 = vpack.c.b16 %v3816, %v3813
    %v4189 = vpack.c.b16 %v3817, %v3814
    %v4190 = vpack.c.b16 %v3818, %v3815
    %v4191 = vpack.c.b16 %v3822, %v3819
    %v4192 = vpack.c.b16 %v3823, %v3820
    %v4193 = vpack.c.b16 %v3824, %v3821
    %v4194 = vpack.c.b16 %v3828, %v3825
    %v4195 = vpack.c.b16 %v3829, %v3826
    %v4196 = vpack.c.b16 %v3830, %v3827
    %v4197 = vpack.c.b16 %v3834, %v3831
    %v4198 = vpack.c.b16 %v3835, %v3832
    %v4199 = vpack.c.b16 %v3836, %v3833
    %v4200 = vpack.c.b16 %v3840, %v3837
    %v4201 = vpack.c.b16 %v3841, %v3838
    %v4202 = vpack.c.b16 %v3842, %v3839
    %v4203 = vpack.c.b16 %v3846, %v3843
    %v4204 = vpack.c.b16 %v3847, %v3844
    %v4205 = vpack.c.b16 %v3848, %v3845
    %v4206 = vpack.c.b16 %v3852, %v3849
    %v4207 = vpack.c.b16 %v3853, %v3850
    %v4208 = vpack.c.b16 %v3854, %v3851
    %v4209 = vpack.c.b16 %v3858, %v3855
    %v4210 = vpack.c.b16 %v3859, %v3856
    %v4211 = vpack.c.b16 %v3860, %v3857
    %v4212 = vpack.c.b16 %v3864, %v3861
    %v4213 = vpack.c.b16 %v3865, %v3862
    %v4214 = vpack.c.b16 %v3866, %v3863
    %v4215 = vpack.c.b16 %v3870, %v3867
    %v4216 = vpack.c.b16 %v3871, %v3868
    %v4217 = vpack.c.b16 %v3872, %v3869
    %v4218 = vpack.c.b16 %v3876, %v3873
    %v4219 = vpack.c.b16 %v3877, %v3874
    %v4220 = vpack.c.b16 %v3878, %v3875
    %v4221 = vpack.c.b16 %v3882, %v3879
    %v4222 = vpack.c.b16 %v3883, %v3880
    %v4223 = vpack.c.b16 %v3884, %v3881
    %v4224 = vpack.c.b16 %v3888, %v3885
    %v4225 = vpack.c.b16 %v3889, %v3886
    %v4226 = vpack.c.b16 %v3890, %v3887
    %v4227 = vpack.c.b16 %v3894, %v3891
    %v4228 = vpack.c.b16 %v3895, %v3892
    %v4229 = vpack.c.b16 %v3896, %v3893
    %v4230 = vpack.c.b16 %v3900, %v3897
    %v4231 = vpack.c.b16 %v3901, %v3898
    %v4232 = vpack.c.b16 %v3902, %v3899
    %v4233 = vpack.c.b16 %v3906, %v3903
    %v4234 = vpack.c.b16 %v3907, %v3904
    %v4235 = vpack.c.b16 %v3908, %v3905
    %v4236 = vpack.c.b16 %v3912, %v3909
    %v4237 = vpack.c.b16 %v3913, %v3910
    %v4238 = vpack.c.b16 %v3914, %v3911
    %v4239 = vpack.c.b16 %v3918, %v3915
    %v4240 = vpack.c.b16 %v3919, %v3916
    %v4241 = vpack.c.b16 %v3920, %v3917
    %v4242 = vpack.c.b16 %v3924, %v3921
    %v4243 = vpack.c.b16 %v3925, %v3922
    %v4244 = vpack.c.b16 %v3926, %v3923
    %v4245 = vpack.c.b16 %v3930, %v3927
    %v4246 = vpack.c.b16 %v3931, %v3928
    %v4247 = vpack.c.b16 %v3932, %v3929
    %v4248 = vpack.c.b16 %v3936, %v3933
    %v4249 = vpack.c.b16 %v3937, %v3934
    %v4250 = vpack.c.b16 %v3938, %v3935
    %v4251 = vpack.c.b16 %v3942, %v3939
    %v4252 = vpack.c.b16 %v3943, %v3940
    %v4253 = vpack.c.b16 %v3944, %v3941
    %v4254 = vpack.c.b16 %v3948, %v3945
    %v4255 = vpack.c.b16 %v3949, %v3946
    %v4256 = vpack.c.b16 %v3950, %v3947
    %v4257 = vpack.c.b16 %v3954, %v3951
    %v4258 = vpack.c.b16 %v3955, %v3952
    %v4259 = vpack.c.b16 %v3956, %v3953
    %v4260 = vpack.c.b16 %v3960, %v3957
    %v4261 = vpack.c.b16 %v3961, %v3958
    %v4262 = vpack.c.b16 %v3962, %v3959
    %v4263 = vpack.c.b16 %v3966, %v3963
    %v4264 = vpack.c.b16 %v3967, %v3964
    %v4265 = vpack.c.b16 %v3968, %v3965
    %v4266 = vpack.c.b16 %v3972, %v3969
    %v4267 = vpack.c.b16 %v3973, %v3970
    %v4268 = vpack.c.b16 %v3974, %v3971
    %v4269 = vpack.c.b16 %v3978, %v3975
    %v4270 = vpack.c.b16 %v3979, %v3976
    %v4271 = vpack.c.b16 %v3980, %v3977
    %v4272 = vpack.c.b16 %v3984, %v3981
    %v4273 = vpack.c.b16 %v3985, %v3982
    %v4274 = vpack.c.b16 %v3986, %v3983
    %4563 = vmatprep.subr.bf16.mxu0 %v3988
    %4564 = vmatpush1.bf16.msra.mxu0 %v3987
    %4565 = vmatprep.subr.bf16.mxu0 %v3991
    %4566 = vmatpush1.bf16.msra.mxu0 %v3990
    %4567 = vmatprep.subr.bf16.mxu0 %v3994
    %4568 = vmatpush1.bf16.msra.mxu0 %v3993
    %4569 = vmatprep.subr.bf16.mxu0 %v3997
    %4570 = vmatpush1.bf16.msra.mxu0 %v3996
    %4571 = vmatprep.subr.bf16.mxu0 %v4000
    %4572 = vmatpush1.bf16.msra.mxu0 %v3999
    %4573 = vmatprep.subr.bf16.mxu0 %v4003
    %4574 = vmatpush1.bf16.msra.mxu0 %v4002
    %4575 = vmatprep.subr.bf16.mxu0 %v4006
    %4576 = vmatpush1.bf16.msra.mxu0 %v4005
    %4577 = vmatprep.subr.bf16.mxu0 %v4009
    %4578 = vmatpush1.bf16.msra.mxu0 %v4008
    %4579 = vmatprep.subr.bf16.mxu0 %v4012
    %4580 = vmatpush1.bf16.msra.mxu0 %v4011
    %4581 = vmatprep.subr.bf16.mxu0 %v4015
    %4582 = vmatpush1.bf16.msra.mxu0 %v4014
    %4583 = vmatprep.subr.bf16.mxu0 %v4018
    %4584 = vmatpush1.bf16.msra.mxu0 %v4017
    %4585 = vmatprep.subr.bf16.mxu0 %v4021
    %4586 = vmatpush1.bf16.msra.mxu0 %v4020
    %4587 = vmatprep.subr.bf16.mxu0 %v4024
    %4588 = vmatpush1.bf16.msra.mxu0 %v4023
    %4589 = vmatprep.subr.bf16.mxu0 %v4027
    %4590 = vmatpush1.bf16.msra.mxu0 %v4026
    %4591 = vmatprep.subr.bf16.mxu0 %v4030
    %4592 = vmatpush1.bf16.msra.mxu0 %v4029
    %4593 = vmatprep.subr.bf16.mxu0 %v4033
    %4594 = vmatpush1.bf16.msra.mxu0 %v4032
    %4595 = vmatprep.mubr.bf16.mxu0 %v2603
    %4596 = vmatmul.mubr.bf16.gmra.mrb[0].mxu0 %v2602
    %v4597 = vpop.f32.mrb[0].mxu0
    %v4598 = vadd.f32 %v3015, %v4597
    %v4599 = vpop.f32.mrb[0].mxu0
    %v4600 = vadd.f32 %v3019, %v4599
    %v4601 = vpop.f32.mrb[0].mxu0
    %v4602 = vadd.f32 %v3015, %v4601
    %v4603 = vpop.f32.mrb[0].mxu0
    %v4604 = vadd.f32 %v3019, %v4603
    %4605 = vmatprep.mubr.bf16.mxu0 %v2615
    %4606 = vmatmul.mubr.bf16.gmra.mrb[0].mxu0 %v2614
    %v4607 = vpop.f32.mrb[0].mxu0
    %v4608 = vadd.f32 %v3015, %v4607
    %v4609 = vpop.f32.mrb[0].mxu0
    %v4610 = vadd.f32 %v3019, %v4609
    %v4611 = vpop.f32.mrb[0].mxu0
    %v4612 = vadd.f32 %v3015, %v4611
    %v4613 = vpop.f32.mrb[0].mxu0
    %v4614 = vadd.f32 %v3019, %v4613
    %4615 = vdwg.mxu0
    %4616 = vmatprep.subr.bf16.mxu0 %v4036
    %4617 = vmatpush1.bf16.msra.mxu0 %v4035
    %4618 = vmatprep.subr.bf16.mxu0 %v4039
    %4619 = vmatpush1.bf16.msra.mxu0 %v4038
    %4620 = vmatprep.subr.bf16.mxu0 %v4042
    %4621 = vmatpush1.bf16.msra.mxu0 %v4041
    %4622 = vmatprep.subr.bf16.mxu0 %v4045
    %4623 = vmatpush1.bf16.msra.mxu0 %v4044
    %4624 = vmatprep.subr.bf16.mxu0 %v4048
    %4625 = vmatpush1.bf16.msra.mxu0 %v4047
    %4626 = vmatprep.subr.bf16.mxu0 %v4051
    %4627 = vmatpush1.bf16.msra.mxu0 %v4050
    %4628 = vmatprep.subr.bf16.mxu0 %v4054
    %4629 = vmatpush1.bf16.msra.mxu0 %v4053
    %4630 = vmatprep.subr.bf16.mxu0 %v4057
    %4631 = vmatpush1.bf16.msra.mxu0 %v4056
    %4632 = vmatprep.subr.bf16.mxu0 %v4060
    %4633 = vmatpush1.bf16.msra.mxu0 %v4059
    %4634 = vmatprep.subr.bf16.mxu0 %v4063
    %4635 = vmatpush1.bf16.msra.mxu0 %v4062
    %4636 = vmatprep.subr.bf16.mxu0 %v4066
    %4637 = vmatpush1.bf16.msra.mxu0 %v4065
    %4638 = vmatprep.subr.bf16.mxu0 %v4069
    %4639 = vmatpush1.bf16.msra.mxu0 %v4068
    %4640 = vmatprep.subr.bf16.mxu0 %v4072
    %4641 = vmatpush1.bf16.msra.mxu0 %v4071
    %4642 = vmatprep.subr.bf16.mxu0 %v4075
    %4643 = vmatpush1.bf16.msra.mxu0 %v4074
    %4644 = vmatprep.subr.bf16.mxu0 %v4078
    %4645 = vmatpush1.bf16.msra.mxu0 %v4077
    %4646 = vmatprep.subr.bf16.mxu0 %v4081
    %4647 = vmatpush1.bf16.msra.mxu0 %v4080
    %4648 = vmatprep.mubr.bf16.mxu0 %v2605
    %4649 = vmatmul.mubr.bf16.gmra.mrb[0].mxu0 %v2604
    %v4650 = vpop.f32.mrb[0].mxu0
    %v4651 = vadd.f32 %v4598, %v4650
    %v4652 = vpop.f32.mrb[0].mxu0
    %v4653 = vadd.f32 %v4600, %v4652
    %v4654 = vpop.f32.mrb[0].mxu0
    %v4655 = vadd.f32 %v4602, %v4654
    %v4656 = vpop.f32.mrb[0].mxu0
    %v4657 = vadd.f32 %v4604, %v4656
    %4658 = vmatprep.mubr.bf16.mxu0 %v2617
    %4659 = vmatmul.mubr.bf16.gmra.mrb[0].mxu0 %v2616
    %v4660 = vpop.f32.mrb[0].mxu0
    %v4661 = vadd.f32 %v4608, %v4660
    %v4662 = vpop.f32.mrb[0].mxu0
    %v4663 = vadd.f32 %v4610, %v4662
    %v4664 = vpop.f32.mrb[0].mxu0
    %v4665 = vadd.f32 %v4612, %v4664
    %v4666 = vpop.f32.mrb[0].mxu0
    %v4667 = vadd.f32 %v4614, %v4666
    %4668 = vdwg.mxu0
    %4669 = vmatprep.subr.bf16.mxu0 %v4084
    %4670 = vmatpush1.bf16.msra.mxu0 %v4083
    %4671 = vmatprep.subr.bf16.mxu0 %v4087
    %4672 = vmatpush1.bf16.msra.mxu0 %v4086
    %4673 = vmatprep.subr.bf16.mxu0 %v4090
    %4674 = vmatpush1.bf16.msra.mxu0 %v4089
    %4675 = vmatprep.subr.bf16.mxu0 %v4093
    %4676 = vmatpush1.bf16.msra.mxu0 %v4092
    %4677 = vmatprep.subr.bf16.mxu0 %v4096
    %4678 = vmatpush1.bf16.msra.mxu0 %v4095
    %4679 = vmatprep.subr.bf16.mxu0 %v4099
    %4680 = vmatpush1.bf16.msra.mxu0 %v4098
    %4681 = vmatprep.subr.bf16.mxu0 %v4102
    %4682 = vmatpush1.bf16.msra.mxu0 %v4101
    %4683 = vmatprep.subr.bf16.mxu0 %v4105
    %4684 = vmatpush1.bf16.msra.mxu0 %v4104
    %4685 = vmatprep.subr.bf16.mxu0 %v4108
    %4686 = vmatpush1.bf16.msra.mxu0 %v4107
    %4687 = vmatprep.subr.bf16.mxu0 %v4111
    %4688 = vmatpush1.bf16.msra.mxu0 %v4110
    %4689 = vmatprep.subr.bf16.mxu0 %v4114
    %4690 = vmatpush1.bf16.msra.mxu0 %v4113
    %4691 = vmatprep.subr.bf16.mxu0 %v4117
    %4692 = vmatpush1.bf16.msra.mxu0 %v4116
    %4693 = vmatprep.subr.bf16.mxu0 %v4120
    %4694 = vmatpush1.bf16.msra.mxu0 %v4119
    %4695 = vmatprep.subr.bf16.mxu0 %v4123
    %4696 = vmatpush1.bf16.msra.mxu0 %v4122
    %4697 = vmatprep.subr.bf16.mxu0 %v4126
    %4698 = vmatpush1.bf16.msra.mxu0 %v4125
    %4699 = vmatprep.subr.bf16.mxu0 %v4129
    %4700 = vmatpush1.bf16.msra.mxu0 %v4128
    %4701 = vmatprep.mubr.bf16.mxu0 %v2607
    %4702 = vmatmul.mubr.bf16.gmra.mrb[0].mxu0 %v2606
    %v4703 = vpop.f32.mrb[0].mxu0
    %v4704 = vadd.f32 %v4651, %v4703
    %v4705 = vpop.f32.mrb[0].mxu0
    %v4706 = vadd.f32 %v4653, %v4705
    %v4707 = vpop.f32.mrb[0].mxu0
    %v4708 = vadd.f32 %v4655, %v4707
    %v4709 = vpop.f32.mrb[0].mxu0
    %v4710 = vadd.f32 %v4657, %v4709
    %4711 = vmatprep.mubr.bf16.mxu0 %v2619
    %4712 = vmatmul.mubr.bf16.gmra.mrb[0].mxu0 %v2618
    %v4713 = vpop.f32.mrb[0].mxu0
    %v4714 = vadd.f32 %v4661, %v4713
    %v4715 = vpop.f32.mrb[0].mxu0
    %v4716 = vadd.f32 %v4663, %v4715
    %v4717 = vpop.f32.mrb[0].mxu0
    %v4718 = vadd.f32 %v4665, %v4717
    %v4719 = vpop.f32.mrb[0].mxu0
    %v4720 = vadd.f32 %v4667, %v4719
    %4721 = vdwg.mxu0
    %4722 = vmatprep.subr.bf16.mxu0 %v4132
    %4723 = vmatpush1.bf16.msra.mxu0 %v4131
    %4724 = vmatprep.subr.bf16.mxu0 %v4135
    %4725 = vmatpush1.bf16.msra.mxu0 %v4134
    %4726 = vmatprep.subr.bf16.mxu0 %v4138
    %4727 = vmatpush1.bf16.msra.mxu0 %v4137
    %4728 = vmatprep.subr.bf16.mxu0 %v4141
    %4729 = vmatpush1.bf16.msra.mxu0 %v4140
    %4730 = vmatprep.subr.bf16.mxu0 %v4144
    %4731 = vmatpush1.bf16.msra.mxu0 %v4143
    %4732 = vmatprep.subr.bf16.mxu0 %v4147
    %4733 = vmatpush1.bf16.msra.mxu0 %v4146
    %4734 = vmatprep.subr.bf16.mxu0 %v4150
    %4735 = vmatpush1.bf16.msra.mxu0 %v4149
    %4736 = vmatprep.subr.bf16.mxu0 %v4153
    %4737 = vmatpush1.bf16.msra.mxu0 %v4152
    %4738 = vmatprep.subr.bf16.mxu0 %v4156
    %4739 = vmatpush1.bf16.msra.mxu0 %v4155
    %4740 = vmatprep.subr.bf16.mxu0 %v4159
    %4741 = vmatpush1.bf16.msra.mxu0 %v4158
    %4742 = vmatprep.subr.bf16.mxu0 %v4162
    %4743 = vmatpush1.bf16.msra.mxu0 %v4161
    %4744 = vmatprep.subr.bf16.mxu0 %v4165
    %4745 = vmatpush1.bf16.msra.mxu0 %v4164
    %4746 = vmatprep.subr.bf16.mxu0 %v4168
    %4747 = vmatpush1.bf16.msra.mxu0 %v4167
    %4748 = vmatprep.subr.bf16.mxu0 %v4171
    %4749 = vmatpush1.bf16.msra.mxu0 %v4170
    %4750 = vmatprep.subr.bf16.mxu0 %v4174
    %4751 = vmatpush1.bf16.msra.mxu0 %v4173
    %4752 = vmatprep.subr.bf16.mxu0 %v4177
    %4753 = vmatpush1.bf16.msra.mxu0 %v4176
    %4754 = vmatprep.mubr.bf16.mxu0 %v2609
    %4755 = vmatmul.mubr.bf16.gmra.mrb[0].mxu0 %v2608
    %v4756 = vpop.f32.mrb[0].mxu0
    %v4757 = vadd.f32 %v4704, %v4756
    %v4758 = vpop.f32.mrb[0].mxu0
    %v4759 = vadd.f32 %v4706, %v4758
    %v4760 = vpop.f32.mrb[0].mxu0
    %v4761 = vadd.f32 %v4708, %v4760
    %v4762 = vpop.f32.mrb[0].mxu0
    %v4763 = vadd.f32 %v4710, %v4762
    %4764 = vmatprep.mubr.bf16.mxu0 %v2621
    %4765 = vmatmul.mubr.bf16.gmra.mrb[0].mxu0 %v2620
    %v4766 = vpop.f32.mrb[0].mxu0
    %v4767 = vadd.f32 %v4714, %v4766
    %v4768 = vpop.f32.mrb[0].mxu0
    %v4769 = vadd.f32 %v4716, %v4768
    %v4770 = vpop.f32.mrb[0].mxu0
    %v4771 = vadd.f32 %v4718, %v4770
    %v4772 = vpop.f32.mrb[0].mxu0
    %v4773 = vadd.f32 %v4720, %v4772
    %4774 = vdwg.mxu0
    %4775 = vmatprep.subr.bf16.mxu0 %v4180
    %4776 = vmatpush1.bf16.msra.mxu0 %v4179
    %4777 = vmatprep.subr.bf16.mxu0 %v4183
    %4778 = vmatpush1.bf16.msra.mxu0 %v4182
    %4779 = vmatprep.subr.bf16.mxu0 %v4186
    %4780 = vmatpush1.bf16.msra.mxu0 %v4185
    %4781 = vmatprep.subr.bf16.mxu0 %v4189
    %4782 = vmatpush1.bf16.msra.mxu0 %v4188
    %4783 = vmatprep.subr.bf16.mxu0 %v4192
    %4784 = vmatpush1.bf16.msra.mxu0 %v4191
    %4785 = vmatprep.subr.bf16.mxu0 %v4195
    %4786 = vmatpush1.bf16.msra.mxu0 %v4194
    %4787 = vmatprep.subr.bf16.mxu0 %v4198
    %4788 = vmatpush1.bf16.msra.mxu0 %v4197
    %4789 = vmatprep.subr.bf16.mxu0 %v4201
    %4790 = vmatpush1.bf16.msra.mxu0 %v4200
    %4791 = vmatprep.subr.bf16.mxu0 %v4204
    %4792 = vmatpush1.bf16.msra.mxu0 %v4203
    %4793 = vmatprep.subr.bf16.mxu0 %v4207
    %4794 = vmatpush1.bf16.msra.mxu0 %v4206
    %4795 = vmatprep.subr.bf16.mxu0 %v4210
    %4796 = vmatpush1.bf16.msra.mxu0 %v4209
    %4797 = vmatprep.subr.bf16.mxu0 %v4213
    %4798 = vmatpush1.bf16.msra.mxu0 %v4212
    %4799 = vmatprep.subr.bf16.mxu0 %v4216
    %4800 = vmatpush1.bf16.msra.mxu0 %v4215
    %4801 = vmatprep.subr.bf16.mxu0 %v4219
    %4802 = vmatpush1.bf16.msra.mxu0 %v4218
    %4803 = vmatprep.subr.bf16.mxu0 %v4222
    %4804 = vmatpush1.bf16.msra.mxu0 %v4221
    %4805 = vmatprep.subr.bf16.mxu0 %v4225
    %4806 = vmatpush1.bf16.msra.mxu0 %v4224
    %4807 = vmatprep.mubr.bf16.mxu0 %v2611
    %4808 = vmatmul.mubr.bf16.gmra.mrb[0].mxu0 %v2610
    %v4809 = vpop.f32.mrb[0].mxu0
    %v4810 = vadd.f32 %v4757, %v4809
    %v4811 = vpop.f32.mrb[0].mxu0
    %v4812 = vadd.f32 %v4759, %v4811
    %v4813 = vpop.f32.mrb[0].mxu0
    %v4814 = vadd.f32 %v4761, %v4813
    %v4815 = vpop.f32.mrb[0].mxu0
    %v4816 = vadd.f32 %v4763, %v4815
    %4817 = vmatprep.mubr.bf16.mxu0 %v2623
    %4818 = vmatmul.mubr.bf16.gmra.mrb[0].mxu0 %v2622
    %v4819 = vpop.f32.mrb[0].mxu0
    %v4820 = vadd.f32 %v4767, %v4819
    %v4821 = vpop.f32.mrb[0].mxu0
    %v4822 = vadd.f32 %v4769, %v4821
    %v4823 = vpop.f32.mrb[0].mxu0
    %v4824 = vadd.f32 %v4771, %v4823
    %v4825 = vpop.f32.mrb[0].mxu0
    %v4826 = vadd.f32 %v4773, %v4825
    %4827 = vdwg.mxu0
    %4828 = vmatprep.subr.bf16.mxu0 %v4228
    %4829 = vmatpush1.bf16.msra.mxu0 %v4227
    %4830 = vmatprep.subr.bf16.mxu0 %v4231
    %4831 = vmatpush1.bf16.msra.mxu0 %v4230
    %4832 = vmatprep.subr.bf16.mxu0 %v4234
    %4833 = vmatpush1.bf16.msra.mxu0 %v4233
    %4834 = vmatprep.subr.bf16.mxu0 %v4237
    %4835 = vmatpush1.bf16.msra.mxu0 %v4236
    %4836 = vmatprep.subr.bf16.mxu0 %v4240
    %4837 = vmatpush1.bf16.msra.mxu0 %v4239
    %4838 = vmatprep.subr.bf16.mxu0 %v4243
    %4839 = vmatpush1.bf16.msra.mxu0 %v4242
    %4840 = vmatprep.subr.bf16.mxu0 %v4246
    %4841 = vmatpush1.bf16.msra.mxu0 %v4245
    %4842 = vmatprep.subr.bf16.mxu0 %v4249
    %4843 = vmatpush1.bf16.msra.mxu0 %v4248
    %4844 = vmatprep.subr.bf16.mxu0 %v4252
    %4845 = vmatpush1.bf16.msra.mxu0 %v4251
    %4846 = vmatprep.subr.bf16.mxu0 %v4255
    %4847 = vmatpush1.bf16.msra.mxu0 %v4254
    %4848 = vmatprep.subr.bf16.mxu0 %v4258
    %4849 = vmatpush1.bf16.msra.mxu0 %v4257
    %4850 = vmatprep.subr.bf16.mxu0 %v4261
    %4851 = vmatpush1.bf16.msra.mxu0 %v4260
    %4852 = vmatprep.subr.bf16.mxu0 %v4264
    %4853 = vmatpush1.bf16.msra.mxu0 %v4263
    %4854 = vmatprep.subr.bf16.mxu0 %v4267
    %4855 = vmatpush1.bf16.msra.mxu0 %v4266
    %4856 = vmatprep.subr.bf16.mxu0 %v4270
    %4857 = vmatpush1.bf16.msra.mxu0 %v4269
    %4858 = vmatprep.subr.bf16.mxu0 %v4273
    %4859 = vmatpush1.bf16.msra.mxu0 %v4272
    %4860 = vmatprep.mubr.bf16.mxu0 %v2613
    %4861 = vmatmul.mubr.bf16.gmra.mrb[0].mxu0 %v2612
    %v4862 = vpop.f32.mrb[0].mxu0
    %v4863 = vadd.f32 %v4810, %v4862
    %v4864 = vpop.f32.mrb[0].mxu0
    %v4865 = vadd.f32 %v4812, %v4864
    %v4866 = vpop.f32.mrb[0].mxu0
    %v4867 = vadd.f32 %v4814, %v4866
    %v4868 = vpop.f32.mrb[0].mxu0
    %v4869 = vadd.f32 %v4816, %v4868
    %4870 = vmatprep.mubr.bf16.mxu0 %v2625
    %4871 = vmatmul.mubr.bf16.gmra.mrb[0].mxu0 %v2624
    %v4872 = vpop.f32.mrb[0].mxu0
    %v4873 = vadd.f32 %v4820, %v4872
    %v4874 = vpop.f32.mrb[0].mxu0
    %v4875 = vadd.f32 %v4822, %v4874
    %v4876 = vpop.f32.mrb[0].mxu0
    %v4877 = vadd.f32 %v4824, %v4876
    %v4878 = vpop.f32.mrb[0].mxu0
    %v4879 = vadd.f32 %v4826, %v4878
    %4880 = vdwg.mxu0
    %4881 = vmatprep.subr.bf16.mxu0 0
    %4882 = vmatpush1.bf16.msra.mxu0 %v3989
    %4883 = vmatprep.subr.bf16.mxu0 0
    %4884 = vmatpush1.bf16.msra.mxu0 %v3992
    %4885 = vmatprep.subr.bf16.mxu0 0
    %4886 = vmatpush1.bf16.msra.mxu0 %v3995
    %4887 = vmatprep.subr.bf16.mxu0 0
    %4888 = vmatpush1.bf16.msra.mxu0 %v3998
    %4889 = vmatprep.subr.bf16.mxu0 0
    %4890 = vmatpush1.bf16.msra.mxu0 %v4001
    %4891 = vmatprep.subr.bf16.mxu0 0
    %4892 = vmatpush1.bf16.msra.mxu0 %v4004
    %4893 = vmatprep.subr.bf16.mxu0 0
    %4894 = vmatpush1.bf16.msra.mxu0 %v4007
    %4895 = vmatprep.subr.bf16.mxu0 0
    %4896 = vmatpush1.bf16.msra.mxu0 %v4010
    %4897 = vmatprep.subr.bf16.mxu0 0
    %4898 = vmatpush1.bf16.msra.mxu0 %v4013
    %4899 = vmatprep.subr.bf16.mxu0 0
    %4900 = vmatpush1.bf16.msra.mxu0 %v4016
    %4901 = vmatprep.subr.bf16.mxu0 0
    %4902 = vmatpush1.bf16.msra.mxu0 %v4019
    %4903 = vmatprep.subr.bf16.mxu0 0
    %4904 = vmatpush1.bf16.msra.mxu0 %v4022
    %4905 = vmatprep.subr.bf16.mxu0 0
    %4906 = vmatpush1.bf16.msra.mxu0 %v4025
    %4907 = vmatprep.subr.bf16.mxu0 0
    %4908 = vmatpush1.bf16.msra.mxu0 %v4028
    %4909 = vmatprep.subr.bf16.mxu0 0
    %4910 = vmatpush1.bf16.msra.mxu0 %v4031
    %4911 = vmatprep.subr.bf16.mxu0 0
    %4912 = vmatpush1.bf16.msra.mxu0 %v4034
    %4913 = vmatprep.mubr.bf16.mxu0 %v2603
    %4914 = vmatmul.mubr.bf16.gmra.mrb[0].mxu0 %v2602
    %v4915 = vpop.f32.mrb[0].mxu0
    %v4916 = vadd.f32 %v3023, %v4915
    %v4917 = vpop.f32.mrb[0].mxu0
    %v4918 = vpop.f32.mrb[0].mxu0
    %v4919 = vadd.f32 %v3023, %v4918
    %v4920 = vpop.f32.mrb[0].mxu0
    %4921 = vmatprep.mubr.bf16.mxu0 %v2615
    %4922 = vmatmul.mubr.bf16.gmra.mrb[0].mxu0 %v2614
    %v4923 = vpop.f32.mrb[0].mxu0
    %v4924 = vadd.f32 %v3023, %v4923
    %v4925 = vpop.f32.mrb[0].mxu0
    %v4926 = vpop.f32.mrb[0].mxu0
    %v4927 = vadd.f32 %v3023, %v4926
    %v4928 = vpop.f32.mrb[0].mxu0
    %4929 = vdwg.mxu0
    %4930 = vmatprep.subr.bf16.mxu0 0
    %4931 = vmatpush1.bf16.msra.mxu0 %v4037
    %4932 = vmatprep.subr.bf16.mxu0 0
    %4933 = vmatpush1.bf16.msra.mxu0 %v4040
    %4934 = vmatprep.subr.bf16.mxu0 0
    %4935 = vmatpush1.bf16.msra.mxu0 %v4043
    %4936 = vmatprep.subr.bf16.mxu0 0
    %4937 = vmatpush1.bf16.msra.mxu0 %v4046
    %4938 = vmatprep.subr.bf16.mxu0 0
    %4939 = vmatpush1.bf16.msra.mxu0 %v4049
    %4940 = vmatprep.subr.bf16.mxu0 0
    %4941 = vmatpush1.bf16.msra.mxu0 %v4052
    %4942 = vmatprep.subr.bf16.mxu0 0
    %4943 = vmatpush1.bf16.msra.mxu0 %v4055
    %4944 = vmatprep.subr.bf16.mxu0 0
    %4945 = vmatpush1.bf16.msra.mxu0 %v4058
    %4946 = vmatprep.subr.bf16.mxu0 0
    %4947 = vmatpush1.bf16.msra.mxu0 %v4061
    %4948 = vmatprep.subr.bf16.mxu0 0
    %4949 = vmatpush1.bf16.msra.mxu0 %v4064
    %4950 = vmatprep.subr.bf16.mxu0 0
    %4951 = vmatpush1.bf16.msra.mxu0 %v4067
    %4952 = vmatprep.subr.bf16.mxu0 0
    %4953 = vmatpush1.bf16.msra.mxu0 %v4070
    %4954 = vmatprep.subr.bf16.mxu0 0
    %4955 = vmatpush1.bf16.msra.mxu0 %v4073
    %4956 = vmatprep.subr.bf16.mxu0 0
    %4957 = vmatpush1.bf16.msra.mxu0 %v4076
    %4958 = vmatprep.subr.bf16.mxu0 0
    %4959 = vmatpush1.bf16.msra.mxu0 %v4079
    %4960 = vmatprep.subr.bf16.mxu0 0
    %4961 = vmatpush1.bf16.msra.mxu0 %v4082
    %4962 = vmatprep.mubr.bf16.mxu0 %v2605
    %4963 = vmatmul.mubr.bf16.gmra.mrb[0].mxu0 %v2604
    %v4964 = vpop.f32.mrb[0].mxu0
    %v4965 = vadd.f32 %v4916, %v4964
    %v4966 = vpop.f32.mrb[0].mxu0
    %v4967 = vpop.f32.mrb[0].mxu0
    %v4968 = vadd.f32 %v4919, %v4967
    %v4969 = vpop.f32.mrb[0].mxu0
    %4970 = vmatprep.mubr.bf16.mxu0 %v2617
    %4971 = vmatmul.mubr.bf16.gmra.mrb[0].mxu0 %v2616
    %v4972 = vpop.f32.mrb[0].mxu0
    %v4973 = vadd.f32 %v4924, %v4972
    %v4974 = vpop.f32.mrb[0].mxu0
    %v4975 = vpop.f32.mrb[0].mxu0
    %v4976 = vadd.f32 %v4927, %v4975
    %v4977 = vpop.f32.mrb[0].mxu0
    %4978 = vdwg.mxu0
    %4979 = vmatprep.subr.bf16.mxu0 0
    %4980 = vmatpush1.bf16.msra.mxu0 %v4085
    %4981 = vmatprep.subr.bf16.mxu0 0
    %4982 = vmatpush1.bf16.msra.mxu0 %v4088
    %4983 = vmatprep.subr.bf16.mxu0 0
    %4984 = vmatpush1.bf16.msra.mxu0 %v4091
    %4985 = vmatprep.subr.bf16.mxu0 0
    %4986 = vmatpush1.bf16.msra.mxu0 %v4094
    %4987 = vmatprep.subr.bf16.mxu0 0
    %4988 = vmatpush1.bf16.msra.mxu0 %v4097
    %4989 = vmatprep.subr.bf16.mxu0 0
    %4990 = vmatpush1.bf16.msra.mxu0 %v4100
    %4991 = vmatprep.subr.bf16.mxu0 0
    %4992 = vmatpush1.bf16.msra.mxu0 %v4103
    %4993 = vmatprep.subr.bf16.mxu0 0
    %4994 = vmatpush1.bf16.msra.mxu0 %v4106
    %4995 = vmatprep.subr.bf16.mxu0 0
    %4996 = vmatpush1.bf16.msra.mxu0 %v4109
    %4997 = vmatprep.subr.bf16.mxu0 0
    %4998 = vmatpush1.bf16.msra.mxu0 %v4112
    %4999 = vmatprep.subr.bf16.mxu0 0
    %5000 = vmatpush1.bf16.msra.mxu0 %v4115
    %5001 = vmatprep.subr.bf16.mxu0 0
    %5002 = vmatpush1.bf16.msra.mxu0 %v4118
    %5003 = vmatprep.subr.bf16.mxu0 0
    %5004 = vmatpush1.bf16.msra.mxu0 %v4121
    %5005 = vmatprep.subr.bf16.mxu0 0
    %5006 = vmatpush1.bf16.msra.mxu0 %v4124
    %5007 = vmatprep.subr.bf16.mxu0 0
    %5008 = vmatpush1.bf16.msra.mxu0 %v4127
    %5009 = vmatprep.subr.bf16.mxu0 0
    %5010 = vmatpush1.bf16.msra.mxu0 %v4130
    %5011 = vmatprep.mubr.bf16.mxu0 %v2607
    %5012 = vmatmul.mubr.bf16.gmra.mrb[0].mxu0 %v2606
    %v5013 = vpop.f32.mrb[0].mxu0
    %v5014 = vadd.f32 %v4965, %v5013
    %v5015 = vpop.f32.mrb[0].mxu0
    %v5016 = vpop.f32.mrb[0].mxu0
    %v5017 = vadd.f32 %v4968, %v5016
    %v5018 = vpop.f32.mrb[0].mxu0
    %5019 = vmatprep.mubr.bf16.mxu0 %v2619
    %5020 = vmatmul.mubr.bf16.gmra.mrb[0].mxu0 %v2618
    %v5021 = vpop.f32.mrb[0].mxu0
    %v5022 = vadd.f32 %v4973, %v5021
    %v5023 = vpop.f32.mrb[0].mxu0
    %v5024 = vpop.f32.mrb[0].mxu0
    %v5025 = vadd.f32 %v4976, %v5024
    %v5026 = vpop.f32.mrb[0].mxu0
    %5027 = vdwg.mxu0
    %5028 = vmatprep.subr.bf16.mxu0 0
    %5029 = vmatpush1.bf16.msra.mxu0 %v4133
    %5030 = vmatprep.subr.bf16.mxu0 0
    %5031 = vmatpush1.bf16.msra.mxu0 %v4136
    %5032 = vmatprep.subr.bf16.mxu0 0
    %5033 = vmatpush1.bf16.msra.mxu0 %v4139
    %5034 = vmatprep.subr.bf16.mxu0 0
    %5035 = vmatpush1.bf16.msra.mxu0 %v4142
    %5036 = vmatprep.subr.bf16.mxu0 0
    %5037 = vmatpush1.bf16.msra.mxu0 %v4145
    %5038 = vmatprep.subr.bf16.mxu0 0
    %5039 = vmatpush1.bf16.msra.mxu0 %v4148
    %5040 = vmatprep.subr.bf16.mxu0 0
    %5041 = vmatpush1.bf16.msra.mxu0 %v4151
    %5042 = vmatprep.subr.bf16.mxu0 0
    %5043 = vmatpush1.bf16.msra.mxu0 %v4154
    %5044 = vmatprep.subr.bf16.mxu0 0
    %5045 = vmatpush1.bf16.msra.mxu0 %v4157
    %5046 = vmatprep.subr.bf16.mxu0 0
    %5047 = vmatpush1.bf16.msra.mxu0 %v4160
    %5048 = vmatprep.subr.bf16.mxu0 0
    %5049 = vmatpush1.bf16.msra.mxu0 %v4163
    %5050 = vmatprep.subr.bf16.mxu0 0
    %5051 = vmatpush1.bf16.msra.mxu0 %v4166
    %5052 = vmatprep.subr.bf16.mxu0 0
    %5053 = vmatpush1.bf16.msra.mxu0 %v4169
    %5054 = vmatprep.subr.bf16.mxu0 0
    %5055 = vmatpush1.bf16.msra.mxu0 %v4172
    %5056 = vmatprep.subr.bf16.mxu0 0
    %5057 = vmatpush1.bf16.msra.mxu0 %v4175
    %5058 = vmatprep.subr.bf16.mxu0 0
    %5059 = vmatpush1.bf16.msra.mxu0 %v4178
    %5060 = vmatprep.mubr.bf16.mxu0 %v2609
    %5061 = vmatmul.mubr.bf16.gmra.mrb[0].mxu0 %v2608
    %v5062 = vpop.f32.mrb[0].mxu0
    %v5063 = vadd.f32 %v5014, %v5062
    %v5064 = vpop.f32.mrb[0].mxu0
    %v5065 = vpop.f32.mrb[0].mxu0
    %v5066 = vadd.f32 %v5017, %v5065
    %v5067 = vpop.f32.mrb[0].mxu0
    %5068 = vmatprep.mubr.bf16.mxu0 %v2621
    %5069 = vmatmul.mubr.bf16.gmra.mrb[0].mxu0 %v2620
    %v5070 = vpop.f32.mrb[0].mxu0
    %v5071 = vadd.f32 %v5022, %v5070
    %v5072 = vpop.f32.mrb[0].mxu0
    %v5073 = vpop.f32.mrb[0].mxu0
    %v5074 = vadd.f32 %v5025, %v5073
    %v5075 = vpop.f32.mrb[0].mxu0
    %5076 = vdwg.mxu0
    %5077 = vmatprep.subr.bf16.mxu0 0
    %5078 = vmatpush1.bf16.msra.mxu0 %v4181
    %5079 = vmatprep.subr.bf16.mxu0 0
    %5080 = vmatpush1.bf16.msra.mxu0 %v4184
    %5081 = vmatprep.subr.bf16.mxu0 0
    %5082 = vmatpush1.bf16.msra.mxu0 %v4187
    %5083 = vmatprep.subr.bf16.mxu0 0
    %5084 = vmatpush1.bf16.msra.mxu0 %v4190
    %5085 = vmatprep.subr.bf16.mxu0 0
    %5086 = vmatpush1.bf16.msra.mxu0 %v4193
    %5087 = vmatprep.subr.bf16.mxu0 0
    %5088 = vmatpush1.bf16.msra.mxu0 %v4196
    %5089 = vmatprep.subr.bf16.mxu0 0
    %5090 = vmatpush1.bf16.msra.mxu0 %v4199
    %5091 = vmatprep.subr.bf16.mxu0 0
    %5092 = vmatpush1.bf16.msra.mxu0 %v4202
    %5093 = vmatprep.subr.bf16.mxu0 0
    %5094 = vmatpush1.bf16.msra.mxu0 %v4205
    %5095 = vmatprep.subr.bf16.mxu0 0
    %5096 = vmatpush1.bf16.msra.mxu0 %v4208
    %5097 = vmatprep.subr.bf16.mxu0 0
    %5098 = vmatpush1.bf16.msra.mxu0 %v4211
    %5099 = vmatprep.subr.bf16.mxu0 0
    %5100 = vmatpush1.bf16.msra.mxu0 %v4214
    %5101 = vmatprep.subr.bf16.mxu0 0
    %5102 = vmatpush1.bf16.msra.mxu0 %v4217
    %5103 = vmatprep.subr.bf16.mxu0 0
    %5104 = vmatpush1.bf16.msra.mxu0 %v4220
    %5105 = vmatprep.subr.bf16.mxu0 0
    %5106 = vmatpush1.bf16.msra.mxu0 %v4223
    %5107 = vmatprep.subr.bf16.mxu0 0
    %5108 = vmatpush1.bf16.msra.mxu0 %v4226
    %5109 = vmatprep.mubr.bf16.mxu0 %v2611
    %5110 = vmatmul.mubr.bf16.gmra.mrb[0].mxu0 %v2610
    %v5111 = vpop.f32.mrb[0].mxu0
    %v5112 = vadd.f32 %v5063, %v5111
    %v5113 = vpop.f32.mrb[0].mxu0
    %v5114 = vpop.f32.mrb[0].mxu0
    %v5115 = vadd.f32 %v5066, %v5114
    %v5116 = vpop.f32.mrb[0].mxu0
    %5117 = vmatprep.mubr.bf16.mxu0 %v2623
    %5118 = vmatmul.mubr.bf16.gmra.mrb[0].mxu0 %v2622
    %v5119 = vpop.f32.mrb[0].mxu0
    %v5120 = vadd.f32 %v5071, %v5119
    %v5121 = vpop.f32.mrb[0].mxu0
    %v5122 = vpop.f32.mrb[0].mxu0
    %v5123 = vadd.f32 %v5074, %v5122
    %v5124 = vpop.f32.mrb[0].mxu0
    %5125 = vdwg.mxu0
    %5126 = vmatprep.subr.bf16.mxu0 0
    %5127 = vmatpush1.bf16.msra.mxu0 %v4229
    %5128 = vmatprep.subr.bf16.mxu0 0
    %5129 = vmatpush1.bf16.msra.mxu0 %v4232
    %5130 = vmatprep.subr.bf16.mxu0 0
    %5131 = vmatpush1.bf16.msra.mxu0 %v4235
    %5132 = vmatprep.subr.bf16.mxu0 0
    %5133 = vmatpush1.bf16.msra.mxu0 %v4238
    %5134 = vmatprep.subr.bf16.mxu0 0
    %5135 = vmatpush1.bf16.msra.mxu0 %v4241
    %5136 = vmatprep.subr.bf16.mxu0 0
    %5137 = vmatpush1.bf16.msra.mxu0 %v4244
    %5138 = vmatprep.subr.bf16.mxu0 0
    %5139 = vmatpush1.bf16.msra.mxu0 %v4247
    %5140 = vmatprep.subr.bf16.mxu0 0
    %5141 = vmatpush1.bf16.msra.mxu0 %v4250
    %5142 = vmatprep.subr.bf16.mxu0 0
    %5143 = vmatpush1.bf16.msra.mxu0 %v4253
    %5144 = vmatprep.subr.bf16.mxu0 0
    %5145 = vmatpush1.bf16.msra.mxu0 %v4256
    %5146 = vmatprep.subr.bf16.mxu0 0
    %5147 = vmatpush1.bf16.msra.mxu0 %v4259
    %5148 = vmatprep.subr.bf16.mxu0 0
    %5149 = vmatpush1.bf16.msra.mxu0 %v4262
    %5150 = vmatprep.subr.bf16.mxu0 0
    %5151 = vmatpush1.bf16.msra.mxu0 %v4265
    %5152 = vmatprep.subr.bf16.mxu0 0
    %5153 = vmatpush1.bf16.msra.mxu0 %v4268
    %5154 = vmatprep.subr.bf16.mxu0 0
    %5155 = vmatpush1.bf16.msra.mxu0 %v4271
    %5156 = vmatprep.subr.bf16.mxu0 0
    %5157 = vmatpush1.bf16.msra.mxu0 %v4274
    %5158 = vmatprep.mubr.bf16.mxu0 %v2613
    %5159 = vmatmul.mubr.bf16.gmra.mrb[0].mxu0 %v2612
    %v5160 = vpop.f32.mrb[0].mxu0
    %v5161 = vadd.f32 %v5112, %v5160
    %v5162 = vpop.f32.mrb[0].mxu0
    %v5163 = vpop.f32.mrb[0].mxu0
    %v5164 = vadd.f32 %v5115, %v5163
    %v5165 = vpop.f32.mrb[0].mxu0
    %5166 = vmatprep.mubr.bf16.mxu0 %v2625
    %5167 = vmatmul.mubr.bf16.gmra.mrb[0].mxu0 %v2624
    %v5168 = vpop.f32.mrb[0].mxu0
    %v5169 = vadd.f32 %v5120, %v5168
    %v5170 = vpop.f32.mrb[0].mxu0
    %v5171 = vpop.f32.mrb[0].mxu0
    %v5172 = vadd.f32 %v5123, %v5171
    %v5173 = vpop.f32.mrb[0].mxu0
    %5174 = vdwg.mxu0
    %5175 = vst [vmem:[#allocation11] sm:$0xff] %v4863
    %5176 = vst [vmem:[#allocation11 + $0x8] sm:$0xff] %v4865
    %5177 = vst [vmem:[#allocation11 + $0x10] sm:$0xff] %v5161
    %5178 = vst [vmem:[#allocation11 + $0x18] sm:$0xff] %v4867
    %5179 = vst [vmem:[#allocation11 + $0x20] sm:$0xff] %v4869
    %5180 = vst [vmem:[#allocation11 + $0x28] sm:$0xff] %v5164
    %5181 = vst [vmem:[#allocation11 + $0x30] sm:$0xff] %v4873
    %5182 = vst [vmem:[#allocation11 + $0x38] sm:$0xff] %v4875
    %5183 = vst [vmem:[#allocation11 + $0x40] sm:$0xff] %v5169
    %5184 = vst [vmem:[#allocation11 + $0x48] sm:$0xff] %v4877
    %5185 = vst [vmem:[#allocation11 + $0x50] sm:$0xff] %v4879
    %5186 = vst [vmem:[#allocation11 + $0x58] sm:$0xff] %v5172
    // Predicated region
    $region42: #{tpu_custom_call.1} parent=1 // pred_check
      _
    $region43: #{tpu_custom_call.1} parent=1 // pred_check_branch
      %5188 = sbr.rel (0) target = $region45
    $region44: #{tpu_custom_call.1} parent=1 // pred_region
      %s5190 = ssub.s32 1536, 1536
      %5191 = vsyncadd [#allocation4], %s5190
      %s5192 = sshll.u32 [#allocation11], 4
      %s5193 = int_to_ptr.vmem [resolvable:$true] %s5192
      %5198 = dma.vmem_to_hbm [thread:$0]  %s5193, 1536, %s5, [#allocation4], 384, 384, 24
    $region45: #{tpu_custom_call.1} parent=1 // pred_fallthru
      _
    // Predicated region
    $region46: #{tpu_custom_call.1} parent=1 // pred_check
      _
    $region47: #{tpu_custom_call.1} parent=1 // pred_check_branch
      %5200 = sbr.rel (0) target = $region49
    $region48: #{tpu_custom_call.1} parent=1 // pred_region
      %5201 = dma.done [#allocation4], 1536
    $region49: #{tpu_custom_call.1} parent=1 // pred_fallthru
      _
    %5202 = vsyncpa [#allocation3], 1
    %5203 = vsyncpa [#allocation6], 1
    %5204 = vsyncpa [#allocation9], 1
    %5205 = vsyncpa [#allocation4], 1

</llo_original>
